<compile_context>
chip_gen: v5e
topology: v5e:2x2
jax: 0.10.0
libtpu: 0.0.40
codegen_flags: <defaults>
</compile_context>

<pallas_src>
import functools

import jax
import jax.numpy as jnp
from jax.experimental import pallas as pl
from jax.experimental.pallas import tpu as pltpu


def _cdiv(a, b):
    return -(-a // b)


def _round_up(x, m):
    return _cdiv(x, m) * m


def _chip_kind():
    try:
        return jax.devices()[0].device_kind.lower()
    except Exception:
        return ""


def _dice_loss_kernel(pred_ref, tgt_ref, out_ref, acc_ref, *,
                      n_valid, num_steps, needs_mask, compute_dtype):
    """One (tile_n, C) batch tile: softmax + per-element dice, accumulated per class.

    pred_ref: [tile_n, C] logits (f32 or bf16) in VMEM
    tgt_ref : [tile_n, 1]  int32 class indices in VMEM
    out_ref : [1, 1, C]    per-split per-class partial sums (written on last step)
    acc_ref : [1, C]       f32 VMEM accumulator (persists across the step axis)
    """
    split = pl.program_id(0)
    step = pl.program_id(1)
    tile_n, c = pred_ref.shape

    @pl.when(step == 0)
    def _init():
        acc_ref[...] = jnp.zeros_like(acc_ref)

    p = pred_ref[...].astype(jnp.float32)                      # [tile_n, C]
    tgt = tgt_ref[...]                                         # [tile_n, 1] int32

    # One-hot mask: a single (1, C) iota row broadcast against the index column
    # (no dense one-hot streamed from HBM, no full-tile iota per step).
    class_ids = jax.lax.broadcasted_iota(jnp.int32, (1, c), 1)
    mask = class_ids == tgt                                    # [tile_n, C] bool

    # Numerically stable softmax over classes, kept in f32.
    m = jnp.max(p, axis=1, keepdims=True)
    e = jnp.exp(p - m)
    inv_sum = 1.0 / jnp.sum(e, axis=1, keepdims=True)          # [tile_n, 1]
    s = (e * inv_sum).astype(compute_dtype)                    # [tile_n, C]

    # loss_nc = 1 - (s*t + 1)/(s^2 + t^2 + 1)
    #         = (s^2 + t*(1 - s)) / (s^2 + t + 1)   (exact algebra, t in {0,1})
    # Cancellation-free form -> the EUP approx reciprocal only adds relative error.
    one = jnp.asarray(1.0, compute_dtype)
    ss = s * s
    t = mask.astype(compute_dtype)
    den = ss + t + one
    numer = ss + jnp.where(mask, one - s, jnp.zeros_like(s))
    loss_nc = numer * pl.reciprocal(den, approx=True)          # [tile_n, C]

    # Per-class partial sum over this tile's rows, on the otherwise idle MXU.
    ones_row = jnp.ones((1, tile_n), dtype=loss_nc.dtype)

    def _accumulate(vals):
        acc_ref[...] += jnp.dot(ones_row, vals,
                                preferred_element_type=jnp.float32)   # [1, C]

    if needs_mask:
        # Row masking is only needed on the boundary (or fully out-of-range,
        # clamped) tiles; gate it so full tiles pay nothing extra.
        row0 = (split * num_steps + step) * tile_n

        @pl.when(row0 + tile_n <= n_valid)
        def _full_tile():
            _accumulate(loss_nc)

        @pl.when(row0 + tile_n > n_valid)
        def _boundary_tile():
            rows = row0 + jax.lax.broadcasted_iota(jnp.int32, (tile_n, 1), 0)
            # Select-based mask: NaN-safe even if the OOB tail rows hold garbage.
            _accumulate(jnp.where(rows < n_valid, loss_nc, jnp.zeros_like(loss_nc)))
    else:
        _accumulate(loss_nc)

    @pl.when(step == num_steps - 1)
    def _finalize():
        out_ref[...] = acc_ref[...].reshape(out_ref.shape)


def dice_loss(predict, target, *, tile_n=None, n_splits=None,
              compute_dtype=None, vmem_budget_bytes=None):
    """predict: [N, C] float logits (f32 or bf16); target: [N] int class indices."""
    N, C = predict.shape
    assert target.shape == (N,)

    # --- chip-aware defaults ---------------------------------------------------
    kind = _chip_kind()
    big_vmem = any(s in kind for s in ("v5 lite", "v5e", "v5p", "v6"))  # 128 MiB VMEM parts
    is_v7 = ("v7" in kind) or ("tpu7" in kind) or ("7x" in kind)
    bf16_vpu = is_v7 or ("v6" in kind)

    if n_splits is None:
        n_splits = 2 if is_v7 else 1      # v7x: 2 TCs/chip; elsewhere the split is overhead
    if compute_dtype is None:
        compute_dtype = jnp.bfloat16 if bf16_vpu else jnp.float32
    if vmem_budget_bytes is None:
        vmem_budget_bytes = (64 if big_vmem else 20) * 1024 * 1024
    vmem_limit = max(32 * 1024 * 1024, vmem_budget_bytes + 12 * 1024 * 1024)

    # --- tile sizing (includes in-kernel temporaries, not just the DMA tiles) ---
    pred_bytes = predict.dtype.itemsize
    sub = 8 * max(1, 4 // pred_bytes)                 # 8 for f32, 16 for bf16, 32 for int8/fp8
    lane_c = _round_up(max(C, 128), 128)              # lane-padded VMEM row width
    per_row = (2 * (lane_c * pred_bytes + 128 * 4)    # double-buffered pred + (padded) tgt tiles
               + 10 * lane_c * 4)                     # ~live f32 elementwise temporaries
    max_tile = max(sub, (vmem_budget_bytes // per_row) // sub * sub)
    if tile_n is None:
        tile_n = 4096 if big_vmem else 2048
    tile_n = max(sub, min(_round_up(tile_n, sub), max_tile,
                          _round_up(_cdiv(N, n_splits), sub)))

    num_blocks = _cdiv(N, tile_n)                     # no jnp.pad: ragged tail handled in-kernel
    n_splits = max(1, min(n_splits, num_blocks))
    num_steps = _cdiv(num_blocks, n_splits)
    needs_mask = (n_splits * num_steps * tile_n != N)
    last_block = num_blocks - 1

    tgt2d = target.astype(jnp.int32).reshape(N, 1)

    kernel = functools.partial(
        _dice_loss_kernel, n_valid=N, num_steps=num_steps,
        needs_mask=needs_mask, compute_dtype=compute_dtype)

    def _in_idx(s, k):
        # Clamp so grid steps that fall entirely past N still map to a valid block
        # (their rows are masked to zero inside the kernel).
        return (jnp.minimum(s * num_steps + k, last_block), 0)

    partials = pl.pallas_call(
        kernel,
        out_shape=jax.ShapeDtypeStruct((n_splits, 1, C), jnp.float32),
        grid_spec=pltpu.PrefetchScalarGridSpec(
            num_scalar_prefetch=0,
            grid=(n_splits, num_steps),
            in_specs=[
                pl.BlockSpec((tile_n, C), _in_idx),
                pl.BlockSpec((tile_n, 1), _in_idx),
            ],
            out_specs=pl.BlockSpec((1, 1, C), lambda s, k: (s, 0, 0)),
            scratch_shapes=[pltpu.VMEM((1, C), jnp.float32)],
        ),
        compiler_params=pltpu.CompilerParams(
            dimension_semantics=("parallel", "arbitrary"),
            vmem_limit_bytes=vmem_limit,
        ),
        cost_estimate=pl.CostEstimate(
            flops=16 * N * C,
            transcendentals=2 * N * C,
            bytes_accessed=N * C * pred_bytes + N * 4 + n_splits * C * 4,
        ),
    )(predict, tgt2d)

    # Tiny cross-split / cross-class reduction + normalisation in plain JAX:
    # mean over batch, sum over classes, / C  ==  sum over everything / (N*C).
    return jnp.sum(partials) / (N * C)


if __name__ == "__main__":
    key = jax.random.PRNGKey(0)
    kp, kt = jax.random.split(key)

    # N chosen so the grid has full tiles, one ragged boundary tile and one fully
    # out-of-range (clamped) step when tiled as (tile_n=512, n_splits=2).
    N, C = 1200, 128
    predict = jax.random.normal(kp, (N, C), dtype=jnp.float32)
    target = jax.random.randint(kt, (N,), 0, C, dtype=jnp.int32)

    def ref_loss(p, t):
        # Pure-JAX reference of the PyTorch forward (weight=None, ignore_index=None).
        s = jax.nn.softmax(p.astype(jnp.float32), axis=1)
        th = jax.nn.one_hot(t, C, dtype=jnp.float32)
        return jnp.sum(jnp.mean(1.0 - (s * th + 1.0) / (s * s + th * th + 1.0),
                                axis=0)) / C

    # Run 1: f32 compute, explicit tiling exercising ragged tile + clamped OOB step.
    loss = dice_loss(predict, target, tile_n=512, n_splits=2,
                     compute_dtype=jnp.float32)
    loss = jax.block_until_ready(loss)
    ref = ref_loss(predict, target)
    assert jnp.allclose(loss, ref, atol=1e-4, rtol=1e-3), (float(loss), float(ref))

    # Run 2: chip-aware defaults (auto tile size, bf16 compute on v6e/v7x) on bf16
    # logits; reference uses the same bf16-rounded inputs to isolate kernel error.
    pred_bf16 = predict.astype(jnp.bfloat16)
    loss2 = jax.block_until_ready(dice_loss(pred_bf16, target))
    ref2 = ref_loss(pred_bf16, target)
    assert jnp.allclose(loss2, ref2, atol=1e-3, rtol=2e-2), (float(loss2), float(ref2))

    print("KERNEL_OK")
</pallas_src>

<mosaic_0001>
module attributes {stable_mosaic.version = 11 : i64} {
  func.func @_dice_loss_kernel(%arg0: i32, %arg1: i32, %arg2: memref<512x128xf32, #tpu.memory_space<vmem>>, %arg3: memref<512x1xi32, #tpu.memory_space<vmem>>, %arg4: memref<1x1x128xf32, #tpu.memory_space<vmem>>, %arg5: memref<1x128xf32, #tpu.memory_space<vmem>>) attributes {dimension_semantics = [#tpu.dimension_semantics<parallel>, #tpu.dimension_semantics<arbitrary>], iteration_bounds = array<i64: 2, 2>, scalar_prefetch = 0 : i64, scratch_operands = 1 : i64, tpu.core_type = #tpu.core_type<tc>, window_params = [{transform_indices = @transform_0, window_bounds = array<i64: 512, 128>}, {transform_indices = @transform_1, window_bounds = array<i64: 512, 1>}, {transform_indices = @transform_2, window_bounds = array<i64: 1, 1, 128>}]} {
    %c0_i32 = arith.constant 0 : i32
    %0 = arith.cmpi eq, %arg1, %c0_i32 : i32
    %1 = arith.extui %0 : i1 to i32
    %c0_i32_0 = arith.constant 0 : i32
    %2 = arith.cmpi ne, %1, %c0_i32_0 : i32
    scf.if %2 {
      %cst_16 = arith.constant 0.000000e+00 : f32
      %48 = vector.broadcast %cst_16 : f32 to vector<1x128xf32>
      %c0_17 = arith.constant 0 : index
      %c0_18 = arith.constant 0 : index
      %49 = vector.load %arg5[%c0_17, %c0_18] : memref<1x128xf32, #tpu.memory_space<vmem>>, vector<1x128xf32>
      tpu.vector_store %arg5[%c0_17, %c0_18], %48 {strides = array<i32>} : memref<1x128xf32, #tpu.memory_space<vmem>>, vector<1x128xf32>,
    } else {
    }
    %c0 = arith.constant 0 : index
    %c0_1 = arith.constant 0 : index
    %3 = vector.load %arg2[%c0, %c0_1] : memref<512x128xf32, #tpu.memory_space<vmem>>, vector<512x128xf32>
    %c0_2 = arith.constant 0 : index
    %c0_3 = arith.constant 0 : index
    %4 = vector.load %arg3[%c0_2, %c0_3] : memref<512x1xi32, #tpu.memory_space<vmem>>, vector<512x1xi32>
    %5 = tpu.iota {dimensions = array<i32: 1>} : vector<1x128xi32>
    %6 = vector.broadcast %5 : vector<1x128xi32> to vector<512x128xi32>
    %7 = vector.broadcast %4 : vector<512x1xi32> to vector<512x128xi32>
    %8 = arith.cmpi eq, %6, %7 : vector<512x128xi32>
    %cst = arith.constant dense<0xFF800000> : vector<512xf32>
    %9 = vector.multi_reduction <maximumf>, %3, %cst [1] : vector<512x128xf32> to vector<512xf32>
    %10 = vector.shape_cast %9 : vector<512xf32> to vector<512x1xf32>
    %11 = vector.broadcast %10 : vector<512x1xf32> to vector<512x128xf32>
    %12 = arith.subf %3, %11 : vector<512x128xf32>
    %13 = math.exp %12 : vector<512x128xf32>
    %cst_4 = arith.constant dense<0.000000e+00> : vector<512xf32>
    %14 = vector.multi_reduction <add>, %13, %cst_4 [1] : vector<512x128xf32> to vector<512xf32>
    %15 = vector.shape_cast %14 : vector<512xf32> to vector<512x1xf32>
    %cst_5 = arith.constant 1.000000e+00 : f32
    %16 = vector.broadcast %cst_5 : f32 to vector<512x1xf32>
    %17 = arith.divf %16, %15 : vector<512x1xf32>
    %18 = vector.broadcast %17 : vector<512x1xf32> to vector<512x128xf32>
    %19 = arith.mulf %13, %18 : vector<512x128xf32>
    %20 = arith.mulf %19, %19 : vector<512x128xf32>
    %21 = arith.extui %8 : vector<512x128xi1> to vector<512x128xi32>
    %22 = arith.sitofp %21 : vector<512x128xi32> to vector<512x128xf32>
    %23 = arith.addf %20, %22 : vector<512x128xf32>
    %cst_6 = arith.constant 1.000000e+00 : f32
    %24 = vector.broadcast %cst_6 : f32 to vector<512x128xf32>
    %25 = arith.addf %23, %24 : vector<512x128xf32>
    %cst_7 = arith.constant 1.000000e+00 : f32
    %26 = vector.broadcast %cst_7 : f32 to vector<512x128xf32>
    %27 = arith.subf %26, %19 : vector<512x128xf32>
    %cst_8 = arith.constant 0.000000e+00 : f32
    %28 = vector.broadcast %cst_8 : f32 to vector<512x128xf32>
    %29 = arith.select %8, %27, %28 : vector<512x128xi1>, vector<512x128xf32>
    %30 = arith.addf %20, %29 : vector<512x128xf32>
    %31 = tpu.reciprocal %25 {approx = true} : vector<512x128xf32> -> vector<512x128xf32>
    %32 = arith.mulf %30, %31 : vector<512x128xf32>
    %cst_9 = arith.constant 1.000000e+00 : f32
    %33 = vector.broadcast %cst_9 : f32 to vector<1x512xf32>
    %c2_i32 = arith.constant 2 : i32
    %34 = arith.muli %arg0, %c2_i32 : i32
    %35 = arith.addi %34, %arg1 : i32
    %c512_i32 = arith.constant 512 : i32
    %36 = arith.muli %35, %c512_i32 : i32
    %c512_i32_10 = arith.constant 512 : i32
    %37 = arith.addi %36, %c512_i32_10 : i32
    %c1200_i32 = arith.constant 1200 : i32
    %38 = arith.cmpi sle, %37, %c1200_i32 : i32
    %39 = arith.extui %38 : i1 to i32
    %c0_i32_11 = arith.constant 0 : i32
    %40 = arith.cmpi ne, %39, %c0_i32_11 : i32
    scf.if %40 {
      %c0_16 = arith.constant 0 : index
      %c0_17 = arith.constant 0 : index
      %48 = vector.load %arg5[%c0_16, %c0_17] : memref<1x128xf32, #tpu.memory_space<vmem>>, vector<1x128xf32>
      %cst_18 = arith.constant dense<0.000000e+00> : vector<1x128xf32>
      %49 = tpu.matmul %33, %32, %cst_18 {dimension_numbers = #tpu.dot_dimension_numbers<[1], [0], [0], [1], [0, 0, 1, 1], [], []>} : vector<1x512xf32>, vector<512x128xf32>, vector<1x128xf32> -> vector<1x128xf32>
      %50 = arith.addf %48, %49 : vector<1x128xf32>
      %c0_19 = arith.constant 0 : index
      %c0_20 = arith.constant 0 : index
      %51 = vector.load %arg5[%c0_19, %c0_20] : memref<1x128xf32, #tpu.memory_space<vmem>>, vector<1x128xf32>
      tpu.vector_store %arg5[%c0_19, %c0_20], %50 {strides = array<i32>} : memref<1x128xf32, #tpu.memory_space<vmem>>, vector<1x128xf32>,
    } else {
    }
    %c512_i32_12 = arith.constant 512 : i32
    %41 = arith.addi %36, %c512_i32_12 : i32
    %c1200_i32_13 = arith.constant 1200 : i32
    %42 = arith.cmpi sgt, %41, %c1200_i32_13 : i32
    %43 = arith.extui %42 : i1 to i32
    %c0_i32_14 = arith.constant 0 : i32
    %44 = arith.cmpi ne, %43, %c0_i32_14 : i32
    scf.if %44 {
      %48 = tpu.iota {dimensions = array<i32: 0>} : vector<512x1xi32>
      %49 = vector.broadcast %36 : i32 to vector<512x1xi32>
      %50 = arith.addi %49, %48 : vector<512x1xi32>
      %c1200_i32_16 = arith.constant 1200 : i32
      %51 = vector.broadcast %c1200_i32_16 : i32 to vector<512x1xi32>
      %52 = arith.cmpi slt, %50, %51 : vector<512x1xi32>
      %cst_17 = arith.constant 0.000000e+00 : f32
      %53 = vector.broadcast %cst_17 : f32 to vector<512x128xf32>
      %54 = vector.shape_cast %52 : vector<512x1xi1> to vector<512x1xi1>
      %55 = vector.broadcast %54 : vector<512x1xi1> to vector<512x128xi1>
      %56 = arith.select %55, %32, %53 : vector<512x128xi1>, vector<512x128xf32>
      %c0_18 = arith.constant 0 : index
      %c0_19 = arith.constant 0 : index
      %57 = vector.load %arg5[%c0_18, %c0_19] : memref<1x128xf32, #tpu.memory_space<vmem>>, vector<1x128xf32>
      %cst_20 = arith.constant dense<0.000000e+00> : vector<1x128xf32>
      %58 = tpu.matmul %33, %56, %cst_20 {dimension_numbers = #tpu.dot_dimension_numbers<[1], [0], [0], [1], [0, 0, 1, 1], [], []>} : vector<1x512xf32>, vector<512x128xf32>, vector<1x128xf32> -> vector<1x128xf32>
      %59 = arith.addf %57, %58 : vector<1x128xf32>
      %c0_21 = arith.constant 0 : index
      %c0_22 = arith.constant 0 : index
      %60 = vector.load %arg5[%c0_21, %c0_22] : memref<1x128xf32, #tpu.memory_space<vmem>>, vector<1x128xf32>
      tpu.vector_store %arg5[%c0_21, %c0_22], %59 {strides = array<i32>} : memref<1x128xf32, #tpu.memory_space<vmem>>, vector<1x128xf32>,
    } else {
    }
    %c1_i32 = arith.constant 1 : i32
    %45 = arith.cmpi eq, %arg1, %c1_i32 : i32
    %46 = arith.extui %45 : i1 to i32
    %c0_i32_15 = arith.constant 0 : i32
    %47 = arith.cmpi ne, %46, %c0_i32_15 : i32
    scf.if %47 {
      %c0_16 = arith.constant 0 : index
      %c0_17 = arith.constant 0 : index
      %48 = vector.load %arg5[%c0_16, %c0_17] : memref<1x128xf32, #tpu.memory_space<vmem>>, vector<1x128xf32>
      %49 = vector.shape_cast %48 : vector<1x128xf32> to vector<1x1x128xf32>
      %c0_18 = arith.constant 0 : index
      %c0_19 = arith.constant 0 : index
      %c0_20 = arith.constant 0 : index
      %50 = vector.load %arg4[%c0_18, %c0_19, %c0_20] : memref<1x1x128xf32, #tpu.memory_space<vmem>>, vector<1x1x128xf32>
      tpu.vector_store %arg4[%c0_18, %c0_19, %c0_20], %49 {strides = array<i32>} : memref<1x1x128xf32, #tpu.memory_space<vmem>>, vector<1x1x128xf32>,
    } else {
    }
    return
  }
  func.func @transform_0(%arg0: i32, %arg1: i32) -> (i32, i32) {
    %c2_i32 = arith.constant 2 : i32
    %0 = arith.muli %arg0, %c2_i32 : i32
    %1 = arith.addi %0, %arg1 : i32
    %c2_i32_0 = arith.constant 2 : i32
    %2 = arith.minsi %1, %c2_i32_0 : i32
    %c0_i32 = arith.constant 0 : i32
    %c0_i32_1 = arith.constant 0 : i32
    return %2, %c0_i32 : i32, i32
  }
  func.func @transform_1(%arg0: i32, %arg1: i32) -> (i32, i32) {
    %c2_i32 = arith.constant 2 : i32
    %0 = arith.muli %arg0, %c2_i32 : i32
    %1 = arith.addi %0, %arg1 : i32
    %c2_i32_0 = arith.constant 2 : i32
    %2 = arith.minsi %1, %c2_i32_0 : i32
    %c0_i32 = arith.constant 0 : i32
    %c0_i32_1 = arith.constant 0 : i32
    return %2, %c0_i32 : i32, i32
  }
  func.func @transform_2(%arg0: i32, %arg1: i32) -> (i32, i32, i32) {
    %c0_i32 = arith.constant 0 : i32
    %c0_i32_0 = arith.constant 0 : i32
    %c0_i32_1 = arith.constant 0 : i32
    return %arg0, %c0_i32, %c0_i32_0 : i32, i32, i32
  }
}

</mosaic_0001>

<llo_original>
// kernel: tpu_custom_call.1
$region0: #{tpu_custom_call.1}
  #allocation0 [shape = 'u32[]', space=smem, size = 0x4, offset = 0x4, fixed_abs, tag = 'smem constant byte address 0x4 - core index']
  #allocation1 [shape = 'u32[72,128]{1,0:T(1,128)}', space=vmem, size = 0x9000, scoped, tag = 'internal scratch']
  #allocation2 [shape = 'f32[1,128]{1,0:T(1,128)}', space=vmem, size = 0x200, scoped, tag = 'scratch operand']
  %s0 = inlined_call_operand.vmem [shape: f32[1200,128], index: 0, kind: input, shape index: {}]
  %s1 = inlined_call_operand.vmem [shape: s32[1200,1], index: 1, kind: input, shape index: {}]
  %s2 = inlined_call_operand.hbm [shape: f32[2,1,128], index: 2, kind: output, shape index: {}]
  %s3 = sld [smem:[#allocation0]]
  $region57: #{tpu_custom_call.1} parent=0
    _
  %s5 = ssub.s32 1, %s3
  %s6 = scalar_select 0, %s5, %s3
  $region1: #{tpu_custom_call.1} parent=0
    #allocation3 [shape = 'u8[1024]{0}', space=vmem, size = 0x400, scoped, tag = 'output window, operand 0']
    #allocation4 [shape = 's32[2]{0}', space=sflag, size = 0x8, scoped, tag = 'scoped memory for tpu_custom_call.1']
    %7 = vsyncpa [#allocation4], 0
    %s8 = scalar_lea.sflag [#allocation4], 1
    %9 = vsyncpa %s8, 0
    loop: start=0, step=1, limit=6
    $region2: #{tpu_custom_call.1} parent=1 // loop_pre_header
      _
    $region3: #{tpu_custom_call.1} parent=1 // loop_header
      %s11 = sphi 0, %s15
      %p12 = scmp.ge.s32.totalorder %s11, 6
      %s18 = sphi 0, %s30
      %s19 = sphi 0, %s26
      %s20 = sphi 0, %s18
      %s21 = sphi 0, %s19
      %s22 = sphi 0, %s20
      %s23 = sphi 0, %s21
      %s41 = sphi 0, %s43
      %s44 = sphi 0, %s41
      %s45 = sphi 0, %s44
      %s61 = sphi 0, %s45
      %s75 = sphi 0, %s77
      %s78 = sphi 0, %s75
      %s79 = sphi 0, %s78
      %s95 = sphi 0, %s79
      %s101 = sphi 0, %s103
      %s104 = sphi 0, %s101
      %s105 = sphi 0, %s104
      %s121 = sphi 0, %s105
    $region4: #{tpu_custom_call.1} parent=1 // loop_header_branch
      %14 = sbr.rel (%p12) target = $region8
    $region5: #{tpu_custom_call.1} parent=1 // loop_body
      %s16 = ssub.s32 %s11, 1
      %s17 = ssub.s32 %s11, 2
      %s24 = sadd.s32 1, %s19
      %p25 = scmp.ge.s32.totalorder %s24, 2
      %s26 = scalar_select %p25, 0, %s24
      %s27 = sadd.s32 1, %s18
      %s28 = scalar_select %p25, %s27, %s18
      %p29 = scmp.ge.s32.totalorder %s28, 2
      %s30 = scalar_select %p29, 0, %s28
      %s31 = smul.u32 %s18, 2
      %s32 = sadd.s32 %s31, %s19
      %p33 = scmp.lt.s32.totalorder %s32, 2
      %s34 = scalar_select %p33, %s32, 2
      %s35 = smul.u32 %s30, 2
      %s36 = sadd.s32 %s35, %s26
      %p37 = scmp.lt.s32.totalorder %s36, 2
      %s38 = scalar_select %p37, %s36, 2
      %s39 = ssub.s32 %s34, %s38
      %p40 = scmp.eq.s32.totalorder %s39, 0
      %s42 = sadd.s32 %s41, 1
      %s43 = scalar_select %p40, %s41, %s42
      %p46 = pneg %p40
      %p47 = scmp.eq.s32.totalorder %s11, 3
      %p48 = por %p46, %p47
      %p49 = scmp.ne.s32.totalorder %s41, %s44
      %p50 = scmp.eq.s32.totalorder %s11, 0
      %p51 = por %p49, %p50
      %p52 = scmp.ne.s32.totalorder %s41, %s44
      %p53 = scmp.eq.s32.totalorder %s16, 3
      %p54 = por %p52, %p53
      %p55 = scmp.ne.s32.totalorder %s44, %s45
      %p56 = scmp.eq.s32.totalorder %s16, 0
      %p57 = por %p55, %p56
      %p58 = scmp.ne.s32.totalorder %s44, %s45
      %p59 = scmp.eq.s32.totalorder %s17, 3
      %p60 = por %p58, %p59
      %p62 = scmp.ne.s32.totalorder %s45, %s61
      %p63 = scmp.eq.s32.totalorder %s17, 0
      %p64 = por %p62, %p63
      %s65 = smul.u32 %s18, 2
      %s66 = sadd.s32 %s65, %s19
      %p67 = scmp.lt.s32.totalorder %s66, 2
      %s68 = scalar_select %p67, %s66, 2
      %s69 = smul.u32 %s30, 2
      %s70 = sadd.s32 %s69, %s26
      %p71 = scmp.lt.s32.totalorder %s70, 2
      %s72 = scalar_select %p71, %s70, 2
      %s73 = ssub.s32 %s68, %s72
      %p74 = scmp.eq.s32.totalorder %s73, 0
      %s76 = sadd.s32 %s75, 1
      %s77 = scalar_select %p74, %s75, %s76
      %p80 = pneg %p74
      %p81 = scmp.eq.s32.totalorder %s11, 3
      %p82 = por %p80, %p81
      %p83 = scmp.ne.s32.totalorder %s75, %s78
      %p84 = scmp.eq.s32.totalorder %s11, 0
      %p85 = por %p83, %p84
      %p86 = scmp.ne.s32.totalorder %s75, %s78
      %p87 = scmp.eq.s32.totalorder %s16, 3
      %p88 = por %p86, %p87
      %p89 = scmp.ne.s32.totalorder %s78, %s79
      %p90 = scmp.eq.s32.totalorder %s16, 0
      %p91 = por %p89, %p90
      %p92 = scmp.ne.s32.totalorder %s78, %s79
      %p93 = scmp.eq.s32.totalorder %s17, 3
      %p94 = por %p92, %p93
      %p96 = scmp.ne.s32.totalorder %s79, %s95
      %p97 = scmp.eq.s32.totalorder %s17, 0
      %p98 = por %p96, %p97
      %s99 = ssub.s32 %s18, %s30
      %p100 = scmp.eq.s32.totalorder %s99, 0
      %s102 = sadd.s32 %s101, 1
      %s103 = scalar_select %p100, %s101, %s102
      %p106 = pneg %p100
      %p107 = scmp.eq.s32.totalorder %s11, 3
      %p108 = por %p106, %p107
      %p109 = scmp.ne.s32.totalorder %s101, %s104
      %p110 = scmp.eq.s32.totalorder %s11, 0
      %p111 = por %p109, %p110
      %p112 = scmp.ne.s32.totalorder %s101, %s104
      %p113 = scmp.eq.s32.totalorder %s16, 3
      %p114 = por %p112, %p113
      %p115 = scmp.ne.s32.totalorder %s104, %s105
      %p116 = scmp.eq.s32.totalorder %s16, 0
      %p117 = por %p115, %p116
      %p118 = scmp.ne.s32.totalorder %s104, %s105
      %p119 = scmp.eq.s32.totalorder %s17, 3
      %p120 = por %p118, %p119
      %p122 = scmp.ne.s32.totalorder %s105, %s121
      %p123 = scmp.eq.s32.totalorder %s17, 0
      %p124 = por %p122, %p123
      %p125 = scmp.le.s32.totalorder 1, %s11
      %p126 = scmp.lt.s32.totalorder %s11, 5
      %p127 = pnand %p125, %p126
      %p128 = pneg %p127
      // Predicated region
      $region9: #{tpu_custom_call.1} parent=5 // pred_check
        _
      $region10: #{tpu_custom_call.1} parent=5 // pred_check_branch
        %130 = sbr.rel (%p127) target = $region12
      $region11: #{tpu_custom_call.1} parent=5 // pred_region
        %s131 = ssub.s32 %s11, 1
      $region12: #{tpu_custom_call.1} parent=5 // pred_fallthru
        _
      %p132 = scmp.lt.s32.totalorder %s11, 4
      // Predicated region
      $region13: #{tpu_custom_call.1} parent=5 // pred_check
        %p133 = pneg %p132
      $region14: #{tpu_custom_call.1} parent=5 // pred_check_branch
        %135 = sbr.rel (%p133) target = $region16
      $region15: #{tpu_custom_call.1} parent=5 // pred_region
        // Predicated region
        $region17: #{tpu_custom_call.1} parent=15 // pred_check
          %p136 = pneg %p51
        $region18: #{tpu_custom_call.1} parent=15 // pred_check_branch
          %138 = sbr.rel (%p136) target = $region20
        $region19: #{tpu_custom_call.1} parent=15 // pred_region
          %s139 = smul.u32 %s18, 2
          %s140 = sadd.s32 %s139, %s19
          %p141 = scmp.lt.s32.totalorder %s140, 2
          %s142 = scalar_select %p141, %s140, 2
          %s143 = smul.u32 64, %s142
          %s144 = ssub.s32 150, %s143
          %p145 = scmp.lt.s32.totalorder %s144, 64
          %s146 = scalar_select %p145, %s144, 64
          %s147 = smul.u32 8, %s146
          %p148 = scmp.lt.s32.totalorder %s143, 149
          %s149 = scalar_select %p148, %s143, 149
          %s150 = smul.addr %s149, 8
          %s151 = scalar_lea.vmem %s0, %s150
          %s152 = smul.u32 %s18, 2
          %s153 = sadd.s32 %s152, %s19
          %p154 = scmp.lt.s32.totalorder %s153, 2
          %s155 = scalar_select %p154, %s153, 2
          %s156 = smul.u32 64, %s155
          %s157 = ssub.s32 150, %s156
          %p158 = scmp.lt.s32.totalorder %s157, 64
          %s159 = scalar_select %p158, %s157, 64
          %s160 = smul.u32 8, %s159
        $region20: #{tpu_custom_call.1} parent=15 // pred_fallthru
          _
        // Predicated region
        $region21: #{tpu_custom_call.1} parent=15 // pred_check
          %p161 = pneg %p85
        $region22: #{tpu_custom_call.1} parent=15 // pred_check_branch
          %163 = sbr.rel (%p161) target = $region24
        $region23: #{tpu_custom_call.1} parent=15 // pred_region
          %s164 = smul.u32 %s18, 2
          %s165 = sadd.s32 %s164, %s19
          %p166 = scmp.lt.s32.totalorder %s165, 2
          %s167 = scalar_select %p166, %s165, 2
          %s168 = smul.u32 64, %s167
          %s169 = ssub.s32 150, %s168
          %p170 = scmp.lt.s32.totalorder %s169, 64
          %s171 = scalar_select %p170, %s169, 64
          %s172 = smul.u32 8, %s171
          %p173 = scmp.lt.s32.totalorder %s168, 149
          %s174 = scalar_select %p173, %s168, 149
          %s175 = smul.addr %s174, 8
          %s176 = scalar_lea.vmem %s1, %s175
          %s177 = smul.u32 %s18, 2
          %s178 = sadd.s32 %s177, %s19
          %p179 = scmp.lt.s32.totalorder %s178, 2
          %s180 = scalar_select %p179, %s178, 2
          %s181 = smul.u32 64, %s180
          %s182 = ssub.s32 150, %s181
          %p183 = scmp.lt.s32.totalorder %s182, 64
          %s184 = scalar_select %p183, %s182, 64
          %s185 = smul.u32 8, %s184
        $region24: #{tpu_custom_call.1} parent=15 // pred_fallthru
          _
      $region16: #{tpu_custom_call.1} parent=5 // pred_fallthru
        _
      %p186 = scmp.le.s32.totalorder 1, %s11
      %p187 = scmp.lt.s32.totalorder %s11, 5
      %p188 = pnand %p186, %p187
      %p189 = pneg %p188
      // Predicated region
      $region25: #{tpu_custom_call.1} parent=5 // pred_check
        _
      $region26: #{tpu_custom_call.1} parent=5 // pred_check_branch
        %191 = sbr.rel (%p188) target = $region28
      $region27: #{tpu_custom_call.1} parent=5 // pred_region
        %s192 = ssub.s32 %s11, 1
        %s193 = smul.u32 %s20, 2
        %s194 = sadd.s32 %s193, %s21
        %p195 = scmp.lt.s32.totalorder %s194, 2
        %s196 = scalar_select %p195, %s194, 2
        %s197 = smul.u32 64, %s196
        %s198 = ssub.s32 150, %s197
        %p199 = scmp.lt.s32.totalorder %s198, 64
        %s200 = scalar_select %p199, %s198, 64
        %s201 = smul.u32 8, %s200
        %p202 = scmp.lt.s32.totalorder %s197, 149
        %s203 = scalar_select %p202, %s197, 149
        %s204 = smul.addr %s203, 8
        %s205 = scalar_lea.vmem %s0, %s204
        %p206 = pneg %p57
        %p207 = pneg %p54
        %s208 = smul.u32 %s20, 2
        %s209 = sadd.s32 %s208, %s21
        %p210 = scmp.lt.s32.totalorder %s209, 2
        %s211 = scalar_select %p210, %s209, 2
        %s212 = smul.u32 64, %s211
        %s213 = ssub.s32 150, %s212
        %p214 = scmp.lt.s32.totalorder %s213, 64
        %s215 = scalar_select %p214, %s213, 64
        %s216 = smul.u32 8, %s215
        %p217 = scmp.lt.s32.totalorder %s212, 149
        %s218 = scalar_select %p217, %s212, 149
        %s219 = smul.addr %s218, 8
        %s220 = scalar_lea.vmem %s1, %s219
        %p221 = pneg %p91
        %p222 = pneg %p88
        %p223 = pneg %p117
        %p224 = pneg %p114
        %s225 = sand.u32 %s104, 1
        %s226 = scalar_lea.sflag [#allocation4], %s225
        %s227 = sand.u32 %s104, 1
        %s228 = scalar_lea.vmem [#allocation3], %s227
        %s229 = smul.u32 %s20, 2
        %s230 = sadd.s32 %s229, %s21
        %p231 = scmp.lt.s32.totalorder %s230, 2
        %s232 = scalar_select %p231, %s230, 2
        %s233 = smul.u32 64, %s232
        %s234 = ssub.s32 150, %s233
        %p235 = scmp.lt.s32.totalorder %s234, 64
        %s236 = scalar_select %p235, %s234, 64
        %s237 = smul.u32 8, %s236
        %p238 = scmp.lt.s32.totalorder %s233, 149
        %s239 = scalar_select %p238, %s233, 149
        %s240 = smul.addr %s239, 8
        %s241 = scalar_lea.vmem %s0, %s240
        %s242 = smul.u32 %s20, 2
        %s243 = sadd.s32 %s242, %s21
        %p244 = scmp.lt.s32.totalorder %s243, 2
        %s245 = scalar_select %p244, %s243, 2
        %s246 = smul.u32 64, %s245
        %s247 = ssub.s32 150, %s246
        %p248 = scmp.lt.s32.totalorder %s247, 64
        %s249 = scalar_select %p248, %s247, 64
        %s250 = smul.u32 8, %s249
        %s251 = smul.u32 %s20, 2
        %s252 = sadd.s32 %s251, %s21
        %p253 = scmp.lt.s32.totalorder %s252, 2
        %s254 = scalar_select %p253, %s252, 2
        %s255 = smul.u32 64, %s254
        %s256 = ssub.s32 150, %s255
        %p257 = scmp.lt.s32.totalorder %s256, 64
        %s258 = scalar_select %p257, %s256, 64
        %s259 = smul.u32 8, %s258
        %p260 = scmp.lt.s32.totalorder %s255, 149
        %s261 = scalar_select %p260, %s255, 149
        %s262 = smul.addr %s261, 8
        %s263 = scalar_lea.vmem %s1, %s262
        %s264 = smul.u32 %s20, 2
        %s265 = sadd.s32 %s264, %s21
        %p266 = scmp.lt.s32.totalorder %s265, 2
        %s267 = scalar_select %p266, %s265, 2
        %s268 = smul.u32 64, %s267
        %s269 = ssub.s32 150, %s268
        %p270 = scmp.lt.s32.totalorder %s269, 64
        %s271 = scalar_select %p270, %s269, 64
        %s272 = smul.u32 8, %s271
        %p273 = scmp.eq.s32.totalorder %s21, 0
        // Predicated region
        $region29: #{tpu_custom_call.1} parent=27 // pred_check
          %p274 = pneg %p273
        $region30: #{tpu_custom_call.1} parent=27 // pred_check_branch
          %276 = sbr.rel (%p274) target = $region32
        $region31: #{tpu_custom_call.1} parent=27 // pred_region
          %277 = vst [vmem:[#allocation2] sm:$0x1] 0.0
        $region32: #{tpu_custom_call.1} parent=27 // pred_fallthru
          _
        %v278 = vld [vmem:[%s241] sm:$0xff]
        %v279 = vld [vmem:[%s241 + $0x8] sm:$0xff]
        %v280 = vld [vmem:[%s241 + $0x10] sm:$0xff]
        %v281 = vld [vmem:[%s241 + $0x18] sm:$0xff]
        %v282 = vld [vmem:[%s241 + $0x20] sm:$0xff]
        %v283 = vld [vmem:[%s241 + $0x28] sm:$0xff]
        %v284 = vld [vmem:[%s241 + $0x30] sm:$0xff]
        %v285 = vld [vmem:[%s241 + $0x38] sm:$0xff]
        %v286 = vld [vmem:[%s241 + $0x40] sm:$0xff]
        %v287 = vld [vmem:[%s241 + $0x48] sm:$0xff]
        %v288 = vld [vmem:[%s241 + $0x50] sm:$0xff]
        %v289 = vld [vmem:[%s241 + $0x58] sm:$0xff]
        %v290 = vld [vmem:[%s241 + $0x60] sm:$0xff]
        %v291 = vld [vmem:[%s241 + $0x68] sm:$0xff]
        %v292 = vld [vmem:[%s241 + $0x70] sm:$0xff]
        %v293 = vld [vmem:[%s241 + $0x78] sm:$0xff]
        %v294 = vld [vmem:[%s241 + $0x80] sm:$0xff]
        %v295 = vld [vmem:[%s241 + $0x88] sm:$0xff]
        %v296 = vld [vmem:[%s241 + $0x90] sm:$0xff]
        %v297 = vld [vmem:[%s241 + $0x98] sm:$0xff]
        %v298 = vld [vmem:[%s241 + $0xa0] sm:$0xff]
        %v299 = vld [vmem:[%s241 + $0xa8] sm:$0xff]
        %v300 = vld [vmem:[%s241 + $0xb0] sm:$0xff]
        %v301 = vld [vmem:[%s241 + $0xb8] sm:$0xff]
        %v302 = vld [vmem:[%s241 + $0xc0] sm:$0xff]
        %v303 = vld [vmem:[%s241 + $0xc8] sm:$0xff]
        %v304 = vld [vmem:[%s241 + $0xd0] sm:$0xff]
        %v305 = vld [vmem:[%s241 + $0xd8] sm:$0xff]
        %v306 = vld [vmem:[%s241 + $0xe0] sm:$0xff]
        %v307 = vld [vmem:[%s241 + $0xe8] sm:$0xff]
        %v308 = vld [vmem:[%s241 + $0xf0] sm:$0xff]
        %v309 = vld [vmem:[%s241 + $0xf8] sm:$0xff]
        %v310 = vld [vmem:[%s241 + $0x100] sm:$0xff]
        %v311 = vld [vmem:[%s241 + $0x108] sm:$0xff]
        %v312 = vld [vmem:[%s241 + $0x110] sm:$0xff]
        %v313 = vld [vmem:[%s241 + $0x118] sm:$0xff]
        %v314 = vld [vmem:[%s241 + $0x120] sm:$0xff]
        %v315 = vld [vmem:[%s241 + $0x128] sm:$0xff]
        %v316 = vld [vmem:[%s241 + $0x130] sm:$0xff]
        %v317 = vld [vmem:[%s241 + $0x138] sm:$0xff]
        %v318 = vld [vmem:[%s241 + $0x140] sm:$0xff]
        %v319 = vld [vmem:[%s241 + $0x148] sm:$0xff]
        %v320 = vld [vmem:[%s241 + $0x150] sm:$0xff]
        %v321 = vld [vmem:[%s241 + $0x158] sm:$0xff]
        %v322 = vld [vmem:[%s241 + $0x160] sm:$0xff]
        %v323 = vld [vmem:[%s241 + $0x168] sm:$0xff]
        %v324 = vld [vmem:[%s241 + $0x170] sm:$0xff]
        %v325 = vld [vmem:[%s241 + $0x178] sm:$0xff]
        %v326 = vld [vmem:[%s241 + $0x180] sm:$0xff]
        %v327 = vld [vmem:[%s241 + $0x188] sm:$0xff]
        %v328 = vld [vmem:[%s241 + $0x190] sm:$0xff]
        %v329 = vld [vmem:[%s241 + $0x198] sm:$0xff]
        %v330 = vld [vmem:[%s241 + $0x1a0] sm:$0xff]
        %v331 = vld [vmem:[%s241 + $0x1a8] sm:$0xff]
        %v332 = vld [vmem:[%s241 + $0x1b0] sm:$0xff]
        %v333 = vld [vmem:[%s241 + $0x1b8] sm:$0xff]
        %v334 = vld [vmem:[%s241 + $0x1c0] sm:$0xff]
        %v335 = vld [vmem:[%s241 + $0x1c8] sm:$0xff]
        %v336 = vld [vmem:[%s241 + $0x1d0] sm:$0xff]
        %v337 = vld [vmem:[%s241 + $0x1d8] sm:$0xff]
        %v338 = vld [vmem:[%s241 + $0x1e0] sm:$0xff]
        %v339 = vld [vmem:[%s241 + $0x1e8] sm:$0xff]
        %v340 = vld [vmem:[%s241 + $0x1f0] sm:$0xff]
        %v341 = vld [vmem:[%s241 + $0x1f8] sm:$0xff]
        %v342 = vld [vmem:[%s263] sm:$0xff]
        %v343 = vld [vmem:[%s263 + $0x8] sm:$0xff]
        %v344 = vld [vmem:[%s263 + $0x10] sm:$0xff]
        %v345 = vld [vmem:[%s263 + $0x18] sm:$0xff]
        %v346 = vld [vmem:[%s263 + $0x20] sm:$0xff]
        %v347 = vld [vmem:[%s263 + $0x28] sm:$0xff]
        %v348 = vld [vmem:[%s263 + $0x30] sm:$0xff]
        %v349 = vld [vmem:[%s263 + $0x38] sm:$0xff]
        %v350 = vld [vmem:[%s263 + $0x40] sm:$0xff]
        %v351 = vld [vmem:[%s263 + $0x48] sm:$0xff]
        %v352 = vld [vmem:[%s263 + $0x50] sm:$0xff]
        %v353 = vld [vmem:[%s263 + $0x58] sm:$0xff]
        %v354 = vld [vmem:[%s263 + $0x60] sm:$0xff]
        %v355 = vld [vmem:[%s263 + $0x68] sm:$0xff]
        %v356 = vld [vmem:[%s263 + $0x70] sm:$0xff]
        %v357 = vld [vmem:[%s263 + $0x78] sm:$0xff]
        %v358 = vld [vmem:[%s263 + $0x80] sm:$0xff]
        %v359 = vld [vmem:[%s263 + $0x88] sm:$0xff]
        %v360 = vld [vmem:[%s263 + $0x90] sm:$0xff]
        %v361 = vld [vmem:[%s263 + $0x98] sm:$0xff]
        %v362 = vld [vmem:[%s263 + $0xa0] sm:$0xff]
        %v363 = vld [vmem:[%s263 + $0xa8] sm:$0xff]
        %v364 = vld [vmem:[%s263 + $0xb0] sm:$0xff]
        %v365 = vld [vmem:[%s263 + $0xb8] sm:$0xff]
        %v366 = vld [vmem:[%s263 + $0xc0] sm:$0xff]
        %v367 = vld [vmem:[%s263 + $0xc8] sm:$0xff]
        %v368 = vld [vmem:[%s263 + $0xd0] sm:$0xff]
        %v369 = vld [vmem:[%s263 + $0xd8] sm:$0xff]
        %v370 = vld [vmem:[%s263 + $0xe0] sm:$0xff]
        %v371 = vld [vmem:[%s263 + $0xe8] sm:$0xff]
        %v372 = vld [vmem:[%s263 + $0xf0] sm:$0xff]
        %v373 = vld [vmem:[%s263 + $0xf8] sm:$0xff]
        %v374 = vld [vmem:[%s263 + $0x100] sm:$0xff]
        %v375 = vld [vmem:[%s263 + $0x108] sm:$0xff]
        %v376 = vld [vmem:[%s263 + $0x110] sm:$0xff]
        %v377 = vld [vmem:[%s263 + $0x118] sm:$0xff]
        %v378 = vld [vmem:[%s263 + $0x120] sm:$0xff]
        %v379 = vld [vmem:[%s263 + $0x128] sm:$0xff]
        %v380 = vld [vmem:[%s263 + $0x130] sm:$0xff]
        %v381 = vld [vmem:[%s263 + $0x138] sm:$0xff]
        %v382 = vld [vmem:[%s263 + $0x140] sm:$0xff]
        %v383 = vld [vmem:[%s263 + $0x148] sm:$0xff]
        %v384 = vld [vmem:[%s263 + $0x150] sm:$0xff]
        %v385 = vld [vmem:[%s263 + $0x158] sm:$0xff]
        %v386 = vld [vmem:[%s263 + $0x160] sm:$0xff]
        %v387 = vld [vmem:[%s263 + $0x168] sm:$0xff]
        %v388 = vld [vmem:[%s263 + $0x170] sm:$0xff]
        %v389 = vld [vmem:[%s263 + $0x178] sm:$0xff]
        %v390 = vld [vmem:[%s263 + $0x180] sm:$0xff]
        %v391 = vld [vmem:[%s263 + $0x188] sm:$0xff]
        %v392 = vld [vmem:[%s263 + $0x190] sm:$0xff]
        %v393 = vld [vmem:[%s263 + $0x198] sm:$0xff]
        %v394 = vld [vmem:[%s263 + $0x1a0] sm:$0xff]
        %v395 = vld [vmem:[%s263 + $0x1a8] sm:$0xff]
        %v396 = vld [vmem:[%s263 + $0x1b0] sm:$0xff]
        %v397 = vld [vmem:[%s263 + $0x1b8] sm:$0xff]
        %v398 = vld [vmem:[%s263 + $0x1c0] sm:$0xff]
        %v399 = vld [vmem:[%s263 + $0x1c8] sm:$0xff]
        %v400 = vld [vmem:[%s263 + $0x1d0] sm:$0xff]
        %v401 = vld [vmem:[%s263 + $0x1d8] sm:$0xff]
        %v402 = vld [vmem:[%s263 + $0x1e0] sm:$0xff]
        %v403 = vld [vmem:[%s263 + $0x1e8] sm:$0xff]
        %v404 = vld [vmem:[%s263 + $0x1f0] sm:$0xff]
        %v405 = vld [vmem:[%s263 + $0x1f8] sm:$0xff]
        %v406 = vlaneseq
        %v407 = vand.u32 %v406, 127
        %408 = vset.pattern.permute.xlu0 0
        %409 = vperm.xlu0 %408, %v342
        %v410 = vpop.permute.xlu0 %409
        %411 = vset.pattern.permute.xlu0 0
        %412 = vperm.xlu0 %411, %v343
        %v413 = vpop.permute.xlu0 %412
        %414 = vset.pattern.permute.xlu0 0
        %415 = vperm.xlu0 %414, %v344
        %v416 = vpop.permute.xlu0 %415
        %417 = vset.pattern.permute.xlu0 0
        %418 = vperm.xlu0 %417, %v345
        %v419 = vpop.permute.xlu0 %418
        %420 = vset.pattern.permute.xlu0 0
        %421 = vperm.xlu0 %420, %v346
        %v422 = vpop.permute.xlu0 %421
        %423 = vset.pattern.permute.xlu0 0
        %424 = vperm.xlu0 %423, %v347
        %v425 = vpop.permute.xlu0 %424
        %426 = vset.pattern.permute.xlu0 0
        %427 = vperm.xlu0 %426, %v348
        %v428 = vpop.permute.xlu0 %427
        %429 = vset.pattern.permute.xlu0 0
        %430 = vperm.xlu0 %429, %v349
        %v431 = vpop.permute.xlu0 %430
        %432 = vset.pattern.permute.xlu0 0
        %433 = vperm.xlu0 %432, %v350
        %v434 = vpop.permute.xlu0 %433
        %435 = vset.pattern.permute.xlu0 0
        %436 = vperm.xlu0 %435, %v351
        %v437 = vpop.permute.xlu0 %436
        %438 = vset.pattern.permute.xlu0 0
        %439 = vperm.xlu0 %438, %v352
        %v440 = vpop.permute.xlu0 %439
        %441 = vset.pattern.permute.xlu0 0
        %442 = vperm.xlu0 %441, %v353
        %v443 = vpop.permute.xlu0 %442
        %444 = vset.pattern.permute.xlu0 0
        %445 = vperm.xlu0 %444, %v354
        %v446 = vpop.permute.xlu0 %445
        %447 = vset.pattern.permute.xlu0 0
        %448 = vperm.xlu0 %447, %v355
        %v449 = vpop.permute.xlu0 %448
        %450 = vset.pattern.permute.xlu0 0
        %451 = vperm.xlu0 %450, %v356
        %v452 = vpop.permute.xlu0 %451
        %453 = vset.pattern.permute.xlu0 0
        %454 = vperm.xlu0 %453, %v357
        %v455 = vpop.permute.xlu0 %454
        %456 = vset.pattern.permute.xlu0 0
        %457 = vperm.xlu0 %456, %v358
        %v458 = vpop.permute.xlu0 %457
        %459 = vset.pattern.permute.xlu0 0
        %460 = vperm.xlu0 %459, %v359
        %v461 = vpop.permute.xlu0 %460
        %462 = vset.pattern.permute.xlu0 0
        %463 = vperm.xlu0 %462, %v360
        %v464 = vpop.permute.xlu0 %463
        %465 = vset.pattern.permute.xlu0 0
        %466 = vperm.xlu0 %465, %v361
        %v467 = vpop.permute.xlu0 %466
        %468 = vset.pattern.permute.xlu0 0
        %469 = vperm.xlu0 %468, %v362
        %v470 = vpop.permute.xlu0 %469
        %471 = vset.pattern.permute.xlu0 0
        %472 = vperm.xlu0 %471, %v363
        %v473 = vpop.permute.xlu0 %472
        %474 = vset.pattern.permute.xlu0 0
        %475 = vperm.xlu0 %474, %v364
        %v476 = vpop.permute.xlu0 %475
        %477 = vset.pattern.permute.xlu0 0
        %478 = vperm.xlu0 %477, %v365
        %v479 = vpop.permute.xlu0 %478
        %480 = vset.pattern.permute.xlu0 0
        %481 = vperm.xlu0 %480, %v366
        %v482 = vpop.permute.xlu0 %481
        %483 = vset.pattern.permute.xlu0 0
        %484 = vperm.xlu0 %483, %v367
        %v485 = vpop.permute.xlu0 %484
        %486 = vset.pattern.permute.xlu0 0
        %487 = vperm.xlu0 %486, %v368
        %v488 = vpop.permute.xlu0 %487
        %489 = vset.pattern.permute.xlu0 0
        %490 = vperm.xlu0 %489, %v369
        %v491 = vpop.permute.xlu0 %490
        %492 = vset.pattern.permute.xlu0 0
        %493 = vperm.xlu0 %492, %v370
        %v494 = vpop.permute.xlu0 %493
        %495 = vset.pattern.permute.xlu0 0
        %496 = vperm.xlu0 %495, %v371
        %v497 = vpop.permute.xlu0 %496
        %498 = vset.pattern.permute.xlu0 0
        %499 = vperm.xlu0 %498, %v372
        %v500 = vpop.permute.xlu0 %499
        %501 = vset.pattern.permute.xlu0 0
        %502 = vperm.xlu0 %501, %v373
        %v503 = vpop.permute.xlu0 %502
        %504 = vset.pattern.permute.xlu0 0
        %505 = vperm.xlu0 %504, %v374
        %v506 = vpop.permute.xlu0 %505
        %507 = vset.pattern.permute.xlu0 0
        %508 = vperm.xlu0 %507, %v375
        %v509 = vpop.permute.xlu0 %508
        %510 = vset.pattern.permute.xlu0 0
        %511 = vperm.xlu0 %510, %v376
        %v512 = vpop.permute.xlu0 %511
        %513 = vset.pattern.permute.xlu0 0
        %514 = vperm.xlu0 %513, %v377
        %v515 = vpop.permute.xlu0 %514
        %516 = vset.pattern.permute.xlu0 0
        %517 = vperm.xlu0 %516, %v378
        %v518 = vpop.permute.xlu0 %517
        %519 = vset.pattern.permute.xlu0 0
        %520 = vperm.xlu0 %519, %v379
        %v521 = vpop.permute.xlu0 %520
        %522 = vset.pattern.permute.xlu0 0
        %523 = vperm.xlu0 %522, %v380
        %v524 = vpop.permute.xlu0 %523
        %525 = vset.pattern.permute.xlu0 0
        %526 = vperm.xlu0 %525, %v381
        %v527 = vpop.permute.xlu0 %526
        %528 = vset.pattern.permute.xlu0 0
        %529 = vperm.xlu0 %528, %v382
        %v530 = vpop.permute.xlu0 %529
        %531 = vset.pattern.permute.xlu0 0
        %532 = vperm.xlu0 %531, %v383
        %v533 = vpop.permute.xlu0 %532
        %534 = vset.pattern.permute.xlu0 0
        %535 = vperm.xlu0 %534, %v384
        %v536 = vpop.permute.xlu0 %535
        %537 = vset.pattern.permute.xlu0 0
        %538 = vperm.xlu0 %537, %v385
        %v539 = vpop.permute.xlu0 %538
        %540 = vset.pattern.permute.xlu0 0
        %541 = vperm.xlu0 %540, %v386
        %v542 = vpop.permute.xlu0 %541
        %543 = vset.pattern.permute.xlu0 0
        %544 = vperm.xlu0 %543, %v387
        %v545 = vpop.permute.xlu0 %544
        %546 = vset.pattern.permute.xlu0 0
        %547 = vperm.xlu0 %546, %v388
        %v548 = vpop.permute.xlu0 %547
        %549 = vset.pattern.permute.xlu0 0
        %550 = vperm.xlu0 %549, %v389
        %v551 = vpop.permute.xlu0 %550
        %552 = vset.pattern.permute.xlu0 0
        %553 = vperm.xlu0 %552, %v390
        %v554 = vpop.permute.xlu0 %553
        %555 = vset.pattern.permute.xlu0 0
        %556 = vperm.xlu0 %555, %v391
        %v557 = vpop.permute.xlu0 %556
        %558 = vset.pattern.permute.xlu0 0
        %559 = vperm.xlu0 %558, %v392
        %v560 = vpop.permute.xlu0 %559
        %561 = vset.pattern.permute.xlu0 0
        %562 = vperm.xlu0 %561, %v393
        %v563 = vpop.permute.xlu0 %562
        %564 = vset.pattern.permute.xlu0 0
        %565 = vperm.xlu0 %564, %v394
        %v566 = vpop.permute.xlu0 %565
        %567 = vset.pattern.permute.xlu0 0
        %568 = vperm.xlu0 %567, %v395
        %v569 = vpop.permute.xlu0 %568
        %570 = vset.pattern.permute.xlu0 0
        %571 = vperm.xlu0 %570, %v396
        %v572 = vpop.permute.xlu0 %571
        %573 = vset.pattern.permute.xlu0 0
        %574 = vperm.xlu0 %573, %v397
        %v575 = vpop.permute.xlu0 %574
        %576 = vset.pattern.permute.xlu0 0
        %577 = vperm.xlu0 %576, %v398
        %v578 = vpop.permute.xlu0 %577
        %579 = vset.pattern.permute.xlu0 0
        %580 = vperm.xlu0 %579, %v399
        %v581 = vpop.permute.xlu0 %580
        %582 = vset.pattern.permute.xlu0 0
        %583 = vperm.xlu0 %582, %v400
        %v584 = vpop.permute.xlu0 %583
        %585 = vset.pattern.permute.xlu0 0
        %586 = vperm.xlu0 %585, %v401
        %v587 = vpop.permute.xlu0 %586
        %588 = vset.pattern.permute.xlu0 0
        %589 = vperm.xlu0 %588, %v402
        %v590 = vpop.permute.xlu0 %589
        %591 = vset.pattern.permute.xlu0 0
        %592 = vperm.xlu0 %591, %v403
        %v593 = vpop.permute.xlu0 %592
        %594 = vset.pattern.permute.xlu0 0
        %595 = vperm.xlu0 %594, %v404
        %v596 = vpop.permute.xlu0 %595
        %597 = vset.pattern.permute.xlu0 0
        %598 = vperm.xlu0 %597, %v405
        %v599 = vpop.permute.xlu0 %598
        %vm600 = vcmp.eq.s32.totalorder %v407, %v410
        %vm601 = vcmp.eq.s32.totalorder %v407, %v413
        %vm602 = vcmp.eq.s32.totalorder %v407, %v416
        %vm603 = vcmp.eq.s32.totalorder %v407, %v419
        %vm604 = vcmp.eq.s32.totalorder %v407, %v422
        %vm605 = vcmp.eq.s32.totalorder %v407, %v425
        %vm606 = vcmp.eq.s32.totalorder %v407, %v428
        %vm607 = vcmp.eq.s32.totalorder %v407, %v431
        %vm608 = vcmp.eq.s32.totalorder %v407, %v434
        %vm609 = vcmp.eq.s32.totalorder %v407, %v437
        %vm610 = vcmp.eq.s32.totalorder %v407, %v440
        %vm611 = vcmp.eq.s32.totalorder %v407, %v443
        %vm612 = vcmp.eq.s32.totalorder %v407, %v446
        %vm613 = vcmp.eq.s32.totalorder %v407, %v449
        %vm614 = vcmp.eq.s32.totalorder %v407, %v452
        %vm615 = vcmp.eq.s32.totalorder %v407, %v455
        %vm616 = vcmp.eq.s32.totalorder %v407, %v458
        %vm617 = vcmp.eq.s32.totalorder %v407, %v461
        %vm618 = vcmp.eq.s32.totalorder %v407, %v464
        %vm619 = vcmp.eq.s32.totalorder %v407, %v467
        %vm620 = vcmp.eq.s32.totalorder %v407, %v470
        %vm621 = vcmp.eq.s32.totalorder %v407, %v473
        %vm622 = vcmp.eq.s32.totalorder %v407, %v476
        %vm623 = vcmp.eq.s32.totalorder %v407, %v479
        %vm624 = vcmp.eq.s32.totalorder %v407, %v482
        %vm625 = vcmp.eq.s32.totalorder %v407, %v485
        %vm626 = vcmp.eq.s32.totalorder %v407, %v488
        %vm627 = vcmp.eq.s32.totalorder %v407, %v491
        %vm628 = vcmp.eq.s32.totalorder %v407, %v494
        %vm629 = vcmp.eq.s32.totalorder %v407, %v497
        %vm630 = vcmp.eq.s32.totalorder %v407, %v500
        %vm631 = vcmp.eq.s32.totalorder %v407, %v503
        %vm632 = vcmp.eq.s32.totalorder %v407, %v506
        %vm633 = vcmp.eq.s32.totalorder %v407, %v509
        %vm634 = vcmp.eq.s32.totalorder %v407, %v512
        %vm635 = vcmp.eq.s32.totalorder %v407, %v515
        %vm636 = vcmp.eq.s32.totalorder %v407, %v518
        %vm637 = vcmp.eq.s32.totalorder %v407, %v521
        %vm638 = vcmp.eq.s32.totalorder %v407, %v524
        %vm639 = vcmp.eq.s32.totalorder %v407, %v527
        %vm640 = vcmp.eq.s32.totalorder %v407, %v530
        %vm641 = vcmp.eq.s32.totalorder %v407, %v533
        %vm642 = vcmp.eq.s32.totalorder %v407, %v536
        %vm643 = vcmp.eq.s32.totalorder %v407, %v539
        %vm644 = vcmp.eq.s32.totalorder %v407, %v542
        %vm645 = vcmp.eq.s32.totalorder %v407, %v545
        %vm646 = vcmp.eq.s32.totalorder %v407, %v548
        %vm647 = vcmp.eq.s32.totalorder %v407, %v551
        %vm648 = vcmp.eq.s32.totalorder %v407, %v554
        %vm649 = vcmp.eq.s32.totalorder %v407, %v557
        %vm650 = vcmp.eq.s32.totalorder %v407, %v560
        %vm651 = vcmp.eq.s32.totalorder %v407, %v563
        %vm652 = vcmp.eq.s32.totalorder %v407, %v566
        %vm653 = vcmp.eq.s32.totalorder %v407, %v569
        %vm654 = vcmp.eq.s32.totalorder %v407, %v572
        %vm655 = vcmp.eq.s32.totalorder %v407, %v575
        %vm656 = vcmp.eq.s32.totalorder %v407, %v578
        %vm657 = vcmp.eq.s32.totalorder %v407, %v581
        %vm658 = vcmp.eq.s32.totalorder %v407, %v584
        %vm659 = vcmp.eq.s32.totalorder %v407, %v587
        %vm660 = vcmp.eq.s32.totalorder %v407, %v590
        %vm661 = vcmp.eq.s32.totalorder %v407, %v593
        %vm662 = vcmp.eq.s32.totalorder %v407, %v596
        %vm663 = vcmp.eq.s32.totalorder %v407, %v599
        %664 = vmax.xlane.f32.xlu0 %v278
        %v665 = vpop.xlane.xlu0 %664
        %666 = vmax.xlane.f32.xlu0 %v279
        %v667 = vpop.xlane.xlu0 %666
        %668 = vmax.xlane.f32.xlu0 %v280
        %v669 = vpop.xlane.xlu0 %668
        %670 = vmax.xlane.f32.xlu0 %v281
        %v671 = vpop.xlane.xlu0 %670
        %672 = vmax.xlane.f32.xlu0 %v282
        %v673 = vpop.xlane.xlu0 %672
        %674 = vmax.xlane.f32.xlu0 %v283
        %v675 = vpop.xlane.xlu0 %674
        %676 = vmax.xlane.f32.xlu0 %v284
        %v677 = vpop.xlane.xlu0 %676
        %678 = vmax.xlane.f32.xlu0 %v285
        %v679 = vpop.xlane.xlu0 %678
        %680 = vmax.xlane.f32.xlu0 %v286
        %v681 = vpop.xlane.xlu0 %680
        %682 = vmax.xlane.f32.xlu0 %v287
        %v683 = vpop.xlane.xlu0 %682
        %684 = vmax.xlane.f32.xlu0 %v288
        %v685 = vpop.xlane.xlu0 %684
        %686 = vmax.xlane.f32.xlu0 %v289
        %v687 = vpop.xlane.xlu0 %686
        %688 = vmax.xlane.f32.xlu0 %v290
        %v689 = vpop.xlane.xlu0 %688
        %690 = vmax.xlane.f32.xlu0 %v291
        %v691 = vpop.xlane.xlu0 %690
        %692 = vmax.xlane.f32.xlu0 %v292
        %v693 = vpop.xlane.xlu0 %692
        %694 = vmax.xlane.f32.xlu0 %v293
        %v695 = vpop.xlane.xlu0 %694
        %696 = vmax.xlane.f32.xlu0 %v294
        %v697 = vpop.xlane.xlu0 %696
        %698 = vmax.xlane.f32.xlu0 %v295
        %v699 = vpop.xlane.xlu0 %698
        %700 = vmax.xlane.f32.xlu0 %v296
        %v701 = vpop.xlane.xlu0 %700
        %702 = vmax.xlane.f32.xlu0 %v297
        %v703 = vpop.xlane.xlu0 %702
        %704 = vmax.xlane.f32.xlu0 %v298
        %v705 = vpop.xlane.xlu0 %704
        %706 = vmax.xlane.f32.xlu0 %v299
        %v707 = vpop.xlane.xlu0 %706
        %708 = vmax.xlane.f32.xlu0 %v300
        %v709 = vpop.xlane.xlu0 %708
        %710 = vmax.xlane.f32.xlu0 %v301
        %v711 = vpop.xlane.xlu0 %710
        %712 = vmax.xlane.f32.xlu0 %v302
        %v713 = vpop.xlane.xlu0 %712
        %714 = vmax.xlane.f32.xlu0 %v303
        %v715 = vpop.xlane.xlu0 %714
        %716 = vmax.xlane.f32.xlu0 %v304
        %v717 = vpop.xlane.xlu0 %716
        %718 = vmax.xlane.f32.xlu0 %v305
        %v719 = vpop.xlane.xlu0 %718
        %720 = vmax.xlane.f32.xlu0 %v306
        %v721 = vpop.xlane.xlu0 %720
        %722 = vmax.xlane.f32.xlu0 %v307
        %v723 = vpop.xlane.xlu0 %722
        %724 = vmax.xlane.f32.xlu0 %v308
        %v725 = vpop.xlane.xlu0 %724
        %726 = vmax.xlane.f32.xlu0 %v309
        %v727 = vpop.xlane.xlu0 %726
        %728 = vmax.xlane.f32.xlu0 %v310
        %v729 = vpop.xlane.xlu0 %728
        %730 = vmax.xlane.f32.xlu0 %v311
        %v731 = vpop.xlane.xlu0 %730
        %732 = vmax.xlane.f32.xlu0 %v312
        %v733 = vpop.xlane.xlu0 %732
        %734 = vmax.xlane.f32.xlu0 %v313
        %v735 = vpop.xlane.xlu0 %734
        %736 = vmax.xlane.f32.xlu0 %v314
        %v737 = vpop.xlane.xlu0 %736
        %738 = vmax.xlane.f32.xlu0 %v315
        %v739 = vpop.xlane.xlu0 %738
        %740 = vmax.xlane.f32.xlu0 %v316
        %v741 = vpop.xlane.xlu0 %740
        %742 = vmax.xlane.f32.xlu0 %v317
        %v743 = vpop.xlane.xlu0 %742
        %744 = vmax.xlane.f32.xlu0 %v318
        %v745 = vpop.xlane.xlu0 %744
        %746 = vmax.xlane.f32.xlu0 %v319
        %v747 = vpop.xlane.xlu0 %746
        %748 = vmax.xlane.f32.xlu0 %v320
        %v749 = vpop.xlane.xlu0 %748
        %750 = vmax.xlane.f32.xlu0 %v321
        %v751 = vpop.xlane.xlu0 %750
        %752 = vmax.xlane.f32.xlu0 %v322
        %v753 = vpop.xlane.xlu0 %752
        %754 = vmax.xlane.f32.xlu0 %v323
        %v755 = vpop.xlane.xlu0 %754
        %756 = vmax.xlane.f32.xlu0 %v324
        %v757 = vpop.xlane.xlu0 %756
        %758 = vmax.xlane.f32.xlu0 %v325
        %v759 = vpop.xlane.xlu0 %758
        %760 = vmax.xlane.f32.xlu0 %v326
        %v761 = vpop.xlane.xlu0 %760
        %762 = vmax.xlane.f32.xlu0 %v327
        %v763 = vpop.xlane.xlu0 %762
        %764 = vmax.xlane.f32.xlu0 %v328
        %v765 = vpop.xlane.xlu0 %764
        %766 = vmax.xlane.f32.xlu0 %v329
        %v767 = vpop.xlane.xlu0 %766
        %768 = vmax.xlane.f32.xlu0 %v330
        %v769 = vpop.xlane.xlu0 %768
        %770 = vmax.xlane.f32.xlu0 %v331
        %v771 = vpop.xlane.xlu0 %770
        %772 = vmax.xlane.f32.xlu0 %v332
        %v773 = vpop.xlane.xlu0 %772
        %774 = vmax.xlane.f32.xlu0 %v333
        %v775 = vpop.xlane.xlu0 %774
        %776 = vmax.xlane.f32.xlu0 %v334
        %v777 = vpop.xlane.xlu0 %776
        %778 = vmax.xlane.f32.xlu0 %v335
        %v779 = vpop.xlane.xlu0 %778
        %780 = vmax.xlane.f32.xlu0 %v336
        %v781 = vpop.xlane.xlu0 %780
        %782 = vmax.xlane.f32.xlu0 %v337
        %v783 = vpop.xlane.xlu0 %782
        %784 = vmax.xlane.f32.xlu0 %v338
        %v785 = vpop.xlane.xlu0 %784
        %786 = vmax.xlane.f32.xlu0 %v339
        %v787 = vpop.xlane.xlu0 %786
        %788 = vmax.xlane.f32.xlu0 %v340
        %v789 = vpop.xlane.xlu0 %788
        %790 = vmax.xlane.f32.xlu0 %v341
        %v791 = vpop.xlane.xlu0 %790
        %v792 = vsub.f32 %v278, %v665
        %v793 = vsub.f32 %v279, %v667
        %v794 = vsub.f32 %v280, %v669
        %v795 = vsub.f32 %v281, %v671
        %v796 = vsub.f32 %v282, %v673
        %v797 = vsub.f32 %v283, %v675
        %v798 = vsub.f32 %v284, %v677
        %v799 = vsub.f32 %v285, %v679
        %v800 = vsub.f32 %v286, %v681
        %v801 = vsub.f32 %v287, %v683
        %v802 = vsub.f32 %v288, %v685
        %v803 = vsub.f32 %v289, %v687
        %v804 = vsub.f32 %v290, %v689
        %v805 = vsub.f32 %v291, %v691
        %v806 = vsub.f32 %v292, %v693
        %v807 = vsub.f32 %v293, %v695
        %v808 = vsub.f32 %v294, %v697
        %v809 = vsub.f32 %v295, %v699
        %v810 = vsub.f32 %v296, %v701
        %v811 = vsub.f32 %v297, %v703
        %v812 = vsub.f32 %v298, %v705
        %v813 = vsub.f32 %v299, %v707
        %v814 = vsub.f32 %v300, %v709
        %v815 = vsub.f32 %v301, %v711
        %v816 = vsub.f32 %v302, %v713
        %v817 = vsub.f32 %v303, %v715
        %v818 = vsub.f32 %v304, %v717
        %v819 = vsub.f32 %v305, %v719
        %v820 = vsub.f32 %v306, %v721
        %v821 = vsub.f32 %v307, %v723
        %v822 = vsub.f32 %v308, %v725
        %v823 = vsub.f32 %v309, %v727
        %v824 = vsub.f32 %v310, %v729
        %v825 = vsub.f32 %v311, %v731
        %v826 = vsub.f32 %v312, %v733
        %v827 = vsub.f32 %v313, %v735
        %v828 = vsub.f32 %v314, %v737
        %v829 = vsub.f32 %v315, %v739
        %v830 = vsub.f32 %v316, %v741
        %v831 = vsub.f32 %v317, %v743
        %v832 = vsub.f32 %v318, %v745
        %v833 = vsub.f32 %v319, %v747
        %v834 = vsub.f32 %v320, %v749
        %v835 = vsub.f32 %v321, %v751
        %v836 = vsub.f32 %v322, %v753
        %v837 = vsub.f32 %v323, %v755
        %v838 = vsub.f32 %v324, %v757
        %v839 = vsub.f32 %v325, %v759
        %v840 = vsub.f32 %v326, %v761
        %v841 = vsub.f32 %v327, %v763
        %v842 = vsub.f32 %v328, %v765
        %v843 = vsub.f32 %v329, %v767
        %v844 = vsub.f32 %v330, %v769
        %v845 = vsub.f32 %v331, %v771
        %v846 = vsub.f32 %v332, %v773
        %v847 = vsub.f32 %v333, %v775
        %v848 = vsub.f32 %v334, %v777
        %v849 = vsub.f32 %v335, %v779
        %v850 = vsub.f32 %v336, %v781
        %v851 = vsub.f32 %v337, %v783
        %v852 = vsub.f32 %v338, %v785
        %v853 = vsub.f32 %v339, %v787
        %v854 = vsub.f32 %v340, %v789
        %v855 = vsub.f32 %v341, %v791
        %v856 = vmul.f32 %v792, 1.442695
        %v857 = vpow.pop %v856
        %v858 = vmul.f32 %v793, 1.442695
        %v859 = vpow.pop %v858
        %v860 = vmul.f32 %v794, 1.442695
        %v861 = vpow.pop %v860
        %v862 = vmul.f32 %v795, 1.442695
        %v863 = vpow.pop %v862
        %v864 = vmul.f32 %v796, 1.442695
        %v865 = vpow.pop %v864
        %v866 = vmul.f32 %v797, 1.442695
        %v867 = vpow.pop %v866
        %v868 = vmul.f32 %v798, 1.442695
        %v869 = vpow.pop %v868
        %v870 = vmul.f32 %v799, 1.442695
        %v871 = vpow.pop %v870
        %v872 = vmul.f32 %v800, 1.442695
        %v873 = vpow.pop %v872
        %v874 = vmul.f32 %v801, 1.442695
        %v875 = vpow.pop %v874
        %v876 = vmul.f32 %v802, 1.442695
        %v877 = vpow.pop %v876
        %v878 = vmul.f32 %v803, 1.442695
        %v879 = vpow.pop %v878
        %v880 = vmul.f32 %v804, 1.442695
        %v881 = vpow.pop %v880
        %v882 = vmul.f32 %v805, 1.442695
        %v883 = vpow.pop %v882
        %v884 = vmul.f32 %v806, 1.442695
        %v885 = vpow.pop %v884
        %v886 = vmul.f32 %v807, 1.442695
        %v887 = vpow.pop %v886
        %v888 = vmul.f32 %v808, 1.442695
        %v889 = vpow.pop %v888
        %v890 = vmul.f32 %v809, 1.442695
        %v891 = vpow.pop %v890
        %v892 = vmul.f32 %v810, 1.442695
        %v893 = vpow.pop %v892
        %v894 = vmul.f32 %v811, 1.442695
        %v895 = vpow.pop %v894
        %v896 = vmul.f32 %v812, 1.442695
        %v897 = vpow.pop %v896
        %v898 = vmul.f32 %v813, 1.442695
        %v899 = vpow.pop %v898
        %v900 = vmul.f32 %v814, 1.442695
        %v901 = vpow.pop %v900
        %v902 = vmul.f32 %v815, 1.442695
        %v903 = vpow.pop %v902
        %v904 = vmul.f32 %v816, 1.442695
        %v905 = vpow.pop %v904
        %v906 = vmul.f32 %v817, 1.442695
        %v907 = vpow.pop %v906
        %v908 = vmul.f32 %v818, 1.442695
        %v909 = vpow.pop %v908
        %v910 = vmul.f32 %v819, 1.442695
        %v911 = vpow.pop %v910
        %v912 = vmul.f32 %v820, 1.442695
        %v913 = vpow.pop %v912
        %v914 = vmul.f32 %v821, 1.442695
        %v915 = vpow.pop %v914
        %v916 = vmul.f32 %v822, 1.442695
        %v917 = vpow.pop %v916
        %v918 = vmul.f32 %v823, 1.442695
        %v919 = vpow.pop %v918
        %v920 = vmul.f32 %v824, 1.442695
        %v921 = vpow.pop %v920
        %v922 = vmul.f32 %v825, 1.442695
        %v923 = vpow.pop %v922
        %v924 = vmul.f32 %v826, 1.442695
        %v925 = vpow.pop %v924
        %v926 = vmul.f32 %v827, 1.442695
        %v927 = vpow.pop %v926
        %v928 = vmul.f32 %v828, 1.442695
        %v929 = vpow.pop %v928
        %v930 = vmul.f32 %v829, 1.442695
        %v931 = vpow.pop %v930
        %v932 = vmul.f32 %v830, 1.442695
        %v933 = vpow.pop %v932
        %v934 = vmul.f32 %v831, 1.442695
        %v935 = vpow.pop %v934
        %v936 = vmul.f32 %v832, 1.442695
        %v937 = vpow.pop %v936
        %v938 = vmul.f32 %v833, 1.442695
        %v939 = vpow.pop %v938
        %v940 = vmul.f32 %v834, 1.442695
        %v941 = vpow.pop %v940
        %v942 = vmul.f32 %v835, 1.442695
        %v943 = vpow.pop %v942
        %v944 = vmul.f32 %v836, 1.442695
        %v945 = vpow.pop %v944
        %v946 = vmul.f32 %v837, 1.442695
        %v947 = vpow.pop %v946
        %v948 = vmul.f32 %v838, 1.442695
        %v949 = vpow.pop %v948
        %v950 = vmul.f32 %v839, 1.442695
        %v951 = vpow.pop %v950
        %v952 = vmul.f32 %v840, 1.442695
        %v953 = vpow.pop %v952
        %v954 = vmul.f32 %v841, 1.442695
        %v955 = vpow.pop %v954
        %v956 = vmul.f32 %v842, 1.442695
        %v957 = vpow.pop %v956
        %v958 = vmul.f32 %v843, 1.442695
        %v959 = vpow.pop %v958
        %v960 = vmul.f32 %v844, 1.442695
        %v961 = vpow.pop %v960
        %v962 = vmul.f32 %v845, 1.442695
        %v963 = vpow.pop %v962
        %v964 = vmul.f32 %v846, 1.442695
        %v965 = vpow.pop %v964
        %v966 = vmul.f32 %v847, 1.442695
        %v967 = vpow.pop %v966
        %v968 = vmul.f32 %v848, 1.442695
        %v969 = vpow.pop %v968
        %v970 = vmul.f32 %v849, 1.442695
        %v971 = vpow.pop %v970
        %v972 = vmul.f32 %v850, 1.442695
        %v973 = vpow.pop %v972
        %v974 = vmul.f32 %v851, 1.442695
        %v975 = vpow.pop %v974
        %v976 = vmul.f32 %v852, 1.442695
        %v977 = vpow.pop %v976
        %v978 = vmul.f32 %v853, 1.442695
        %v979 = vpow.pop %v978
        %v980 = vmul.f32 %v854, 1.442695
        %v981 = vpow.pop %v980
        %v982 = vmul.f32 %v855, 1.442695
        %v983 = vpow.pop %v982
        %984 = vadd.xlane.f32.xlu0 %v857
        %v985 = vpop.xlane.xlu0 %984
        %986 = vadd.xlane.f32.xlu0 %v859
        %v987 = vpop.xlane.xlu0 %986
        %988 = vadd.xlane.f32.xlu0 %v861
        %v989 = vpop.xlane.xlu0 %988
        %990 = vadd.xlane.f32.xlu0 %v863
        %v991 = vpop.xlane.xlu0 %990
        %992 = vadd.xlane.f32.xlu0 %v865
        %v993 = vpop.xlane.xlu0 %992
        %994 = vadd.xlane.f32.xlu0 %v867
        %v995 = vpop.xlane.xlu0 %994
        %996 = vadd.xlane.f32.xlu0 %v869
        %v997 = vpop.xlane.xlu0 %996
        %998 = vadd.xlane.f32.xlu0 %v871
        %v999 = vpop.xlane.xlu0 %998
        %1000 = vadd.xlane.f32.xlu0 %v873
        %v1001 = vpop.xlane.xlu0 %1000
        %1002 = vadd.xlane.f32.xlu0 %v875
        %v1003 = vpop.xlane.xlu0 %1002
        %1004 = vadd.xlane.f32.xlu0 %v877
        %v1005 = vpop.xlane.xlu0 %1004
        %1006 = vadd.xlane.f32.xlu0 %v879
        %v1007 = vpop.xlane.xlu0 %1006
        %1008 = vadd.xlane.f32.xlu0 %v881
        %v1009 = vpop.xlane.xlu0 %1008
        %1010 = vadd.xlane.f32.xlu0 %v883
        %v1011 = vpop.xlane.xlu0 %1010
        %1012 = vadd.xlane.f32.xlu0 %v885
        %v1013 = vpop.xlane.xlu0 %1012
        %1014 = vadd.xlane.f32.xlu0 %v887
        %v1015 = vpop.xlane.xlu0 %1014
        %1016 = vadd.xlane.f32.xlu0 %v889
        %v1017 = vpop.xlane.xlu0 %1016
        %1018 = vadd.xlane.f32.xlu0 %v891
        %v1019 = vpop.xlane.xlu0 %1018
        %1020 = vadd.xlane.f32.xlu0 %v893
        %v1021 = vpop.xlane.xlu0 %1020
        %1022 = vadd.xlane.f32.xlu0 %v895
        %v1023 = vpop.xlane.xlu0 %1022
        %1024 = vadd.xlane.f32.xlu0 %v897
        %v1025 = vpop.xlane.xlu0 %1024
        %1026 = vadd.xlane.f32.xlu0 %v899
        %v1027 = vpop.xlane.xlu0 %1026
        %1028 = vadd.xlane.f32.xlu0 %v901
        %v1029 = vpop.xlane.xlu0 %1028
        %1030 = vadd.xlane.f32.xlu0 %v903
        %v1031 = vpop.xlane.xlu0 %1030
        %1032 = vadd.xlane.f32.xlu0 %v905
        %v1033 = vpop.xlane.xlu0 %1032
        %1034 = vadd.xlane.f32.xlu0 %v907
        %v1035 = vpop.xlane.xlu0 %1034
        %1036 = vadd.xlane.f32.xlu0 %v909
        %v1037 = vpop.xlane.xlu0 %1036
        %1038 = vadd.xlane.f32.xlu0 %v911
        %v1039 = vpop.xlane.xlu0 %1038
        %1040 = vadd.xlane.f32.xlu0 %v913
        %v1041 = vpop.xlane.xlu0 %1040
        %1042 = vadd.xlane.f32.xlu0 %v915
        %v1043 = vpop.xlane.xlu0 %1042
        %1044 = vadd.xlane.f32.xlu0 %v917
        %v1045 = vpop.xlane.xlu0 %1044
        %1046 = vadd.xlane.f32.xlu0 %v919
        %v1047 = vpop.xlane.xlu0 %1046
        %1048 = vadd.xlane.f32.xlu0 %v921
        %v1049 = vpop.xlane.xlu0 %1048
        %1050 = vadd.xlane.f32.xlu0 %v923
        %v1051 = vpop.xlane.xlu0 %1050
        %1052 = vadd.xlane.f32.xlu0 %v925
        %v1053 = vpop.xlane.xlu0 %1052
        %1054 = vadd.xlane.f32.xlu0 %v927
        %v1055 = vpop.xlane.xlu0 %1054
        %1056 = vadd.xlane.f32.xlu0 %v929
        %v1057 = vpop.xlane.xlu0 %1056
        %1058 = vadd.xlane.f32.xlu0 %v931
        %v1059 = vpop.xlane.xlu0 %1058
        %1060 = vadd.xlane.f32.xlu0 %v933
        %v1061 = vpop.xlane.xlu0 %1060
        %1062 = vadd.xlane.f32.xlu0 %v935
        %v1063 = vpop.xlane.xlu0 %1062
        %1064 = vadd.xlane.f32.xlu0 %v937
        %v1065 = vpop.xlane.xlu0 %1064
        %1066 = vadd.xlane.f32.xlu0 %v939
        %v1067 = vpop.xlane.xlu0 %1066
        %1068 = vadd.xlane.f32.xlu0 %v941
        %v1069 = vpop.xlane.xlu0 %1068
        %1070 = vadd.xlane.f32.xlu0 %v943
        %v1071 = vpop.xlane.xlu0 %1070
        %1072 = vadd.xlane.f32.xlu0 %v945
        %v1073 = vpop.xlane.xlu0 %1072
        %1074 = vadd.xlane.f32.xlu0 %v947
        %v1075 = vpop.xlane.xlu0 %1074
        %1076 = vadd.xlane.f32.xlu0 %v949
        %v1077 = vpop.xlane.xlu0 %1076
        %1078 = vadd.xlane.f32.xlu0 %v951
        %v1079 = vpop.xlane.xlu0 %1078
        %1080 = vadd.xlane.f32.xlu0 %v953
        %v1081 = vpop.xlane.xlu0 %1080
        %1082 = vadd.xlane.f32.xlu0 %v955
        %v1083 = vpop.xlane.xlu0 %1082
        %1084 = vadd.xlane.f32.xlu0 %v957
        %v1085 = vpop.xlane.xlu0 %1084
        %1086 = vadd.xlane.f32.xlu0 %v959
        %v1087 = vpop.xlane.xlu0 %1086
        %1088 = vadd.xlane.f32.xlu0 %v961
        %v1089 = vpop.xlane.xlu0 %1088
        %1090 = vadd.xlane.f32.xlu0 %v963
        %v1091 = vpop.xlane.xlu0 %1090
        %1092 = vadd.xlane.f32.xlu0 %v965
        %v1093 = vpop.xlane.xlu0 %1092
        %1094 = vadd.xlane.f32.xlu0 %v967
        %v1095 = vpop.xlane.xlu0 %1094
        %1096 = vadd.xlane.f32.xlu0 %v969
        %v1097 = vpop.xlane.xlu0 %1096
        %1098 = vadd.xlane.f32.xlu0 %v971
        %v1099 = vpop.xlane.xlu0 %1098
        %1100 = vadd.xlane.f32.xlu0 %v973
        %v1101 = vpop.xlane.xlu0 %1100
        %1102 = vadd.xlane.f32.xlu0 %v975
        %v1103 = vpop.xlane.xlu0 %1102
        %1104 = vadd.xlane.f32.xlu0 %v977
        %v1105 = vpop.xlane.xlu0 %1104
        %1106 = vadd.xlane.f32.xlu0 %v979
        %v1107 = vpop.xlane.xlu0 %1106
        %1108 = vadd.xlane.f32.xlu0 %v981
        %v1109 = vpop.xlane.xlu0 %1108
        %1110 = vadd.xlane.f32.xlu0 %v983
        %v1111 = vpop.xlane.xlu0 %1110
        %v1112 = vrcp.pop %v985
        %v1113 = vmul.f32 %v985, %v1112
        %v1114 = vsub.f32 1.0, %v1113
        %v1115 = vmul.f32 %v1112, %v1114
        %v1116 = vadd.f32 %v1112, %v1115
        %vm1117 = vweird.f32 %v985
        %vm1118 = vweird.f32 %v1112
        %vm1119 = vmor %vm1117, %vm1118
        %v1120 = vsel %vm1119, %v1112, %v1116
        %v1121 = vand.u32 2147483647, %v985
        %vm1122 = vcmp.eq.f32.partialorder %v1121, 8.507059e+37
        %v1123 = vand.u32 %v985, 2147483648
        %v1124 = vor.u32 1.1754944e-38, %v1123
        %v1125 = vsel %vm1122, %v1124, %v1120
        %v1126 = vmul.f32 1.0, %v1125
        %v1127 = vrcp.pop %v987
        %v1128 = vmul.f32 %v987, %v1127
        %v1129 = vsub.f32 1.0, %v1128
        %v1130 = vmul.f32 %v1127, %v1129
        %v1131 = vadd.f32 %v1127, %v1130
        %vm1132 = vweird.f32 %v987
        %vm1133 = vweird.f32 %v1127
        %vm1134 = vmor %vm1132, %vm1133
        %v1135 = vsel %vm1134, %v1127, %v1131
        %v1136 = vand.u32 2147483647, %v987
        %vm1137 = vcmp.eq.f32.partialorder %v1136, 8.507059e+37
        %v1138 = vand.u32 %v987, 2147483648
        %v1139 = vor.u32 1.1754944e-38, %v1138
        %v1140 = vsel %vm1137, %v1139, %v1135
        %v1141 = vmul.f32 1.0, %v1140
        %v1142 = vrcp.pop %v989
        %v1143 = vmul.f32 %v989, %v1142
        %v1144 = vsub.f32 1.0, %v1143
        %v1145 = vmul.f32 %v1142, %v1144
        %v1146 = vadd.f32 %v1142, %v1145
        %vm1147 = vweird.f32 %v989
        %vm1148 = vweird.f32 %v1142
        %vm1149 = vmor %vm1147, %vm1148
        %v1150 = vsel %vm1149, %v1142, %v1146
        %v1151 = vand.u32 2147483647, %v989
        %vm1152 = vcmp.eq.f32.partialorder %v1151, 8.507059e+37
        %v1153 = vand.u32 %v989, 2147483648
        %v1154 = vor.u32 1.1754944e-38, %v1153
        %v1155 = vsel %vm1152, %v1154, %v1150
        %v1156 = vmul.f32 1.0, %v1155
        %v1157 = vrcp.pop %v991
        %v1158 = vmul.f32 %v991, %v1157
        %v1159 = vsub.f32 1.0, %v1158
        %v1160 = vmul.f32 %v1157, %v1159
        %v1161 = vadd.f32 %v1157, %v1160
        %vm1162 = vweird.f32 %v991
        %vm1163 = vweird.f32 %v1157
        %vm1164 = vmor %vm1162, %vm1163
        %v1165 = vsel %vm1164, %v1157, %v1161
        %v1166 = vand.u32 2147483647, %v991
        %vm1167 = vcmp.eq.f32.partialorder %v1166, 8.507059e+37
        %v1168 = vand.u32 %v991, 2147483648
        %v1169 = vor.u32 1.1754944e-38, %v1168
        %v1170 = vsel %vm1167, %v1169, %v1165
        %v1171 = vmul.f32 1.0, %v1170
        %v1172 = vrcp.pop %v993
        %v1173 = vmul.f32 %v993, %v1172
        %v1174 = vsub.f32 1.0, %v1173
        %v1175 = vmul.f32 %v1172, %v1174
        %v1176 = vadd.f32 %v1172, %v1175
        %vm1177 = vweird.f32 %v993
        %vm1178 = vweird.f32 %v1172
        %vm1179 = vmor %vm1177, %vm1178
        %v1180 = vsel %vm1179, %v1172, %v1176
        %v1181 = vand.u32 2147483647, %v993
        %vm1182 = vcmp.eq.f32.partialorder %v1181, 8.507059e+37
        %v1183 = vand.u32 %v993, 2147483648
        %v1184 = vor.u32 1.1754944e-38, %v1183
        %v1185 = vsel %vm1182, %v1184, %v1180
        %v1186 = vmul.f32 1.0, %v1185
        %v1187 = vrcp.pop %v995
        %v1188 = vmul.f32 %v995, %v1187
        %v1189 = vsub.f32 1.0, %v1188
        %v1190 = vmul.f32 %v1187, %v1189
        %v1191 = vadd.f32 %v1187, %v1190
        %vm1192 = vweird.f32 %v995
        %vm1193 = vweird.f32 %v1187
        %vm1194 = vmor %vm1192, %vm1193
        %v1195 = vsel %vm1194, %v1187, %v1191
        %v1196 = vand.u32 2147483647, %v995
        %vm1197 = vcmp.eq.f32.partialorder %v1196, 8.507059e+37
        %v1198 = vand.u32 %v995, 2147483648
        %v1199 = vor.u32 1.1754944e-38, %v1198
        %v1200 = vsel %vm1197, %v1199, %v1195
        %v1201 = vmul.f32 1.0, %v1200
        %v1202 = vrcp.pop %v997
        %v1203 = vmul.f32 %v997, %v1202
        %v1204 = vsub.f32 1.0, %v1203
        %v1205 = vmul.f32 %v1202, %v1204
        %v1206 = vadd.f32 %v1202, %v1205
        %vm1207 = vweird.f32 %v997
        %vm1208 = vweird.f32 %v1202
        %vm1209 = vmor %vm1207, %vm1208
        %v1210 = vsel %vm1209, %v1202, %v1206
        %v1211 = vand.u32 2147483647, %v997
        %vm1212 = vcmp.eq.f32.partialorder %v1211, 8.507059e+37
        %v1213 = vand.u32 %v997, 2147483648
        %v1214 = vor.u32 1.1754944e-38, %v1213
        %v1215 = vsel %vm1212, %v1214, %v1210
        %v1216 = vmul.f32 1.0, %v1215
        %v1217 = vrcp.pop %v999
        %v1218 = vmul.f32 %v999, %v1217
        %v1219 = vsub.f32 1.0, %v1218
        %v1220 = vmul.f32 %v1217, %v1219
        %v1221 = vadd.f32 %v1217, %v1220
        %vm1222 = vweird.f32 %v999
        %vm1223 = vweird.f32 %v1217
        %vm1224 = vmor %vm1222, %vm1223
        %v1225 = vsel %vm1224, %v1217, %v1221
        %v1226 = vand.u32 2147483647, %v999
        %vm1227 = vcmp.eq.f32.partialorder %v1226, 8.507059e+37
        %v1228 = vand.u32 %v999, 2147483648
        %v1229 = vor.u32 1.1754944e-38, %v1228
        %v1230 = vsel %vm1227, %v1229, %v1225
        %v1231 = vmul.f32 1.0, %v1230
        %v1232 = vrcp.pop %v1001
        %v1233 = vmul.f32 %v1001, %v1232
        %v1234 = vsub.f32 1.0, %v1233
        %v1235 = vmul.f32 %v1232, %v1234
        %v1236 = vadd.f32 %v1232, %v1235
        %vm1237 = vweird.f32 %v1001
        %vm1238 = vweird.f32 %v1232
        %vm1239 = vmor %vm1237, %vm1238
        %v1240 = vsel %vm1239, %v1232, %v1236
        %v1241 = vand.u32 2147483647, %v1001
        %vm1242 = vcmp.eq.f32.partialorder %v1241, 8.507059e+37
        %v1243 = vand.u32 %v1001, 2147483648
        %v1244 = vor.u32 1.1754944e-38, %v1243
        %v1245 = vsel %vm1242, %v1244, %v1240
        %v1246 = vmul.f32 1.0, %v1245
        %v1247 = vrcp.pop %v1003
        %v1248 = vmul.f32 %v1003, %v1247
        %v1249 = vsub.f32 1.0, %v1248
        %v1250 = vmul.f32 %v1247, %v1249
        %v1251 = vadd.f32 %v1247, %v1250
        %vm1252 = vweird.f32 %v1003
        %vm1253 = vweird.f32 %v1247
        %vm1254 = vmor %vm1252, %vm1253
        %v1255 = vsel %vm1254, %v1247, %v1251
        %v1256 = vand.u32 2147483647, %v1003
        %vm1257 = vcmp.eq.f32.partialorder %v1256, 8.507059e+37
        %v1258 = vand.u32 %v1003, 2147483648
        %v1259 = vor.u32 1.1754944e-38, %v1258
        %v1260 = vsel %vm1257, %v1259, %v1255
        %v1261 = vmul.f32 1.0, %v1260
        %v1262 = vrcp.pop %v1005
        %v1263 = vmul.f32 %v1005, %v1262
        %v1264 = vsub.f32 1.0, %v1263
        %v1265 = vmul.f32 %v1262, %v1264
        %v1266 = vadd.f32 %v1262, %v1265
        %vm1267 = vweird.f32 %v1005
        %vm1268 = vweird.f32 %v1262
        %vm1269 = vmor %vm1267, %vm1268
        %v1270 = vsel %vm1269, %v1262, %v1266
        %v1271 = vand.u32 2147483647, %v1005
        %vm1272 = vcmp.eq.f32.partialorder %v1271, 8.507059e+37
        %v1273 = vand.u32 %v1005, 2147483648
        %v1274 = vor.u32 1.1754944e-38, %v1273
        %v1275 = vsel %vm1272, %v1274, %v1270
        %v1276 = vmul.f32 1.0, %v1275
        %v1277 = vrcp.pop %v1007
        %v1278 = vmul.f32 %v1007, %v1277
        %v1279 = vsub.f32 1.0, %v1278
        %v1280 = vmul.f32 %v1277, %v1279
        %v1281 = vadd.f32 %v1277, %v1280
        %vm1282 = vweird.f32 %v1007
        %vm1283 = vweird.f32 %v1277
        %vm1284 = vmor %vm1282, %vm1283
        %v1285 = vsel %vm1284, %v1277, %v1281
        %v1286 = vand.u32 2147483647, %v1007
        %vm1287 = vcmp.eq.f32.partialorder %v1286, 8.507059e+37
        %v1288 = vand.u32 %v1007, 2147483648
        %v1289 = vor.u32 1.1754944e-38, %v1288
        %v1290 = vsel %vm1287, %v1289, %v1285
        %v1291 = vmul.f32 1.0, %v1290
        %v1292 = vrcp.pop %v1009
        %v1293 = vmul.f32 %v1009, %v1292
        %v1294 = vsub.f32 1.0, %v1293
        %v1295 = vmul.f32 %v1292, %v1294
        %v1296 = vadd.f32 %v1292, %v1295
        %vm1297 = vweird.f32 %v1009
        %vm1298 = vweird.f32 %v1292
        %vm1299 = vmor %vm1297, %vm1298
        %v1300 = vsel %vm1299, %v1292, %v1296
        %v1301 = vand.u32 2147483647, %v1009
        %vm1302 = vcmp.eq.f32.partialorder %v1301, 8.507059e+37
        %v1303 = vand.u32 %v1009, 2147483648
        %v1304 = vor.u32 1.1754944e-38, %v1303
        %v1305 = vsel %vm1302, %v1304, %v1300
        %v1306 = vmul.f32 1.0, %v1305
        %v1307 = vrcp.pop %v1011
        %v1308 = vmul.f32 %v1011, %v1307
        %v1309 = vsub.f32 1.0, %v1308
        %v1310 = vmul.f32 %v1307, %v1309
        %v1311 = vadd.f32 %v1307, %v1310
        %vm1312 = vweird.f32 %v1011
        %vm1313 = vweird.f32 %v1307
        %vm1314 = vmor %vm1312, %vm1313
        %v1315 = vsel %vm1314, %v1307, %v1311
        %v1316 = vand.u32 2147483647, %v1011
        %vm1317 = vcmp.eq.f32.partialorder %v1316, 8.507059e+37
        %v1318 = vand.u32 %v1011, 2147483648
        %v1319 = vor.u32 1.1754944e-38, %v1318
        %v1320 = vsel %vm1317, %v1319, %v1315
        %v1321 = vmul.f32 1.0, %v1320
        %v1322 = vrcp.pop %v1013
        %v1323 = vmul.f32 %v1013, %v1322
        %v1324 = vsub.f32 1.0, %v1323
        %v1325 = vmul.f32 %v1322, %v1324
        %v1326 = vadd.f32 %v1322, %v1325
        %vm1327 = vweird.f32 %v1013
        %vm1328 = vweird.f32 %v1322
        %vm1329 = vmor %vm1327, %vm1328
        %v1330 = vsel %vm1329, %v1322, %v1326
        %v1331 = vand.u32 2147483647, %v1013
        %vm1332 = vcmp.eq.f32.partialorder %v1331, 8.507059e+37
        %v1333 = vand.u32 %v1013, 2147483648
        %v1334 = vor.u32 1.1754944e-38, %v1333
        %v1335 = vsel %vm1332, %v1334, %v1330
        %v1336 = vmul.f32 1.0, %v1335
        %v1337 = vrcp.pop %v1015
        %v1338 = vmul.f32 %v1015, %v1337
        %v1339 = vsub.f32 1.0, %v1338
        %v1340 = vmul.f32 %v1337, %v1339
        %v1341 = vadd.f32 %v1337, %v1340
        %vm1342 = vweird.f32 %v1015
        %vm1343 = vweird.f32 %v1337
        %vm1344 = vmor %vm1342, %vm1343
        %v1345 = vsel %vm1344, %v1337, %v1341
        %v1346 = vand.u32 2147483647, %v1015
        %vm1347 = vcmp.eq.f32.partialorder %v1346, 8.507059e+37
        %v1348 = vand.u32 %v1015, 2147483648
        %v1349 = vor.u32 1.1754944e-38, %v1348
        %v1350 = vsel %vm1347, %v1349, %v1345
        %v1351 = vmul.f32 1.0, %v1350
        %v1352 = vrcp.pop %v1017
        %v1353 = vmul.f32 %v1017, %v1352
        %v1354 = vsub.f32 1.0, %v1353
        %v1355 = vmul.f32 %v1352, %v1354
        %v1356 = vadd.f32 %v1352, %v1355
        %vm1357 = vweird.f32 %v1017
        %vm1358 = vweird.f32 %v1352
        %vm1359 = vmor %vm1357, %vm1358
        %v1360 = vsel %vm1359, %v1352, %v1356
        %v1361 = vand.u32 2147483647, %v1017
        %vm1362 = vcmp.eq.f32.partialorder %v1361, 8.507059e+37
        %v1363 = vand.u32 %v1017, 2147483648
        %v1364 = vor.u32 1.1754944e-38, %v1363
        %v1365 = vsel %vm1362, %v1364, %v1360
        %v1366 = vmul.f32 1.0, %v1365
        %v1367 = vrcp.pop %v1019
        %v1368 = vmul.f32 %v1019, %v1367
        %v1369 = vsub.f32 1.0, %v1368
        %v1370 = vmul.f32 %v1367, %v1369
        %v1371 = vadd.f32 %v1367, %v1370
        %vm1372 = vweird.f32 %v1019
        %vm1373 = vweird.f32 %v1367
        %vm1374 = vmor %vm1372, %vm1373
        %v1375 = vsel %vm1374, %v1367, %v1371
        %v1376 = vand.u32 2147483647, %v1019
        %vm1377 = vcmp.eq.f32.partialorder %v1376, 8.507059e+37
        %v1378 = vand.u32 %v1019, 2147483648
        %v1379 = vor.u32 1.1754944e-38, %v1378
        %v1380 = vsel %vm1377, %v1379, %v1375
        %v1381 = vmul.f32 1.0, %v1380
        %v1382 = vrcp.pop %v1021
        %v1383 = vmul.f32 %v1021, %v1382
        %v1384 = vsub.f32 1.0, %v1383
        %v1385 = vmul.f32 %v1382, %v1384
        %v1386 = vadd.f32 %v1382, %v1385
        %vm1387 = vweird.f32 %v1021
        %vm1388 = vweird.f32 %v1382
        %vm1389 = vmor %vm1387, %vm1388
        %v1390 = vsel %vm1389, %v1382, %v1386
        %v1391 = vand.u32 2147483647, %v1021
        %vm1392 = vcmp.eq.f32.partialorder %v1391, 8.507059e+37
        %v1393 = vand.u32 %v1021, 2147483648
        %v1394 = vor.u32 1.1754944e-38, %v1393
        %v1395 = vsel %vm1392, %v1394, %v1390
        %v1396 = vmul.f32 1.0, %v1395
        %v1397 = vrcp.pop %v1023
        %v1398 = vmul.f32 %v1023, %v1397
        %v1399 = vsub.f32 1.0, %v1398
        %v1400 = vmul.f32 %v1397, %v1399
        %v1401 = vadd.f32 %v1397, %v1400
        %vm1402 = vweird.f32 %v1023
        %vm1403 = vweird.f32 %v1397
        %vm1404 = vmor %vm1402, %vm1403
        %v1405 = vsel %vm1404, %v1397, %v1401
        %v1406 = vand.u32 2147483647, %v1023
        %vm1407 = vcmp.eq.f32.partialorder %v1406, 8.507059e+37
        %v1408 = vand.u32 %v1023, 2147483648
        %v1409 = vor.u32 1.1754944e-38, %v1408
        %v1410 = vsel %vm1407, %v1409, %v1405
        %v1411 = vmul.f32 1.0, %v1410
        %v1412 = vrcp.pop %v1025
        %v1413 = vmul.f32 %v1025, %v1412
        %v1414 = vsub.f32 1.0, %v1413
        %v1415 = vmul.f32 %v1412, %v1414
        %v1416 = vadd.f32 %v1412, %v1415
        %vm1417 = vweird.f32 %v1025
        %vm1418 = vweird.f32 %v1412
        %vm1419 = vmor %vm1417, %vm1418
        %v1420 = vsel %vm1419, %v1412, %v1416
        %v1421 = vand.u32 2147483647, %v1025
        %vm1422 = vcmp.eq.f32.partialorder %v1421, 8.507059e+37
        %v1423 = vand.u32 %v1025, 2147483648
        %v1424 = vor.u32 1.1754944e-38, %v1423
        %v1425 = vsel %vm1422, %v1424, %v1420
        %v1426 = vmul.f32 1.0, %v1425
        %v1427 = vrcp.pop %v1027
        %v1428 = vmul.f32 %v1027, %v1427
        %v1429 = vsub.f32 1.0, %v1428
        %v1430 = vmul.f32 %v1427, %v1429
        %v1431 = vadd.f32 %v1427, %v1430
        %vm1432 = vweird.f32 %v1027
        %vm1433 = vweird.f32 %v1427
        %vm1434 = vmor %vm1432, %vm1433
        %v1435 = vsel %vm1434, %v1427, %v1431
        %v1436 = vand.u32 2147483647, %v1027
        %vm1437 = vcmp.eq.f32.partialorder %v1436, 8.507059e+37
        %v1438 = vand.u32 %v1027, 2147483648
        %v1439 = vor.u32 1.1754944e-38, %v1438
        %v1440 = vsel %vm1437, %v1439, %v1435
        %v1441 = vmul.f32 1.0, %v1440
        %v1442 = vrcp.pop %v1029
        %v1443 = vmul.f32 %v1029, %v1442
        %v1444 = vsub.f32 1.0, %v1443
        %v1445 = vmul.f32 %v1442, %v1444
        %v1446 = vadd.f32 %v1442, %v1445
        %vm1447 = vweird.f32 %v1029
        %vm1448 = vweird.f32 %v1442
        %vm1449 = vmor %vm1447, %vm1448
        %v1450 = vsel %vm1449, %v1442, %v1446
        %v1451 = vand.u32 2147483647, %v1029
        %vm1452 = vcmp.eq.f32.partialorder %v1451, 8.507059e+37
        %v1453 = vand.u32 %v1029, 2147483648
        %v1454 = vor.u32 1.1754944e-38, %v1453
        %v1455 = vsel %vm1452, %v1454, %v1450
        %v1456 = vmul.f32 1.0, %v1455
        %v1457 = vrcp.pop %v1031
        %v1458 = vmul.f32 %v1031, %v1457
        %v1459 = vsub.f32 1.0, %v1458
        %v1460 = vmul.f32 %v1457, %v1459
        %v1461 = vadd.f32 %v1457, %v1460
        %vm1462 = vweird.f32 %v1031
        %vm1463 = vweird.f32 %v1457
        %vm1464 = vmor %vm1462, %vm1463
        %v1465 = vsel %vm1464, %v1457, %v1461
        %v1466 = vand.u32 2147483647, %v1031
        %vm1467 = vcmp.eq.f32.partialorder %v1466, 8.507059e+37
        %v1468 = vand.u32 %v1031, 2147483648
        %v1469 = vor.u32 1.1754944e-38, %v1468
        %v1470 = vsel %vm1467, %v1469, %v1465
        %v1471 = vmul.f32 1.0, %v1470
        %v1472 = vrcp.pop %v1033
        %v1473 = vmul.f32 %v1033, %v1472
        %v1474 = vsub.f32 1.0, %v1473
        %v1475 = vmul.f32 %v1472, %v1474
        %v1476 = vadd.f32 %v1472, %v1475
        %vm1477 = vweird.f32 %v1033
        %vm1478 = vweird.f32 %v1472
        %vm1479 = vmor %vm1477, %vm1478
        %v1480 = vsel %vm1479, %v1472, %v1476
        %v1481 = vand.u32 2147483647, %v1033
        %vm1482 = vcmp.eq.f32.partialorder %v1481, 8.507059e+37
        %v1483 = vand.u32 %v1033, 2147483648
        %v1484 = vor.u32 1.1754944e-38, %v1483
        %v1485 = vsel %vm1482, %v1484, %v1480
        %v1486 = vmul.f32 1.0, %v1485
        %v1487 = vrcp.pop %v1035
        %v1488 = vmul.f32 %v1035, %v1487
        %v1489 = vsub.f32 1.0, %v1488
        %v1490 = vmul.f32 %v1487, %v1489
        %v1491 = vadd.f32 %v1487, %v1490
        %vm1492 = vweird.f32 %v1035
        %vm1493 = vweird.f32 %v1487
        %vm1494 = vmor %vm1492, %vm1493
        %v1495 = vsel %vm1494, %v1487, %v1491
        %v1496 = vand.u32 2147483647, %v1035
        %vm1497 = vcmp.eq.f32.partialorder %v1496, 8.507059e+37
        %v1498 = vand.u32 %v1035, 2147483648
        %v1499 = vor.u32 1.1754944e-38, %v1498
        %v1500 = vsel %vm1497, %v1499, %v1495
        %v1501 = vmul.f32 1.0, %v1500
        %v1502 = vrcp.pop %v1037
        %v1503 = vmul.f32 %v1037, %v1502
        %v1504 = vsub.f32 1.0, %v1503
        %v1505 = vmul.f32 %v1502, %v1504
        %v1506 = vadd.f32 %v1502, %v1505
        %vm1507 = vweird.f32 %v1037
        %vm1508 = vweird.f32 %v1502
        %vm1509 = vmor %vm1507, %vm1508
        %v1510 = vsel %vm1509, %v1502, %v1506
        %v1511 = vand.u32 2147483647, %v1037
        %vm1512 = vcmp.eq.f32.partialorder %v1511, 8.507059e+37
        %v1513 = vand.u32 %v1037, 2147483648
        %v1514 = vor.u32 1.1754944e-38, %v1513
        %v1515 = vsel %vm1512, %v1514, %v1510
        %v1516 = vmul.f32 1.0, %v1515
        %v1517 = vrcp.pop %v1039
        %v1518 = vmul.f32 %v1039, %v1517
        %v1519 = vsub.f32 1.0, %v1518
        %v1520 = vmul.f32 %v1517, %v1519
        %v1521 = vadd.f32 %v1517, %v1520
        %vm1522 = vweird.f32 %v1039
        %vm1523 = vweird.f32 %v1517
        %vm1524 = vmor %vm1522, %vm1523
        %v1525 = vsel %vm1524, %v1517, %v1521
        %v1526 = vand.u32 2147483647, %v1039
        %vm1527 = vcmp.eq.f32.partialorder %v1526, 8.507059e+37
        %v1528 = vand.u32 %v1039, 2147483648
        %v1529 = vor.u32 1.1754944e-38, %v1528
        %v1530 = vsel %vm1527, %v1529, %v1525
        %v1531 = vmul.f32 1.0, %v1530
        %v1532 = vrcp.pop %v1041
        %v1533 = vmul.f32 %v1041, %v1532
        %v1534 = vsub.f32 1.0, %v1533
        %v1535 = vmul.f32 %v1532, %v1534
        %v1536 = vadd.f32 %v1532, %v1535
        %vm1537 = vweird.f32 %v1041
        %vm1538 = vweird.f32 %v1532
        %vm1539 = vmor %vm1537, %vm1538
        %v1540 = vsel %vm1539, %v1532, %v1536
        %v1541 = vand.u32 2147483647, %v1041
        %vm1542 = vcmp.eq.f32.partialorder %v1541, 8.507059e+37
        %v1543 = vand.u32 %v1041, 2147483648
        %v1544 = vor.u32 1.1754944e-38, %v1543
        %v1545 = vsel %vm1542, %v1544, %v1540
        %v1546 = vmul.f32 1.0, %v1545
        %v1547 = vrcp.pop %v1043
        %v1548 = vmul.f32 %v1043, %v1547
        %v1549 = vsub.f32 1.0, %v1548
        %v1550 = vmul.f32 %v1547, %v1549
        %v1551 = vadd.f32 %v1547, %v1550
        %vm1552 = vweird.f32 %v1043
        %vm1553 = vweird.f32 %v1547
        %vm1554 = vmor %vm1552, %vm1553
        %v1555 = vsel %vm1554, %v1547, %v1551
        %v1556 = vand.u32 2147483647, %v1043
        %vm1557 = vcmp.eq.f32.partialorder %v1556, 8.507059e+37
        %v1558 = vand.u32 %v1043, 2147483648
        %v1559 = vor.u32 1.1754944e-38, %v1558
        %v1560 = vsel %vm1557, %v1559, %v1555
        %v1561 = vmul.f32 1.0, %v1560
        %v1562 = vrcp.pop %v1045
        %v1563 = vmul.f32 %v1045, %v1562
        %v1564 = vsub.f32 1.0, %v1563
        %v1565 = vmul.f32 %v1562, %v1564
        %v1566 = vadd.f32 %v1562, %v1565
        %vm1567 = vweird.f32 %v1045
        %vm1568 = vweird.f32 %v1562
        %vm1569 = vmor %vm1567, %vm1568
        %v1570 = vsel %vm1569, %v1562, %v1566
        %v1571 = vand.u32 2147483647, %v1045
        %vm1572 = vcmp.eq.f32.partialorder %v1571, 8.507059e+37
        %v1573 = vand.u32 %v1045, 2147483648
        %v1574 = vor.u32 1.1754944e-38, %v1573
        %v1575 = vsel %vm1572, %v1574, %v1570
        %v1576 = vmul.f32 1.0, %v1575
        %v1577 = vrcp.pop %v1047
        %v1578 = vmul.f32 %v1047, %v1577
        %v1579 = vsub.f32 1.0, %v1578
        %v1580 = vmul.f32 %v1577, %v1579
        %v1581 = vadd.f32 %v1577, %v1580
        %vm1582 = vweird.f32 %v1047
        %vm1583 = vweird.f32 %v1577
        %vm1584 = vmor %vm1582, %vm1583
        %v1585 = vsel %vm1584, %v1577, %v1581
        %v1586 = vand.u32 2147483647, %v1047
        %vm1587 = vcmp.eq.f32.partialorder %v1586, 8.507059e+37
        %v1588 = vand.u32 %v1047, 2147483648
        %v1589 = vor.u32 1.1754944e-38, %v1588
        %v1590 = vsel %vm1587, %v1589, %v1585
        %v1591 = vmul.f32 1.0, %v1590
        %v1592 = vrcp.pop %v1049
        %v1593 = vmul.f32 %v1049, %v1592
        %v1594 = vsub.f32 1.0, %v1593
        %v1595 = vmul.f32 %v1592, %v1594
        %v1596 = vadd.f32 %v1592, %v1595
        %vm1597 = vweird.f32 %v1049
        %vm1598 = vweird.f32 %v1592
        %vm1599 = vmor %vm1597, %vm1598
        %v1600 = vsel %vm1599, %v1592, %v1596
        %v1601 = vand.u32 2147483647, %v1049
        %vm1602 = vcmp.eq.f32.partialorder %v1601, 8.507059e+37
        %v1603 = vand.u32 %v1049, 2147483648
        %v1604 = vor.u32 1.1754944e-38, %v1603
        %v1605 = vsel %vm1602, %v1604, %v1600
        %v1606 = vmul.f32 1.0, %v1605
        %v1607 = vrcp.pop %v1051
        %v1608 = vmul.f32 %v1051, %v1607
        %v1609 = vsub.f32 1.0, %v1608
        %v1610 = vmul.f32 %v1607, %v1609
        %v1611 = vadd.f32 %v1607, %v1610
        %vm1612 = vweird.f32 %v1051
        %vm1613 = vweird.f32 %v1607
        %vm1614 = vmor %vm1612, %vm1613
        %v1615 = vsel %vm1614, %v1607, %v1611
        %v1616 = vand.u32 2147483647, %v1051
        %vm1617 = vcmp.eq.f32.partialorder %v1616, 8.507059e+37
        %v1618 = vand.u32 %v1051, 2147483648
        %v1619 = vor.u32 1.1754944e-38, %v1618
        %v1620 = vsel %vm1617, %v1619, %v1615
        %v1621 = vmul.f32 1.0, %v1620
        %v1622 = vrcp.pop %v1053
        %v1623 = vmul.f32 %v1053, %v1622
        %v1624 = vsub.f32 1.0, %v1623
        %v1625 = vmul.f32 %v1622, %v1624
        %v1626 = vadd.f32 %v1622, %v1625
        %vm1627 = vweird.f32 %v1053
        %vm1628 = vweird.f32 %v1622
        %vm1629 = vmor %vm1627, %vm1628
        %v1630 = vsel %vm1629, %v1622, %v1626
        %v1631 = vand.u32 2147483647, %v1053
        %vm1632 = vcmp.eq.f32.partialorder %v1631, 8.507059e+37
        %v1633 = vand.u32 %v1053, 2147483648
        %v1634 = vor.u32 1.1754944e-38, %v1633
        %v1635 = vsel %vm1632, %v1634, %v1630
        %v1636 = vmul.f32 1.0, %v1635
        %v1637 = vrcp.pop %v1055
        %v1638 = vmul.f32 %v1055, %v1637
        %v1639 = vsub.f32 1.0, %v1638
        %v1640 = vmul.f32 %v1637, %v1639
        %v1641 = vadd.f32 %v1637, %v1640
        %vm1642 = vweird.f32 %v1055
        %vm1643 = vweird.f32 %v1637
        %vm1644 = vmor %vm1642, %vm1643
        %v1645 = vsel %vm1644, %v1637, %v1641
        %v1646 = vand.u32 2147483647, %v1055
        %vm1647 = vcmp.eq.f32.partialorder %v1646, 8.507059e+37
        %v1648 = vand.u32 %v1055, 2147483648
        %v1649 = vor.u32 1.1754944e-38, %v1648
        %v1650 = vsel %vm1647, %v1649, %v1645
        %v1651 = vmul.f32 1.0, %v1650
        %v1652 = vrcp.pop %v1057
        %v1653 = vmul.f32 %v1057, %v1652
        %v1654 = vsub.f32 1.0, %v1653
        %v1655 = vmul.f32 %v1652, %v1654
        %v1656 = vadd.f32 %v1652, %v1655
        %vm1657 = vweird.f32 %v1057
        %vm1658 = vweird.f32 %v1652
        %vm1659 = vmor %vm1657, %vm1658
        %v1660 = vsel %vm1659, %v1652, %v1656
        %v1661 = vand.u32 2147483647, %v1057
        %vm1662 = vcmp.eq.f32.partialorder %v1661, 8.507059e+37
        %v1663 = vand.u32 %v1057, 2147483648
        %v1664 = vor.u32 1.1754944e-38, %v1663
        %v1665 = vsel %vm1662, %v1664, %v1660
        %v1666 = vmul.f32 1.0, %v1665
        %v1667 = vrcp.pop %v1059
        %v1668 = vmul.f32 %v1059, %v1667
        %v1669 = vsub.f32 1.0, %v1668
        %v1670 = vmul.f32 %v1667, %v1669
        %v1671 = vadd.f32 %v1667, %v1670
        %vm1672 = vweird.f32 %v1059
        %vm1673 = vweird.f32 %v1667
        %vm1674 = vmor %vm1672, %vm1673
        %v1675 = vsel %vm1674, %v1667, %v1671
        %v1676 = vand.u32 2147483647, %v1059
        %vm1677 = vcmp.eq.f32.partialorder %v1676, 8.507059e+37
        %v1678 = vand.u32 %v1059, 2147483648
        %v1679 = vor.u32 1.1754944e-38, %v1678
        %v1680 = vsel %vm1677, %v1679, %v1675
        %v1681 = vmul.f32 1.0, %v1680
        %v1682 = vrcp.pop %v1061
        %v1683 = vmul.f32 %v1061, %v1682
        %v1684 = vsub.f32 1.0, %v1683
        %v1685 = vmul.f32 %v1682, %v1684
        %v1686 = vadd.f32 %v1682, %v1685
        %vm1687 = vweird.f32 %v1061
        %vm1688 = vweird.f32 %v1682
        %vm1689 = vmor %vm1687, %vm1688
        %v1690 = vsel %vm1689, %v1682, %v1686
        %v1691 = vand.u32 2147483647, %v1061
        %vm1692 = vcmp.eq.f32.partialorder %v1691, 8.507059e+37
        %v1693 = vand.u32 %v1061, 2147483648
        %v1694 = vor.u32 1.1754944e-38, %v1693
        %v1695 = vsel %vm1692, %v1694, %v1690
        %v1696 = vmul.f32 1.0, %v1695
        %v1697 = vrcp.pop %v1063
        %v1698 = vmul.f32 %v1063, %v1697
        %v1699 = vsub.f32 1.0, %v1698
        %v1700 = vmul.f32 %v1697, %v1699
        %v1701 = vadd.f32 %v1697, %v1700
        %vm1702 = vweird.f32 %v1063
        %vm1703 = vweird.f32 %v1697
        %vm1704 = vmor %vm1702, %vm1703
        %v1705 = vsel %vm1704, %v1697, %v1701
        %v1706 = vand.u32 2147483647, %v1063
        %vm1707 = vcmp.eq.f32.partialorder %v1706, 8.507059e+37
        %v1708 = vand.u32 %v1063, 2147483648
        %v1709 = vor.u32 1.1754944e-38, %v1708
        %v1710 = vsel %vm1707, %v1709, %v1705
        %v1711 = vmul.f32 1.0, %v1710
        %v1712 = vrcp.pop %v1065
        %v1713 = vmul.f32 %v1065, %v1712
        %v1714 = vsub.f32 1.0, %v1713
        %v1715 = vmul.f32 %v1712, %v1714
        %v1716 = vadd.f32 %v1712, %v1715
        %vm1717 = vweird.f32 %v1065
        %vm1718 = vweird.f32 %v1712
        %vm1719 = vmor %vm1717, %vm1718
        %v1720 = vsel %vm1719, %v1712, %v1716
        %v1721 = vand.u32 2147483647, %v1065
        %vm1722 = vcmp.eq.f32.partialorder %v1721, 8.507059e+37
        %v1723 = vand.u32 %v1065, 2147483648
        %v1724 = vor.u32 1.1754944e-38, %v1723
        %v1725 = vsel %vm1722, %v1724, %v1720
        %v1726 = vmul.f32 1.0, %v1725
        %v1727 = vrcp.pop %v1067
        %v1728 = vmul.f32 %v1067, %v1727
        %v1729 = vsub.f32 1.0, %v1728
        %v1730 = vmul.f32 %v1727, %v1729
        %v1731 = vadd.f32 %v1727, %v1730
        %vm1732 = vweird.f32 %v1067
        %vm1733 = vweird.f32 %v1727
        %vm1734 = vmor %vm1732, %vm1733
        %v1735 = vsel %vm1734, %v1727, %v1731
        %v1736 = vand.u32 2147483647, %v1067
        %vm1737 = vcmp.eq.f32.partialorder %v1736, 8.507059e+37
        %v1738 = vand.u32 %v1067, 2147483648
        %v1739 = vor.u32 1.1754944e-38, %v1738
        %v1740 = vsel %vm1737, %v1739, %v1735
        %v1741 = vmul.f32 1.0, %v1740
        %v1742 = vrcp.pop %v1069
        %v1743 = vmul.f32 %v1069, %v1742
        %v1744 = vsub.f32 1.0, %v1743
        %v1745 = vmul.f32 %v1742, %v1744
        %v1746 = vadd.f32 %v1742, %v1745
        %vm1747 = vweird.f32 %v1069
        %vm1748 = vweird.f32 %v1742
        %vm1749 = vmor %vm1747, %vm1748
        %v1750 = vsel %vm1749, %v1742, %v1746
        %v1751 = vand.u32 2147483647, %v1069
        %vm1752 = vcmp.eq.f32.partialorder %v1751, 8.507059e+37
        %v1753 = vand.u32 %v1069, 2147483648
        %v1754 = vor.u32 1.1754944e-38, %v1753
        %v1755 = vsel %vm1752, %v1754, %v1750
        %v1756 = vmul.f32 1.0, %v1755
        %v1757 = vrcp.pop %v1071
        %v1758 = vmul.f32 %v1071, %v1757
        %v1759 = vsub.f32 1.0, %v1758
        %v1760 = vmul.f32 %v1757, %v1759
        %v1761 = vadd.f32 %v1757, %v1760
        %vm1762 = vweird.f32 %v1071
        %vm1763 = vweird.f32 %v1757
        %vm1764 = vmor %vm1762, %vm1763
        %v1765 = vsel %vm1764, %v1757, %v1761
        %v1766 = vand.u32 2147483647, %v1071
        %vm1767 = vcmp.eq.f32.partialorder %v1766, 8.507059e+37
        %v1768 = vand.u32 %v1071, 2147483648
        %v1769 = vor.u32 1.1754944e-38, %v1768
        %v1770 = vsel %vm1767, %v1769, %v1765
        %v1771 = vmul.f32 1.0, %v1770
        %v1772 = vrcp.pop %v1073
        %v1773 = vmul.f32 %v1073, %v1772
        %v1774 = vsub.f32 1.0, %v1773
        %v1775 = vmul.f32 %v1772, %v1774
        %v1776 = vadd.f32 %v1772, %v1775
        %vm1777 = vweird.f32 %v1073
        %vm1778 = vweird.f32 %v1772
        %vm1779 = vmor %vm1777, %vm1778
        %v1780 = vsel %vm1779, %v1772, %v1776
        %v1781 = vand.u32 2147483647, %v1073
        %vm1782 = vcmp.eq.f32.partialorder %v1781, 8.507059e+37
        %v1783 = vand.u32 %v1073, 2147483648
        %v1784 = vor.u32 1.1754944e-38, %v1783
        %v1785 = vsel %vm1782, %v1784, %v1780
        %v1786 = vmul.f32 1.0, %v1785
        %v1787 = vrcp.pop %v1075
        %v1788 = vmul.f32 %v1075, %v1787
        %v1789 = vsub.f32 1.0, %v1788
        %v1790 = vmul.f32 %v1787, %v1789
        %v1791 = vadd.f32 %v1787, %v1790
        %vm1792 = vweird.f32 %v1075
        %vm1793 = vweird.f32 %v1787
        %vm1794 = vmor %vm1792, %vm1793
        %v1795 = vsel %vm1794, %v1787, %v1791
        %v1796 = vand.u32 2147483647, %v1075
        %vm1797 = vcmp.eq.f32.partialorder %v1796, 8.507059e+37
        %v1798 = vand.u32 %v1075, 2147483648
        %v1799 = vor.u32 1.1754944e-38, %v1798
        %v1800 = vsel %vm1797, %v1799, %v1795
        %v1801 = vmul.f32 1.0, %v1800
        %v1802 = vrcp.pop %v1077
        %v1803 = vmul.f32 %v1077, %v1802
        %v1804 = vsub.f32 1.0, %v1803
        %v1805 = vmul.f32 %v1802, %v1804
        %v1806 = vadd.f32 %v1802, %v1805
        %vm1807 = vweird.f32 %v1077
        %vm1808 = vweird.f32 %v1802
        %vm1809 = vmor %vm1807, %vm1808
        %v1810 = vsel %vm1809, %v1802, %v1806
        %v1811 = vand.u32 2147483647, %v1077
        %vm1812 = vcmp.eq.f32.partialorder %v1811, 8.507059e+37
        %v1813 = vand.u32 %v1077, 2147483648
        %v1814 = vor.u32 1.1754944e-38, %v1813
        %v1815 = vsel %vm1812, %v1814, %v1810
        %v1816 = vmul.f32 1.0, %v1815
        %v1817 = vrcp.pop %v1079
        %v1818 = vmul.f32 %v1079, %v1817
        %v1819 = vsub.f32 1.0, %v1818
        %v1820 = vmul.f32 %v1817, %v1819
        %v1821 = vadd.f32 %v1817, %v1820
        %vm1822 = vweird.f32 %v1079
        %vm1823 = vweird.f32 %v1817
        %vm1824 = vmor %vm1822, %vm1823
        %v1825 = vsel %vm1824, %v1817, %v1821
        %v1826 = vand.u32 2147483647, %v1079
        %vm1827 = vcmp.eq.f32.partialorder %v1826, 8.507059e+37
        %v1828 = vand.u32 %v1079, 2147483648
        %v1829 = vor.u32 1.1754944e-38, %v1828
        %v1830 = vsel %vm1827, %v1829, %v1825
        %v1831 = vmul.f32 1.0, %v1830
        %v1832 = vrcp.pop %v1081
        %v1833 = vmul.f32 %v1081, %v1832
        %v1834 = vsub.f32 1.0, %v1833
        %v1835 = vmul.f32 %v1832, %v1834
        %v1836 = vadd.f32 %v1832, %v1835
        %vm1837 = vweird.f32 %v1081
        %vm1838 = vweird.f32 %v1832
        %vm1839 = vmor %vm1837, %vm1838
        %v1840 = vsel %vm1839, %v1832, %v1836
        %v1841 = vand.u32 2147483647, %v1081
        %vm1842 = vcmp.eq.f32.partialorder %v1841, 8.507059e+37
        %v1843 = vand.u32 %v1081, 2147483648
        %v1844 = vor.u32 1.1754944e-38, %v1843
        %v1845 = vsel %vm1842, %v1844, %v1840
        %v1846 = vmul.f32 1.0, %v1845
        %v1847 = vrcp.pop %v1083
        %v1848 = vmul.f32 %v1083, %v1847
        %v1849 = vsub.f32 1.0, %v1848
        %v1850 = vmul.f32 %v1847, %v1849
        %v1851 = vadd.f32 %v1847, %v1850
        %vm1852 = vweird.f32 %v1083
        %vm1853 = vweird.f32 %v1847
        %vm1854 = vmor %vm1852, %vm1853
        %v1855 = vsel %vm1854, %v1847, %v1851
        %v1856 = vand.u32 2147483647, %v1083
        %vm1857 = vcmp.eq.f32.partialorder %v1856, 8.507059e+37
        %v1858 = vand.u32 %v1083, 2147483648
        %v1859 = vor.u32 1.1754944e-38, %v1858
        %v1860 = vsel %vm1857, %v1859, %v1855
        %v1861 = vmul.f32 1.0, %v1860
        %v1862 = vrcp.pop %v1085
        %v1863 = vmul.f32 %v1085, %v1862
        %v1864 = vsub.f32 1.0, %v1863
        %v1865 = vmul.f32 %v1862, %v1864
        %v1866 = vadd.f32 %v1862, %v1865
        %vm1867 = vweird.f32 %v1085
        %vm1868 = vweird.f32 %v1862
        %vm1869 = vmor %vm1867, %vm1868
        %v1870 = vsel %vm1869, %v1862, %v1866
        %v1871 = vand.u32 2147483647, %v1085
        %vm1872 = vcmp.eq.f32.partialorder %v1871, 8.507059e+37
        %v1873 = vand.u32 %v1085, 2147483648
        %v1874 = vor.u32 1.1754944e-38, %v1873
        %v1875 = vsel %vm1872, %v1874, %v1870
        %v1876 = vmul.f32 1.0, %v1875
        %v1877 = vrcp.pop %v1087
        %v1878 = vmul.f32 %v1087, %v1877
        %v1879 = vsub.f32 1.0, %v1878
        %v1880 = vmul.f32 %v1877, %v1879
        %v1881 = vadd.f32 %v1877, %v1880
        %vm1882 = vweird.f32 %v1087
        %vm1883 = vweird.f32 %v1877
        %vm1884 = vmor %vm1882, %vm1883
        %v1885 = vsel %vm1884, %v1877, %v1881
        %v1886 = vand.u32 2147483647, %v1087
        %vm1887 = vcmp.eq.f32.partialorder %v1886, 8.507059e+37
        %v1888 = vand.u32 %v1087, 2147483648
        %v1889 = vor.u32 1.1754944e-38, %v1888
        %v1890 = vsel %vm1887, %v1889, %v1885
        %v1891 = vmul.f32 1.0, %v1890
        %v1892 = vrcp.pop %v1089
        %v1893 = vmul.f32 %v1089, %v1892
        %v1894 = vsub.f32 1.0, %v1893
        %v1895 = vmul.f32 %v1892, %v1894
        %v1896 = vadd.f32 %v1892, %v1895
        %vm1897 = vweird.f32 %v1089
        %vm1898 = vweird.f32 %v1892
        %vm1899 = vmor %vm1897, %vm1898
        %v1900 = vsel %vm1899, %v1892, %v1896
        %v1901 = vand.u32 2147483647, %v1089
        %vm1902 = vcmp.eq.f32.partialorder %v1901, 8.507059e+37
        %v1903 = vand.u32 %v1089, 2147483648
        %v1904 = vor.u32 1.1754944e-38, %v1903
        %v1905 = vsel %vm1902, %v1904, %v1900
        %v1906 = vmul.f32 1.0, %v1905
        %v1907 = vrcp.pop %v1091
        %v1908 = vmul.f32 %v1091, %v1907
        %v1909 = vsub.f32 1.0, %v1908
        %v1910 = vmul.f32 %v1907, %v1909
        %v1911 = vadd.f32 %v1907, %v1910
        %vm1912 = vweird.f32 %v1091
        %vm1913 = vweird.f32 %v1907
        %vm1914 = vmor %vm1912, %vm1913
        %v1915 = vsel %vm1914, %v1907, %v1911
        %v1916 = vand.u32 2147483647, %v1091
        %vm1917 = vcmp.eq.f32.partialorder %v1916, 8.507059e+37
        %v1918 = vand.u32 %v1091, 2147483648
        %v1919 = vor.u32 1.1754944e-38, %v1918
        %v1920 = vsel %vm1917, %v1919, %v1915
        %v1921 = vmul.f32 1.0, %v1920
        %v1922 = vrcp.pop %v1093
        %v1923 = vmul.f32 %v1093, %v1922
        %v1924 = vsub.f32 1.0, %v1923
        %v1925 = vmul.f32 %v1922, %v1924
        %v1926 = vadd.f32 %v1922, %v1925
        %vm1927 = vweird.f32 %v1093
        %vm1928 = vweird.f32 %v1922
        %vm1929 = vmor %vm1927, %vm1928
        %v1930 = vsel %vm1929, %v1922, %v1926
        %v1931 = vand.u32 2147483647, %v1093
        %vm1932 = vcmp.eq.f32.partialorder %v1931, 8.507059e+37
        %v1933 = vand.u32 %v1093, 2147483648
        %v1934 = vor.u32 1.1754944e-38, %v1933
        %v1935 = vsel %vm1932, %v1934, %v1930
        %v1936 = vmul.f32 1.0, %v1935
        %v1937 = vrcp.pop %v1095
        %v1938 = vmul.f32 %v1095, %v1937
        %v1939 = vsub.f32 1.0, %v1938
        %v1940 = vmul.f32 %v1937, %v1939
        %v1941 = vadd.f32 %v1937, %v1940
        %vm1942 = vweird.f32 %v1095
        %vm1943 = vweird.f32 %v1937
        %vm1944 = vmor %vm1942, %vm1943
        %v1945 = vsel %vm1944, %v1937, %v1941
        %v1946 = vand.u32 2147483647, %v1095
        %vm1947 = vcmp.eq.f32.partialorder %v1946, 8.507059e+37
        %v1948 = vand.u32 %v1095, 2147483648
        %v1949 = vor.u32 1.1754944e-38, %v1948
        %v1950 = vsel %vm1947, %v1949, %v1945
        %v1951 = vmul.f32 1.0, %v1950
        %v1952 = vrcp.pop %v1097
        %v1953 = vmul.f32 %v1097, %v1952
        %v1954 = vsub.f32 1.0, %v1953
        %v1955 = vmul.f32 %v1952, %v1954
        %v1956 = vadd.f32 %v1952, %v1955
        %vm1957 = vweird.f32 %v1097
        %vm1958 = vweird.f32 %v1952
        %vm1959 = vmor %vm1957, %vm1958
        %v1960 = vsel %vm1959, %v1952, %v1956
        %v1961 = vand.u32 2147483647, %v1097
        %vm1962 = vcmp.eq.f32.partialorder %v1961, 8.507059e+37
        %v1963 = vand.u32 %v1097, 2147483648
        %v1964 = vor.u32 1.1754944e-38, %v1963
        %v1965 = vsel %vm1962, %v1964, %v1960
        %v1966 = vmul.f32 1.0, %v1965
        %v1967 = vrcp.pop %v1099
        %v1968 = vmul.f32 %v1099, %v1967
        %v1969 = vsub.f32 1.0, %v1968
        %v1970 = vmul.f32 %v1967, %v1969
        %v1971 = vadd.f32 %v1967, %v1970
        %vm1972 = vweird.f32 %v1099
        %vm1973 = vweird.f32 %v1967
        %vm1974 = vmor %vm1972, %vm1973
        %v1975 = vsel %vm1974, %v1967, %v1971
        %v1976 = vand.u32 2147483647, %v1099
        %vm1977 = vcmp.eq.f32.partialorder %v1976, 8.507059e+37
        %v1978 = vand.u32 %v1099, 2147483648
        %v1979 = vor.u32 1.1754944e-38, %v1978
        %v1980 = vsel %vm1977, %v1979, %v1975
        %v1981 = vmul.f32 1.0, %v1980
        %v1982 = vrcp.pop %v1101
        %v1983 = vmul.f32 %v1101, %v1982
        %v1984 = vsub.f32 1.0, %v1983
        %v1985 = vmul.f32 %v1982, %v1984
        %v1986 = vadd.f32 %v1982, %v1985
        %vm1987 = vweird.f32 %v1101
        %vm1988 = vweird.f32 %v1982
        %vm1989 = vmor %vm1987, %vm1988
        %v1990 = vsel %vm1989, %v1982, %v1986
        %v1991 = vand.u32 2147483647, %v1101
        %vm1992 = vcmp.eq.f32.partialorder %v1991, 8.507059e+37
        %v1993 = vand.u32 %v1101, 2147483648
        %v1994 = vor.u32 1.1754944e-38, %v1993
        %v1995 = vsel %vm1992, %v1994, %v1990
        %v1996 = vmul.f32 1.0, %v1995
        %v1997 = vrcp.pop %v1103
        %v1998 = vmul.f32 %v1103, %v1997
        %v1999 = vsub.f32 1.0, %v1998
        %v2000 = vmul.f32 %v1997, %v1999
        %v2001 = vadd.f32 %v1997, %v2000
        %vm2002 = vweird.f32 %v1103
        %vm2003 = vweird.f32 %v1997
        %vm2004 = vmor %vm2002, %vm2003
        %v2005 = vsel %vm2004, %v1997, %v2001
        %v2006 = vand.u32 2147483647, %v1103
        %vm2007 = vcmp.eq.f32.partialorder %v2006, 8.507059e+37
        %v2008 = vand.u32 %v1103, 2147483648
        %v2009 = vor.u32 1.1754944e-38, %v2008
        %v2010 = vsel %vm2007, %v2009, %v2005
        %v2011 = vmul.f32 1.0, %v2010
        %v2012 = vrcp.pop %v1105
        %v2013 = vmul.f32 %v1105, %v2012
        %v2014 = vsub.f32 1.0, %v2013
        %v2015 = vmul.f32 %v2012, %v2014
        %v2016 = vadd.f32 %v2012, %v2015
        %vm2017 = vweird.f32 %v1105
        %vm2018 = vweird.f32 %v2012
        %vm2019 = vmor %vm2017, %vm2018
        %v2020 = vsel %vm2019, %v2012, %v2016
        %v2021 = vand.u32 2147483647, %v1105
        %vm2022 = vcmp.eq.f32.partialorder %v2021, 8.507059e+37
        %v2023 = vand.u32 %v1105, 2147483648
        %v2024 = vor.u32 1.1754944e-38, %v2023
        %v2025 = vsel %vm2022, %v2024, %v2020
        %v2026 = vmul.f32 1.0, %v2025
        %v2027 = vrcp.pop %v1107
        %v2028 = vmul.f32 %v1107, %v2027
        %v2029 = vsub.f32 1.0, %v2028
        %v2030 = vmul.f32 %v2027, %v2029
        %v2031 = vadd.f32 %v2027, %v2030
        %vm2032 = vweird.f32 %v1107
        %vm2033 = vweird.f32 %v2027
        %vm2034 = vmor %vm2032, %vm2033
        %v2035 = vsel %vm2034, %v2027, %v2031
        %v2036 = vand.u32 2147483647, %v1107
        %vm2037 = vcmp.eq.f32.partialorder %v2036, 8.507059e+37
        %v2038 = vand.u32 %v1107, 2147483648
        %v2039 = vor.u32 1.1754944e-38, %v2038
        %v2040 = vsel %vm2037, %v2039, %v2035
        %v2041 = vmul.f32 1.0, %v2040
        %v2042 = vrcp.pop %v1109
        %v2043 = vmul.f32 %v1109, %v2042
        %v2044 = vsub.f32 1.0, %v2043
        %v2045 = vmul.f32 %v2042, %v2044
        %v2046 = vadd.f32 %v2042, %v2045
        %vm2047 = vweird.f32 %v1109
        %vm2048 = vweird.f32 %v2042
        %vm2049 = vmor %vm2047, %vm2048
        %v2050 = vsel %vm2049, %v2042, %v2046
        %v2051 = vand.u32 2147483647, %v1109
        %vm2052 = vcmp.eq.f32.partialorder %v2051, 8.507059e+37
        %v2053 = vand.u32 %v1109, 2147483648
        %v2054 = vor.u32 1.1754944e-38, %v2053
        %v2055 = vsel %vm2052, %v2054, %v2050
        %v2056 = vmul.f32 1.0, %v2055
        %v2057 = vrcp.pop %v1111
        %v2058 = vmul.f32 %v1111, %v2057
        %v2059 = vsub.f32 1.0, %v2058
        %v2060 = vmul.f32 %v2057, %v2059
        %v2061 = vadd.f32 %v2057, %v2060
        %vm2062 = vweird.f32 %v1111
        %vm2063 = vweird.f32 %v2057
        %vm2064 = vmor %vm2062, %vm2063
        %v2065 = vsel %vm2064, %v2057, %v2061
        %v2066 = vand.u32 2147483647, %v1111
        %vm2067 = vcmp.eq.f32.partialorder %v2066, 8.507059e+37
        %v2068 = vand.u32 %v1111, 2147483648
        %v2069 = vor.u32 1.1754944e-38, %v2068
        %v2070 = vsel %vm2067, %v2069, %v2065
        %v2071 = vmul.f32 1.0, %v2070
        %v2072 = vmul.f32 %v857, %v1126
        %v2073 = vmul.f32 %v859, %v1141
        %v2074 = vmul.f32 %v861, %v1156
        %v2075 = vmul.f32 %v863, %v1171
        %v2076 = vmul.f32 %v865, %v1186
        %v2077 = vmul.f32 %v867, %v1201
        %v2078 = vmul.f32 %v869, %v1216
        %v2079 = vmul.f32 %v871, %v1231
        %v2080 = vmul.f32 %v873, %v1246
        %v2081 = vmul.f32 %v875, %v1261
        %v2082 = vmul.f32 %v877, %v1276
        %v2083 = vmul.f32 %v879, %v1291
        %v2084 = vmul.f32 %v881, %v1306
        %v2085 = vmul.f32 %v883, %v1321
        %v2086 = vmul.f32 %v885, %v1336
        %v2087 = vmul.f32 %v887, %v1351
        %v2088 = vmul.f32 %v889, %v1366
        %v2089 = vmul.f32 %v891, %v1381
        %v2090 = vmul.f32 %v893, %v1396
        %v2091 = vmul.f32 %v895, %v1411
        %v2092 = vmul.f32 %v897, %v1426
        %v2093 = vmul.f32 %v899, %v1441
        %v2094 = vmul.f32 %v901, %v1456
        %v2095 = vmul.f32 %v903, %v1471
        %v2096 = vmul.f32 %v905, %v1486
        %v2097 = vmul.f32 %v907, %v1501
        %v2098 = vmul.f32 %v909, %v1516
        %v2099 = vmul.f32 %v911, %v1531
        %v2100 = vmul.f32 %v913, %v1546
        %v2101 = vmul.f32 %v915, %v1561
        %v2102 = vmul.f32 %v917, %v1576
        %v2103 = vmul.f32 %v919, %v1591
        %v2104 = vmul.f32 %v921, %v1606
        %v2105 = vmul.f32 %v923, %v1621
        %v2106 = vmul.f32 %v925, %v1636
        %v2107 = vmul.f32 %v927, %v1651
        %v2108 = vmul.f32 %v929, %v1666
        %v2109 = vmul.f32 %v931, %v1681
        %v2110 = vmul.f32 %v933, %v1696
        %v2111 = vmul.f32 %v935, %v1711
        %v2112 = vmul.f32 %v937, %v1726
        %v2113 = vmul.f32 %v939, %v1741
        %v2114 = vmul.f32 %v941, %v1756
        %v2115 = vmul.f32 %v943, %v1771
        %v2116 = vmul.f32 %v945, %v1786
        %v2117 = vmul.f32 %v947, %v1801
        %v2118 = vmul.f32 %v949, %v1816
        %v2119 = vmul.f32 %v951, %v1831
        %v2120 = vmul.f32 %v953, %v1846
        %v2121 = vmul.f32 %v955, %v1861
        %v2122 = vmul.f32 %v957, %v1876
        %v2123 = vmul.f32 %v959, %v1891
        %v2124 = vmul.f32 %v961, %v1906
        %v2125 = vmul.f32 %v963, %v1921
        %v2126 = vmul.f32 %v965, %v1936
        %v2127 = vmul.f32 %v967, %v1951
        %v2128 = vmul.f32 %v969, %v1966
        %v2129 = vmul.f32 %v971, %v1981
        %v2130 = vmul.f32 %v973, %v1996
        %v2131 = vmul.f32 %v975, %v2011
        %v2132 = vmul.f32 %v977, %v2026
        %v2133 = vmul.f32 %v979, %v2041
        %v2134 = vmul.f32 %v981, %v2056
        %v2135 = vmul.f32 %v983, %v2071
        %v2136 = vmul.f32 %v2072, %v2072
        %v2137 = vmul.f32 %v2073, %v2073
        %v2138 = vmul.f32 %v2074, %v2074
        %v2139 = vmul.f32 %v2075, %v2075
        %v2140 = vmul.f32 %v2076, %v2076
        %v2141 = vmul.f32 %v2077, %v2077
        %v2142 = vmul.f32 %v2078, %v2078
        %v2143 = vmul.f32 %v2079, %v2079
        %v2144 = vmul.f32 %v2080, %v2080
        %v2145 = vmul.f32 %v2081, %v2081
        %v2146 = vmul.f32 %v2082, %v2082
        %v2147 = vmul.f32 %v2083, %v2083
        %v2148 = vmul.f32 %v2084, %v2084
        %v2149 = vmul.f32 %v2085, %v2085
        %v2150 = vmul.f32 %v2086, %v2086
        %v2151 = vmul.f32 %v2087, %v2087
        %v2152 = vmul.f32 %v2088, %v2088
        %v2153 = vmul.f32 %v2089, %v2089
        %v2154 = vmul.f32 %v2090, %v2090
        %v2155 = vmul.f32 %v2091, %v2091
        %v2156 = vmul.f32 %v2092, %v2092
        %v2157 = vmul.f32 %v2093, %v2093
        %v2158 = vmul.f32 %v2094, %v2094
        %v2159 = vmul.f32 %v2095, %v2095
        %v2160 = vmul.f32 %v2096, %v2096
        %v2161 = vmul.f32 %v2097, %v2097
        %v2162 = vmul.f32 %v2098, %v2098
        %v2163 = vmul.f32 %v2099, %v2099
        %v2164 = vmul.f32 %v2100, %v2100
        %v2165 = vmul.f32 %v2101, %v2101
        %v2166 = vmul.f32 %v2102, %v2102
        %v2167 = vmul.f32 %v2103, %v2103
        %v2168 = vmul.f32 %v2104, %v2104
        %v2169 = vmul.f32 %v2105, %v2105
        %v2170 = vmul.f32 %v2106, %v2106
        %v2171 = vmul.f32 %v2107, %v2107
        %v2172 = vmul.f32 %v2108, %v2108
        %v2173 = vmul.f32 %v2109, %v2109
        %v2174 = vmul.f32 %v2110, %v2110
        %v2175 = vmul.f32 %v2111, %v2111
        %v2176 = vmul.f32 %v2112, %v2112
        %v2177 = vmul.f32 %v2113, %v2113
        %v2178 = vmul.f32 %v2114, %v2114
        %v2179 = vmul.f32 %v2115, %v2115
        %v2180 = vmul.f32 %v2116, %v2116
        %v2181 = vmul.f32 %v2117, %v2117
        %v2182 = vmul.f32 %v2118, %v2118
        %v2183 = vmul.f32 %v2119, %v2119
        %v2184 = vmul.f32 %v2120, %v2120
        %v2185 = vmul.f32 %v2121, %v2121
        %v2186 = vmul.f32 %v2122, %v2122
        %v2187 = vmul.f32 %v2123, %v2123
        %v2188 = vmul.f32 %v2124, %v2124
        %v2189 = vmul.f32 %v2125, %v2125
        %v2190 = vmul.f32 %v2126, %v2126
        %v2191 = vmul.f32 %v2127, %v2127
        %v2192 = vmul.f32 %v2128, %v2128
        %v2193 = vmul.f32 %v2129, %v2129
        %v2194 = vmul.f32 %v2130, %v2130
        %v2195 = vmul.f32 %v2131, %v2131
        %v2196 = vmul.f32 %v2132, %v2132
        %v2197 = vmul.f32 %v2133, %v2133
        %v2198 = vmul.f32 %v2134, %v2134
        %v2199 = vmul.f32 %v2135, %v2135
        %v2200 = vsel %vm600, 1, 0
        %v2201 = vsel %vm601, 1, 0
        %v2202 = vsel %vm602, 1, 0
        %v2203 = vsel %vm603, 1, 0
        %v2204 = vsel %vm604, 1, 0
        %v2205 = vsel %vm605, 1, 0
        %v2206 = vsel %vm606, 1, 0
        %v2207 = vsel %vm607, 1, 0
        %v2208 = vsel %vm608, 1, 0
        %v2209 = vsel %vm609, 1, 0
        %v2210 = vsel %vm610, 1, 0
        %v2211 = vsel %vm611, 1, 0
        %v2212 = vsel %vm612, 1, 0
        %v2213 = vsel %vm613, 1, 0
        %v2214 = vsel %vm614, 1, 0
        %v2215 = vsel %vm615, 1, 0
        %v2216 = vsel %vm616, 1, 0
        %v2217 = vsel %vm617, 1, 0
        %v2218 = vsel %vm618, 1, 0
        %v2219 = vsel %vm619, 1, 0
        %v2220 = vsel %vm620, 1, 0
        %v2221 = vsel %vm621, 1, 0
        %v2222 = vsel %vm622, 1, 0
        %v2223 = vsel %vm623, 1, 0
        %v2224 = vsel %vm624, 1, 0
        %v2225 = vsel %vm625, 1, 0
        %v2226 = vsel %vm626, 1, 0
        %v2227 = vsel %vm627, 1, 0
        %v2228 = vsel %vm628, 1, 0
        %v2229 = vsel %vm629, 1, 0
        %v2230 = vsel %vm630, 1, 0
        %v2231 = vsel %vm631, 1, 0
        %v2232 = vsel %vm632, 1, 0
        %v2233 = vsel %vm633, 1, 0
        %v2234 = vsel %vm634, 1, 0
        %v2235 = vsel %vm635, 1, 0
        %v2236 = vsel %vm636, 1, 0
        %v2237 = vsel %vm637, 1, 0
        %v2238 = vsel %vm638, 1, 0
        %v2239 = vsel %vm639, 1, 0
        %v2240 = vsel %vm640, 1, 0
        %v2241 = vsel %vm641, 1, 0
        %v2242 = vsel %vm642, 1, 0
        %v2243 = vsel %vm643, 1, 0
        %v2244 = vsel %vm644, 1, 0
        %v2245 = vsel %vm645, 1, 0
        %v2246 = vsel %vm646, 1, 0
        %v2247 = vsel %vm647, 1, 0
        %v2248 = vsel %vm648, 1, 0
        %v2249 = vsel %vm649, 1, 0
        %v2250 = vsel %vm650, 1, 0
        %v2251 = vsel %vm651, 1, 0
        %v2252 = vsel %vm652, 1, 0
        %v2253 = vsel %vm653, 1, 0
        %v2254 = vsel %vm654, 1, 0
        %v2255 = vsel %vm655, 1, 0
        %v2256 = vsel %vm656, 1, 0
        %v2257 = vsel %vm657, 1, 0
        %v2258 = vsel %vm658, 1, 0
        %v2259 = vsel %vm659, 1, 0
        %v2260 = vsel %vm660, 1, 0
        %v2261 = vsel %vm661, 1, 0
        %v2262 = vsel %vm662, 1, 0
        %v2263 = vsel %vm663, 1, 0
        %v2264 = vcvt.s32.f32 %v2200
        %v2265 = vcvt.s32.f32 %v2201
        %v2266 = vcvt.s32.f32 %v2202
        %v2267 = vcvt.s32.f32 %v2203
        %v2268 = vcvt.s32.f32 %v2204
        %v2269 = vcvt.s32.f32 %v2205
        %v2270 = vcvt.s32.f32 %v2206
        %v2271 = vcvt.s32.f32 %v2207
        %v2272 = vcvt.s32.f32 %v2208
        %v2273 = vcvt.s32.f32 %v2209
        %v2274 = vcvt.s32.f32 %v2210
        %v2275 = vcvt.s32.f32 %v2211
        %v2276 = vcvt.s32.f32 %v2212
        %v2277 = vcvt.s32.f32 %v2213
        %v2278 = vcvt.s32.f32 %v2214
        %v2279 = vcvt.s32.f32 %v2215
        %v2280 = vcvt.s32.f32 %v2216
        %v2281 = vcvt.s32.f32 %v2217
        %v2282 = vcvt.s32.f32 %v2218
        %v2283 = vcvt.s32.f32 %v2219
        %v2284 = vcvt.s32.f32 %v2220
        %v2285 = vcvt.s32.f32 %v2221
        %v2286 = vcvt.s32.f32 %v2222
        %v2287 = vcvt.s32.f32 %v2223
        %v2288 = vcvt.s32.f32 %v2224
        %v2289 = vcvt.s32.f32 %v2225
        %v2290 = vcvt.s32.f32 %v2226
        %v2291 = vcvt.s32.f32 %v2227
        %v2292 = vcvt.s32.f32 %v2228
        %v2293 = vcvt.s32.f32 %v2229
        %v2294 = vcvt.s32.f32 %v2230
        %v2295 = vcvt.s32.f32 %v2231
        %v2296 = vcvt.s32.f32 %v2232
        %v2297 = vcvt.s32.f32 %v2233
        %v2298 = vcvt.s32.f32 %v2234
        %v2299 = vcvt.s32.f32 %v2235
        %v2300 = vcvt.s32.f32 %v2236
        %v2301 = vcvt.s32.f32 %v2237
        %v2302 = vcvt.s32.f32 %v2238
        %v2303 = vcvt.s32.f32 %v2239
        %v2304 = vcvt.s32.f32 %v2240
        %v2305 = vcvt.s32.f32 %v2241
        %v2306 = vcvt.s32.f32 %v2242
        %v2307 = vcvt.s32.f32 %v2243
        %v2308 = vcvt.s32.f32 %v2244
        %v2309 = vcvt.s32.f32 %v2245
        %v2310 = vcvt.s32.f32 %v2246
        %v2311 = vcvt.s32.f32 %v2247
        %v2312 = vcvt.s32.f32 %v2248
        %v2313 = vcvt.s32.f32 %v2249
        %v2314 = vcvt.s32.f32 %v2250
        %v2315 = vcvt.s32.f32 %v2251
        %v2316 = vcvt.s32.f32 %v2252
        %v2317 = vcvt.s32.f32 %v2253
        %v2318 = vcvt.s32.f32 %v2254
        %v2319 = vcvt.s32.f32 %v2255
        %v2320 = vcvt.s32.f32 %v2256
        %v2321 = vcvt.s32.f32 %v2257
        %v2322 = vcvt.s32.f32 %v2258
        %v2323 = vcvt.s32.f32 %v2259
        %v2324 = vcvt.s32.f32 %v2260
        %v2325 = vcvt.s32.f32 %v2261
        %v2326 = vcvt.s32.f32 %v2262
        %v2327 = vcvt.s32.f32 %v2263
        %v2328 = vadd.f32 %v2136, %v2264
        %v2329 = vadd.f32 %v2137, %v2265
        %v2330 = vadd.f32 %v2138, %v2266
        %v2331 = vadd.f32 %v2139, %v2267
        %v2332 = vadd.f32 %v2140, %v2268
        %v2333 = vadd.f32 %v2141, %v2269
        %v2334 = vadd.f32 %v2142, %v2270
        %v2335 = vadd.f32 %v2143, %v2271
        %v2336 = vadd.f32 %v2144, %v2272
        %v2337 = vadd.f32 %v2145, %v2273
        %v2338 = vadd.f32 %v2146, %v2274
        %v2339 = vadd.f32 %v2147, %v2275
        %v2340 = vadd.f32 %v2148, %v2276
        %v2341 = vadd.f32 %v2149, %v2277
        %v2342 = vadd.f32 %v2150, %v2278
        %v2343 = vadd.f32 %v2151, %v2279
        %v2344 = vadd.f32 %v2152, %v2280
        %v2345 = vadd.f32 %v2153, %v2281
        %v2346 = vadd.f32 %v2154, %v2282
        %v2347 = vadd.f32 %v2155, %v2283
        %v2348 = vadd.f32 %v2156, %v2284
        %v2349 = vadd.f32 %v2157, %v2285
        %v2350 = vadd.f32 %v2158, %v2286
        %v2351 = vadd.f32 %v2159, %v2287
        %v2352 = vadd.f32 %v2160, %v2288
        %v2353 = vadd.f32 %v2161, %v2289
        %v2354 = vadd.f32 %v2162, %v2290
        %v2355 = vadd.f32 %v2163, %v2291
        %v2356 = vadd.f32 %v2164, %v2292
        %v2357 = vadd.f32 %v2165, %v2293
        %v2358 = vadd.f32 %v2166, %v2294
        %v2359 = vadd.f32 %v2167, %v2295
        %v2360 = vadd.f32 %v2168, %v2296
        %v2361 = vadd.f32 %v2169, %v2297
        %v2362 = vadd.f32 %v2170, %v2298
        %v2363 = vadd.f32 %v2171, %v2299
        %v2364 = vadd.f32 %v2172, %v2300
        %v2365 = vadd.f32 %v2173, %v2301
        %v2366 = vadd.f32 %v2174, %v2302
        %v2367 = vadd.f32 %v2175, %v2303
        %v2368 = vadd.f32 %v2176, %v2304
        %v2369 = vadd.f32 %v2177, %v2305
        %v2370 = vadd.f32 %v2178, %v2306
        %v2371 = vadd.f32 %v2179, %v2307
        %v2372 = vadd.f32 %v2180, %v2308
        %v2373 = vadd.f32 %v2181, %v2309
        %v2374 = vadd.f32 %v2182, %v2310
        %v2375 = vadd.f32 %v2183, %v2311
        %v2376 = vadd.f32 %v2184, %v2312
        %v2377 = vadd.f32 %v2185, %v2313
        %v2378 = vadd.f32 %v2186, %v2314
        %v2379 = vadd.f32 %v2187, %v2315
        %v2380 = vadd.f32 %v2188, %v2316
        %v2381 = vadd.f32 %v2189, %v2317
        %v2382 = vadd.f32 %v2190, %v2318
        %v2383 = vadd.f32 %v2191, %v2319
        %v2384 = vadd.f32 %v2192, %v2320
        %v2385 = vadd.f32 %v2193, %v2321
        %v2386 = vadd.f32 %v2194, %v2322
        %v2387 = vadd.f32 %v2195, %v2323
        %v2388 = vadd.f32 %v2196, %v2324
        %v2389 = vadd.f32 %v2197, %v2325
        %v2390 = vadd.f32 %v2198, %v2326
        %v2391 = vadd.f32 %v2199, %v2327
        %v2392 = vadd.f32 %v2328, 1.0
        %v2393 = vadd.f32 %v2329, 1.0
        %v2394 = vadd.f32 %v2330, 1.0
        %v2395 = vadd.f32 %v2331, 1.0
        %v2396 = vadd.f32 %v2332, 1.0
        %v2397 = vadd.f32 %v2333, 1.0
        %v2398 = vadd.f32 %v2334, 1.0
        %v2399 = vadd.f32 %v2335, 1.0
        %v2400 = vadd.f32 %v2336, 1.0
        %v2401 = vadd.f32 %v2337, 1.0
        %v2402 = vadd.f32 %v2338, 1.0
        %v2403 = vadd.f32 %v2339, 1.0
        %v2404 = vadd.f32 %v2340, 1.0
        %v2405 = vadd.f32 %v2341, 1.0
        %v2406 = vadd.f32 %v2342, 1.0
        %v2407 = vadd.f32 %v2343, 1.0
        %v2408 = vadd.f32 %v2344, 1.0
        %v2409 = vadd.f32 %v2345, 1.0
        %v2410 = vadd.f32 %v2346, 1.0
        %v2411 = vadd.f32 %v2347, 1.0
        %v2412 = vadd.f32 %v2348, 1.0
        %v2413 = vadd.f32 %v2349, 1.0
        %v2414 = vadd.f32 %v2350, 1.0
        %v2415 = vadd.f32 %v2351, 1.0
        %v2416 = vadd.f32 %v2352, 1.0
        %v2417 = vadd.f32 %v2353, 1.0
        %v2418 = vadd.f32 %v2354, 1.0
        %v2419 = vadd.f32 %v2355, 1.0
        %v2420 = vadd.f32 %v2356, 1.0
        %v2421 = vadd.f32 %v2357, 1.0
        %v2422 = vadd.f32 %v2358, 1.0
        %v2423 = vadd.f32 %v2359, 1.0
        %v2424 = vadd.f32 %v2360, 1.0
        %v2425 = vadd.f32 %v2361, 1.0
        %v2426 = vadd.f32 %v2362, 1.0
        %v2427 = vadd.f32 %v2363, 1.0
        %v2428 = vadd.f32 %v2364, 1.0
        %v2429 = vadd.f32 %v2365, 1.0
        %v2430 = vadd.f32 %v2366, 1.0
        %v2431 = vadd.f32 %v2367, 1.0
        %v2432 = vadd.f32 %v2368, 1.0
        %v2433 = vadd.f32 %v2369, 1.0
        %v2434 = vadd.f32 %v2370, 1.0
        %v2435 = vadd.f32 %v2371, 1.0
        %v2436 = vadd.f32 %v2372, 1.0
        %v2437 = vadd.f32 %v2373, 1.0
        %v2438 = vadd.f32 %v2374, 1.0
        %v2439 = vadd.f32 %v2375, 1.0
        %v2440 = vadd.f32 %v2376, 1.0
        %v2441 = vadd.f32 %v2377, 1.0
        %v2442 = vadd.f32 %v2378, 1.0
        %v2443 = vadd.f32 %v2379, 1.0
        %v2444 = vadd.f32 %v2380, 1.0
        %v2445 = vadd.f32 %v2381, 1.0
        %v2446 = vadd.f32 %v2382, 1.0
        %v2447 = vadd.f32 %v2383, 1.0
        %v2448 = vadd.f32 %v2384, 1.0
        %v2449 = vadd.f32 %v2385, 1.0
        %v2450 = vadd.f32 %v2386, 1.0
        %v2451 = vadd.f32 %v2387, 1.0
        %v2452 = vadd.f32 %v2388, 1.0
        %v2453 = vadd.f32 %v2389, 1.0
        %v2454 = vadd.f32 %v2390, 1.0
        %v2455 = vadd.f32 %v2391, 1.0
        %v2456 = vsub.f32 1.0, %v2072
        %v2457 = vsub.f32 1.0, %v2073
        %v2458 = vsub.f32 1.0, %v2074
        %v2459 = vsub.f32 1.0, %v2075
        %v2460 = vsub.f32 1.0, %v2076
        %v2461 = vsub.f32 1.0, %v2077
        %v2462 = vsub.f32 1.0, %v2078
        %v2463 = vsub.f32 1.0, %v2079
        %v2464 = vsub.f32 1.0, %v2080
        %v2465 = vsub.f32 1.0, %v2081
        %v2466 = vsub.f32 1.0, %v2082
        %v2467 = vsub.f32 1.0, %v2083
        %v2468 = vsub.f32 1.0, %v2084
        %v2469 = vsub.f32 1.0, %v2085
        %v2470 = vsub.f32 1.0, %v2086
        %v2471 = vsub.f32 1.0, %v2087
        %v2472 = vsub.f32 1.0, %v2088
        %v2473 = vsub.f32 1.0, %v2089
        %v2474 = vsub.f32 1.0, %v2090
        %v2475 = vsub.f32 1.0, %v2091
        %v2476 = vsub.f32 1.0, %v2092
        %v2477 = vsub.f32 1.0, %v2093
        %v2478 = vsub.f32 1.0, %v2094
        %v2479 = vsub.f32 1.0, %v2095
        %v2480 = vsub.f32 1.0, %v2096
        %v2481 = vsub.f32 1.0, %v2097
        %v2482 = vsub.f32 1.0, %v2098
        %v2483 = vsub.f32 1.0, %v2099
        %v2484 = vsub.f32 1.0, %v2100
        %v2485 = vsub.f32 1.0, %v2101
        %v2486 = vsub.f32 1.0, %v2102
        %v2487 = vsub.f32 1.0, %v2103
        %v2488 = vsub.f32 1.0, %v2104
        %v2489 = vsub.f32 1.0, %v2105
        %v2490 = vsub.f32 1.0, %v2106
        %v2491 = vsub.f32 1.0, %v2107
        %v2492 = vsub.f32 1.0, %v2108
        %v2493 = vsub.f32 1.0, %v2109
        %v2494 = vsub.f32 1.0, %v2110
        %v2495 = vsub.f32 1.0, %v2111
        %v2496 = vsub.f32 1.0, %v2112
        %v2497 = vsub.f32 1.0, %v2113
        %v2498 = vsub.f32 1.0, %v2114
        %v2499 = vsub.f32 1.0, %v2115
        %v2500 = vsub.f32 1.0, %v2116
        %v2501 = vsub.f32 1.0, %v2117
        %v2502 = vsub.f32 1.0, %v2118
        %v2503 = vsub.f32 1.0, %v2119
        %v2504 = vsub.f32 1.0, %v2120
        %v2505 = vsub.f32 1.0, %v2121
        %v2506 = vsub.f32 1.0, %v2122
        %v2507 = vsub.f32 1.0, %v2123
        %v2508 = vsub.f32 1.0, %v2124
        %v2509 = vsub.f32 1.0, %v2125
        %v2510 = vsub.f32 1.0, %v2126
        %v2511 = vsub.f32 1.0, %v2127
        %v2512 = vsub.f32 1.0, %v2128
        %v2513 = vsub.f32 1.0, %v2129
        %v2514 = vsub.f32 1.0, %v2130
        %v2515 = vsub.f32 1.0, %v2131
        %v2516 = vsub.f32 1.0, %v2132
        %v2517 = vsub.f32 1.0, %v2133
        %v2518 = vsub.f32 1.0, %v2134
        %v2519 = vsub.f32 1.0, %v2135
        %v2520 = vsel %vm600, %v2456, 0.0
        %v2521 = vsel %vm601, %v2457, 0.0
        %v2522 = vsel %vm602, %v2458, 0.0
        %v2523 = vsel %vm603, %v2459, 0.0
        %v2524 = vsel %vm604, %v2460, 0.0
        %v2525 = vsel %vm605, %v2461, 0.0
        %v2526 = vsel %vm606, %v2462, 0.0
        %v2527 = vsel %vm607, %v2463, 0.0
        %v2528 = vsel %vm608, %v2464, 0.0
        %v2529 = vsel %vm609, %v2465, 0.0
        %v2530 = vsel %vm610, %v2466, 0.0
        %v2531 = vsel %vm611, %v2467, 0.0
        %v2532 = vsel %vm612, %v2468, 0.0
        %v2533 = vsel %vm613, %v2469, 0.0
        %v2534 = vsel %vm614, %v2470, 0.0
        %v2535 = vsel %vm615, %v2471, 0.0
        %v2536 = vsel %vm616, %v2472, 0.0
        %v2537 = vsel %vm617, %v2473, 0.0
        %v2538 = vsel %vm618, %v2474, 0.0
        %v2539 = vsel %vm619, %v2475, 0.0
        %v2540 = vsel %vm620, %v2476, 0.0
        %v2541 = vsel %vm621, %v2477, 0.0
        %v2542 = vsel %vm622, %v2478, 0.0
        %v2543 = vsel %vm623, %v2479, 0.0
        %v2544 = vsel %vm624, %v2480, 0.0
        %v2545 = vsel %vm625, %v2481, 0.0
        %v2546 = vsel %vm626, %v2482, 0.0
        %v2547 = vsel %vm627, %v2483, 0.0
        %v2548 = vsel %vm628, %v2484, 0.0
        %v2549 = vsel %vm629, %v2485, 0.0
        %v2550 = vsel %vm630, %v2486, 0.0
        %v2551 = vsel %vm631, %v2487, 0.0
        %v2552 = vsel %vm632, %v2488, 0.0
        %v2553 = vsel %vm633, %v2489, 0.0
        %v2554 = vsel %vm634, %v2490, 0.0
        %v2555 = vsel %vm635, %v2491, 0.0
        %v2556 = vsel %vm636, %v2492, 0.0
        %v2557 = vsel %vm637, %v2493, 0.0
        %v2558 = vsel %vm638, %v2494, 0.0
        %v2559 = vsel %vm639, %v2495, 0.0
        %v2560 = vsel %vm640, %v2496, 0.0
        %v2561 = vsel %vm641, %v2497, 0.0
        %v2562 = vsel %vm642, %v2498, 0.0
        %v2563 = vsel %vm643, %v2499, 0.0
        %v2564 = vsel %vm644, %v2500, 0.0
        %v2565 = vsel %vm645, %v2501, 0.0
        %v2566 = vsel %vm646, %v2502, 0.0
        %v2567 = vsel %vm647, %v2503, 0.0
        %v2568 = vsel %vm648, %v2504, 0.0
        %v2569 = vsel %vm649, %v2505, 0.0
        %v2570 = vsel %vm650, %v2506, 0.0
        %v2571 = vsel %vm651, %v2507, 0.0
        %v2572 = vsel %vm652, %v2508, 0.0
        %v2573 = vsel %vm653, %v2509, 0.0
        %v2574 = vsel %vm654, %v2510, 0.0
        %v2575 = vsel %vm655, %v2511, 0.0
        %v2576 = vsel %vm656, %v2512, 0.0
        %v2577 = vsel %vm657, %v2513, 0.0
        %v2578 = vsel %vm658, %v2514, 0.0
        %v2579 = vsel %vm659, %v2515, 0.0
        %v2580 = vsel %vm660, %v2516, 0.0
        %v2581 = vsel %vm661, %v2517, 0.0
        %v2582 = vsel %vm662, %v2518, 0.0
        %v2583 = vsel %vm663, %v2519, 0.0
        %v2584 = vadd.f32 %v2136, %v2520
        %v2585 = vadd.f32 %v2137, %v2521
        %v2586 = vadd.f32 %v2138, %v2522
        %v2587 = vadd.f32 %v2139, %v2523
        %v2588 = vadd.f32 %v2140, %v2524
        %v2589 = vadd.f32 %v2141, %v2525
        %v2590 = vadd.f32 %v2142, %v2526
        %v2591 = vadd.f32 %v2143, %v2527
        %v2592 = vadd.f32 %v2144, %v2528
        %v2593 = vadd.f32 %v2145, %v2529
        %v2594 = vadd.f32 %v2146, %v2530
        %v2595 = vadd.f32 %v2147, %v2531
        %v2596 = vadd.f32 %v2148, %v2532
        %v2597 = vadd.f32 %v2149, %v2533
        %v2598 = vadd.f32 %v2150, %v2534
        %v2599 = vadd.f32 %v2151, %v2535
        %v2600 = vadd.f32 %v2152, %v2536
        %v2601 = vadd.f32 %v2153, %v2537
        %v2602 = vadd.f32 %v2154, %v2538
        %v2603 = vadd.f32 %v2155, %v2539
        %v2604 = vadd.f32 %v2156, %v2540
        %v2605 = vadd.f32 %v2157, %v2541
        %v2606 = vadd.f32 %v2158, %v2542
        %v2607 = vadd.f32 %v2159, %v2543
        %v2608 = vadd.f32 %v2160, %v2544
        %v2609 = vadd.f32 %v2161, %v2545
        %v2610 = vadd.f32 %v2162, %v2546
        %v2611 = vadd.f32 %v2163, %v2547
        %v2612 = vadd.f32 %v2164, %v2548
        %v2613 = vadd.f32 %v2165, %v2549
        %v2614 = vadd.f32 %v2166, %v2550
        %v2615 = vadd.f32 %v2167, %v2551
        %v2616 = vadd.f32 %v2168, %v2552
        %v2617 = vadd.f32 %v2169, %v2553
        %v2618 = vadd.f32 %v2170, %v2554
        %v2619 = vadd.f32 %v2171, %v2555
        %v2620 = vadd.f32 %v2172, %v2556
        %v2621 = vadd.f32 %v2173, %v2557
        %v2622 = vadd.f32 %v2174, %v2558
        %v2623 = vadd.f32 %v2175, %v2559
        %v2624 = vadd.f32 %v2176, %v2560
        %v2625 = vadd.f32 %v2177, %v2561
        %v2626 = vadd.f32 %v2178, %v2562
        %v2627 = vadd.f32 %v2179, %v2563
        %v2628 = vadd.f32 %v2180, %v2564
        %v2629 = vadd.f32 %v2181, %v2565
        %v2630 = vadd.f32 %v2182, %v2566
        %v2631 = vadd.f32 %v2183, %v2567
        %v2632 = vadd.f32 %v2184, %v2568
        %v2633 = vadd.f32 %v2185, %v2569
        %v2634 = vadd.f32 %v2186, %v2570
        %v2635 = vadd.f32 %v2187, %v2571
        %v2636 = vadd.f32 %v2188, %v2572
        %v2637 = vadd.f32 %v2189, %v2573
        %v2638 = vadd.f32 %v2190, %v2574
        %v2639 = vadd.f32 %v2191, %v2575
        %v2640 = vadd.f32 %v2192, %v2576
        %v2641 = vadd.f32 %v2193, %v2577
        %v2642 = vadd.f32 %v2194, %v2578
        %v2643 = vadd.f32 %v2195, %v2579
        %v2644 = vadd.f32 %v2196, %v2580
        %v2645 = vadd.f32 %v2197, %v2581
        %v2646 = vadd.f32 %v2198, %v2582
        %v2647 = vadd.f32 %v2199, %v2583
        %v2648 = vrcp.pop %v2392
        %v2649 = vrcp.pop %v2393
        %v2650 = vrcp.pop %v2394
        %v2651 = vrcp.pop %v2395
        %v2652 = vrcp.pop %v2396
        %v2653 = vrcp.pop %v2397
        %v2654 = vrcp.pop %v2398
        %v2655 = vrcp.pop %v2399
        %v2656 = vrcp.pop %v2400
        %v2657 = vrcp.pop %v2401
        %v2658 = vrcp.pop %v2402
        %v2659 = vrcp.pop %v2403
        %v2660 = vrcp.pop %v2404
        %v2661 = vrcp.pop %v2405
        %v2662 = vrcp.pop %v2406
        %v2663 = vrcp.pop %v2407
        %v2664 = vrcp.pop %v2408
        %v2665 = vrcp.pop %v2409
        %v2666 = vrcp.pop %v2410
        %v2667 = vrcp.pop %v2411
        %v2668 = vrcp.pop %v2412
        %v2669 = vrcp.pop %v2413
        %v2670 = vrcp.pop %v2414
        %v2671 = vrcp.pop %v2415
        %v2672 = vrcp.pop %v2416
        %v2673 = vrcp.pop %v2417
        %v2674 = vrcp.pop %v2418
        %v2675 = vrcp.pop %v2419
        %v2676 = vrcp.pop %v2420
        %v2677 = vrcp.pop %v2421
        %v2678 = vrcp.pop %v2422
        %v2679 = vrcp.pop %v2423
        %v2680 = vrcp.pop %v2424
        %v2681 = vrcp.pop %v2425
        %v2682 = vrcp.pop %v2426
        %v2683 = vrcp.pop %v2427
        %v2684 = vrcp.pop %v2428
        %v2685 = vrcp.pop %v2429
        %v2686 = vrcp.pop %v2430
        %v2687 = vrcp.pop %v2431
        %v2688 = vrcp.pop %v2432
        %v2689 = vrcp.pop %v2433
        %v2690 = vrcp.pop %v2434
        %v2691 = vrcp.pop %v2435
        %v2692 = vrcp.pop %v2436
        %v2693 = vrcp.pop %v2437
        %v2694 = vrcp.pop %v2438
        %v2695 = vrcp.pop %v2439
        %v2696 = vrcp.pop %v2440
        %v2697 = vrcp.pop %v2441
        %v2698 = vrcp.pop %v2442
        %v2699 = vrcp.pop %v2443
        %v2700 = vrcp.pop %v2444
        %v2701 = vrcp.pop %v2445
        %v2702 = vrcp.pop %v2446
        %v2703 = vrcp.pop %v2447
        %v2704 = vrcp.pop %v2448
        %v2705 = vrcp.pop %v2449
        %v2706 = vrcp.pop %v2450
        %v2707 = vrcp.pop %v2451
        %v2708 = vrcp.pop %v2452
        %v2709 = vrcp.pop %v2453
        %v2710 = vrcp.pop %v2454
        %v2711 = vrcp.pop %v2455
        %v2712 = vmul.f32 %v2584, %v2648
        %v2713 = vmul.f32 %v2585, %v2649
        %v2714 = vmul.f32 %v2586, %v2650
        %v2715 = vmul.f32 %v2587, %v2651
        %v2716 = vmul.f32 %v2588, %v2652
        %v2717 = vmul.f32 %v2589, %v2653
        %v2718 = vmul.f32 %v2590, %v2654
        %v2719 = vmul.f32 %v2591, %v2655
        %v2720 = vmul.f32 %v2592, %v2656
        %v2721 = vmul.f32 %v2593, %v2657
        %v2722 = vmul.f32 %v2594, %v2658
        %v2723 = vmul.f32 %v2595, %v2659
        %v2724 = vmul.f32 %v2596, %v2660
        %v2725 = vmul.f32 %v2597, %v2661
        %v2726 = vmul.f32 %v2598, %v2662
        %v2727 = vmul.f32 %v2599, %v2663
        %v2728 = vmul.f32 %v2600, %v2664
        %v2729 = vmul.f32 %v2601, %v2665
        %v2730 = vmul.f32 %v2602, %v2666
        %v2731 = vmul.f32 %v2603, %v2667
        %v2732 = vmul.f32 %v2604, %v2668
        %v2733 = vmul.f32 %v2605, %v2669
        %v2734 = vmul.f32 %v2606, %v2670
        %v2735 = vmul.f32 %v2607, %v2671
        %v2736 = vmul.f32 %v2608, %v2672
        %v2737 = vmul.f32 %v2609, %v2673
        %v2738 = vmul.f32 %v2610, %v2674
        %v2739 = vmul.f32 %v2611, %v2675
        %v2740 = vmul.f32 %v2612, %v2676
        %v2741 = vmul.f32 %v2613, %v2677
        %v2742 = vmul.f32 %v2614, %v2678
        %v2743 = vmul.f32 %v2615, %v2679
        %v2744 = vmul.f32 %v2616, %v2680
        %v2745 = vmul.f32 %v2617, %v2681
        %v2746 = vmul.f32 %v2618, %v2682
        %v2747 = vmul.f32 %v2619, %v2683
        %v2748 = vmul.f32 %v2620, %v2684
        %v2749 = vmul.f32 %v2621, %v2685
        %v2750 = vmul.f32 %v2622, %v2686
        %v2751 = vmul.f32 %v2623, %v2687
        %v2752 = vmul.f32 %v2624, %v2688
        %v2753 = vmul.f32 %v2625, %v2689
        %v2754 = vmul.f32 %v2626, %v2690
        %v2755 = vmul.f32 %v2627, %v2691
        %v2756 = vmul.f32 %v2628, %v2692
        %v2757 = vmul.f32 %v2629, %v2693
        %v2758 = vmul.f32 %v2630, %v2694
        %v2759 = vmul.f32 %v2631, %v2695
        %v2760 = vmul.f32 %v2632, %v2696
        %v2761 = vmul.f32 %v2633, %v2697
        %v2762 = vmul.f32 %v2634, %v2698
        %v2763 = vmul.f32 %v2635, %v2699
        %v2764 = vmul.f32 %v2636, %v2700
        %v2765 = vmul.f32 %v2637, %v2701
        %v2766 = vmul.f32 %v2638, %v2702
        %v2767 = vmul.f32 %v2639, %v2703
        %v2768 = vmul.f32 %v2640, %v2704
        %v2769 = vmul.f32 %v2641, %v2705
        %v2770 = vmul.f32 %v2642, %v2706
        %v2771 = vmul.f32 %v2643, %v2707
        %v2772 = vmul.f32 %v2644, %v2708
        %v2773 = vmul.f32 %v2645, %v2709
        %v2774 = vmul.f32 %v2646, %v2710
        %v2775 = vmul.f32 %v2647, %v2711
        %s2776 = smul.u32 %s20, 2
        %s2777 = sadd.s32 %s2776, %s21
        %s2778 = smul.u32 %s2777, 512
        %s2779 = sadd.s32 %s2778, 512
        %p2780 = scmp.le.s32.totalorder %s2779, 1200
        // Predicated region
        $region33: #{tpu_custom_call.1} parent=27 // pred_check
          %p2781 = pneg %p2780
        $region34: #{tpu_custom_call.1} parent=27 // pred_check_branch
          %2783 = sbr.rel (%p2781) target = $region36
        $region35: #{tpu_custom_call.1} parent=27 // pred_region
          %v2784 = vld [vmem:[#allocation2] sm:$0x1]
          %2785 = vmatpush.msra.mxu0 %v2727
          %2786 = vmatpush.msra.mxu0 %v2726
          %2787 = vmatpush.msra.mxu0 %v2725
          %2788 = vmatpush.msra.mxu0 %v2724
          %2789 = vmatpush.msra.mxu0 %v2723
          %2790 = vmatpush.msra.mxu0 %v2722
          %2791 = vmatpush.msra.mxu0 %v2721
          %2792 = vmatpush.msra.mxu0 %v2720
          %2793 = vmatpush.msra.mxu0 %v2719
          %2794 = vmatpush.msra.mxu0 %v2718
          %2795 = vmatpush.msra.mxu0 %v2717
          %2796 = vmatpush.msra.mxu0 %v2716
          %2797 = vmatpush.msra.mxu0 %v2715
          %2798 = vmatpush.msra.mxu0 %v2714
          %2799 = vmatpush.msra.mxu0 %v2713
          %2800 = vmatpush.msra.mxu0 %v2712
          %2801 = vmatmul.f32.gmra.mxu0 1.0
          %v2802 = vpop.f32.mrf.mxu0
          %v2803 = vadd.f32 0.0, %v2802
          %2804 = vdwg.mxu0
          %2805 = vmatpush.msra.mxu0 %v2743
          %2806 = vmatpush.msra.mxu0 %v2742
          %2807 = vmatpush.msra.mxu0 %v2741
          %2808 = vmatpush.msra.mxu0 %v2740
          %2809 = vmatpush.msra.mxu0 %v2739
          %2810 = vmatpush.msra.mxu0 %v2738
          %2811 = vmatpush.msra.mxu0 %v2737
          %2812 = vmatpush.msra.mxu0 %v2736
          %2813 = vmatpush.msra.mxu0 %v2735
          %2814 = vmatpush.msra.mxu0 %v2734
          %2815 = vmatpush.msra.mxu0 %v2733
          %2816 = vmatpush.msra.mxu0 %v2732
          %2817 = vmatpush.msra.mxu0 %v2731
          %2818 = vmatpush.msra.mxu0 %v2730
          %2819 = vmatpush.msra.mxu0 %v2729
          %2820 = vmatpush.msra.mxu0 %v2728
          %2821 = vmatmul.f32.gmra.mxu0 1.0
          %v2822 = vpop.f32.mrf.mxu0
          %v2823 = vadd.f32 %v2803, %v2822
          %2824 = vdwg.mxu0
          %2825 = vmatpush.msra.mxu0 %v2759
          %2826 = vmatpush.msra.mxu0 %v2758
          %2827 = vmatpush.msra.mxu0 %v2757
          %2828 = vmatpush.msra.mxu0 %v2756
          %2829 = vmatpush.msra.mxu0 %v2755
          %2830 = vmatpush.msra.mxu0 %v2754
          %2831 = vmatpush.msra.mxu0 %v2753
          %2832 = vmatpush.msra.mxu0 %v2752
          %2833 = vmatpush.msra.mxu0 %v2751
          %2834 = vmatpush.msra.mxu0 %v2750
          %2835 = vmatpush.msra.mxu0 %v2749
          %2836 = vmatpush.msra.mxu0 %v2748
          %2837 = vmatpush.msra.mxu0 %v2747
          %2838 = vmatpush.msra.mxu0 %v2746
          %2839 = vmatpush.msra.mxu0 %v2745
          %2840 = vmatpush.msra.mxu0 %v2744
          %2841 = vmatmul.f32.gmra.mxu0 1.0
          %v2842 = vpop.f32.mrf.mxu0
          %v2843 = vadd.f32 %v2823, %v2842
          %2844 = vdwg.mxu0
          %2845 = vmatpush.msra.mxu0 %v2775
          %2846 = vmatpush.msra.mxu0 %v2774
          %2847 = vmatpush.msra.mxu0 %v2773
          %2848 = vmatpush.msra.mxu0 %v2772
          %2849 = vmatpush.msra.mxu0 %v2771
          %2850 = vmatpush.msra.mxu0 %v2770
          %2851 = vmatpush.msra.mxu0 %v2769
          %2852 = vmatpush.msra.mxu0 %v2768
          %2853 = vmatpush.msra.mxu0 %v2767
          %2854 = vmatpush.msra.mxu0 %v2766
          %2855 = vmatpush.msra.mxu0 %v2765
          %2856 = vmatpush.msra.mxu0 %v2764
          %2857 = vmatpush.msra.mxu0 %v2763
          %2858 = vmatpush.msra.mxu0 %v2762
          %2859 = vmatpush.msra.mxu0 %v2761
          %2860 = vmatpush.msra.mxu0 %v2760
          %2861 = vmatmul.f32.gmra.mxu0 1.0
          %v2862 = vpop.f32.mrf.mxu0
          %v2863 = vadd.f32 %v2843, %v2862
          %2864 = vdwg.mxu0
          %v2865 = vadd.f32 %v2784, %v2863
          %2866 = vst [vmem:[#allocation2] sm:$0x1] %v2865
        $region36: #{tpu_custom_call.1} parent=27 // pred_fallthru
          _
        %p2867 = scmp.gt.s32.totalorder %s2779, 1200
        // Predicated region
        $region37: #{tpu_custom_call.1} parent=27 // pred_check
          %p2868 = pneg %p2867
        $region38: #{tpu_custom_call.1} parent=27 // pred_check_branch
          %2870 = sbr.rel (%p2868) target = $region40
        $region39: #{tpu_custom_call.1} parent=27 // pred_region
          %v2871 = vlaneseq
          %v2872 = vshrl.u32 %v2871, 7
          %v2873 = vadd.s32 %v2872, 8
          %v2874 = vadd.s32 %v2872, 16
          %v2875 = vadd.s32 %v2872, 24
          %v2876 = vadd.s32 %v2872, 32
          %v2877 = vadd.s32 %v2872, 40
          %v2878 = vadd.s32 %v2872, 48
          %v2879 = vadd.s32 %v2872, 56
          %v2880 = vadd.s32 %v2872, 64
          %v2881 = vadd.s32 %v2872, 72
          %v2882 = vadd.s32 %v2872, 80
          %v2883 = vadd.s32 %v2872, 88
          %v2884 = vadd.s32 %v2872, 96
          %v2885 = vadd.s32 %v2872, 104
          %v2886 = vadd.s32 %v2872, 112
          %v2887 = vadd.s32 %v2872, 120
          %v2888 = vadd.s32 %v2872, 128
          %v2889 = vadd.s32 %v2872, 136
          %v2890 = vadd.s32 %v2872, 144
          %v2891 = vadd.s32 %v2872, 152
          %v2892 = vadd.s32 %v2872, 160
          %v2893 = vadd.s32 %v2872, 168
          %v2894 = vadd.s32 %v2872, 176
          %v2895 = vadd.s32 %v2872, 184
          %v2896 = vadd.s32 %v2872, 192
          %v2897 = vadd.s32 %v2872, 200
          %v2898 = vadd.s32 %v2872, 208
          %v2899 = vadd.s32 %v2872, 216
          %v2900 = vadd.s32 %v2872, 224
          %v2901 = vadd.s32 %v2872, 232
          %v2902 = vadd.s32 %v2872, 240
          %v2903 = vadd.s32 %v2872, 248
          %v2904 = vadd.s32 %v2872, 256
          %v2905 = vadd.s32 %v2872, 264
          %v2906 = vadd.s32 %v2872, 272
          %v2907 = vadd.s32 %v2872, 280
          %v2908 = vadd.s32 %v2872, 288
          %v2909 = vadd.s32 %v2872, 296
          %v2910 = vadd.s32 %v2872, 304
          %v2911 = vadd.s32 %v2872, 312
          %v2912 = vadd.s32 %v2872, 320
          %v2913 = vadd.s32 %v2872, 328
          %v2914 = vadd.s32 %v2872, 336
          %v2915 = vadd.s32 %v2872, 344
          %v2916 = vadd.s32 %v2872, 352
          %v2917 = vadd.s32 %v2872, 360
          %v2918 = vadd.s32 %v2872, 368
          %v2919 = vadd.s32 %v2872, 376
          %v2920 = vadd.s32 %v2872, 384
          %v2921 = vadd.s32 %v2872, 392
          %v2922 = vadd.s32 %v2872, 400
          %v2923 = vadd.s32 %v2872, 408
          %v2924 = vadd.s32 %v2872, 416
          %v2925 = vadd.s32 %v2872, 424
          %v2926 = vadd.s32 %v2872, 432
          %v2927 = vadd.s32 %v2872, 440
          %v2928 = vadd.s32 %v2872, 448
          %v2929 = vadd.s32 %v2872, 456
          %v2930 = vadd.s32 %v2872, 464
          %v2931 = vadd.s32 %v2872, 472
          %v2932 = vadd.s32 %v2872, 480
          %v2933 = vadd.s32 %v2872, 488
          %v2934 = vadd.s32 %v2872, 496
          %v2935 = vadd.s32 %v2872, 504
          %v2936 = vstv %s2778
          %v2937 = vadd.s32 %v2936, %v2872
          %v2938 = vadd.s32 %v2936, %v2873
          %v2939 = vadd.s32 %v2936, %v2874
          %v2940 = vadd.s32 %v2936, %v2875
          %v2941 = vadd.s32 %v2936, %v2876
          %v2942 = vadd.s32 %v2936, %v2877
          %v2943 = vadd.s32 %v2936, %v2878
          %v2944 = vadd.s32 %v2936, %v2879
          %v2945 = vadd.s32 %v2936, %v2880
          %v2946 = vadd.s32 %v2936, %v2881
          %v2947 = vadd.s32 %v2936, %v2882
          %v2948 = vadd.s32 %v2936, %v2883
          %v2949 = vadd.s32 %v2936, %v2884
          %v2950 = vadd.s32 %v2936, %v2885
          %v2951 = vadd.s32 %v2936, %v2886
          %v2952 = vadd.s32 %v2936, %v2887
          %v2953 = vadd.s32 %v2936, %v2888
          %v2954 = vadd.s32 %v2936, %v2889
          %v2955 = vadd.s32 %v2936, %v2890
          %v2956 = vadd.s32 %v2936, %v2891
          %v2957 = vadd.s32 %v2936, %v2892
          %v2958 = vadd.s32 %v2936, %v2893
          %v2959 = vadd.s32 %v2936, %v2894
          %v2960 = vadd.s32 %v2936, %v2895
          %v2961 = vadd.s32 %v2936, %v2896
          %v2962 = vadd.s32 %v2936, %v2897
          %v2963 = vadd.s32 %v2936, %v2898
          %v2964 = vadd.s32 %v2936, %v2899
          %v2965 = vadd.s32 %v2936, %v2900
          %v2966 = vadd.s32 %v2936, %v2901
          %v2967 = vadd.s32 %v2936, %v2902
          %v2968 = vadd.s32 %v2936, %v2903
          %v2969 = vadd.s32 %v2936, %v2904
          %v2970 = vadd.s32 %v2936, %v2905
          %v2971 = vadd.s32 %v2936, %v2906
          %v2972 = vadd.s32 %v2936, %v2907
          %v2973 = vadd.s32 %v2936, %v2908
          %v2974 = vadd.s32 %v2936, %v2909
          %v2975 = vadd.s32 %v2936, %v2910
          %v2976 = vadd.s32 %v2936, %v2911
          %v2977 = vadd.s32 %v2936, %v2912
          %v2978 = vadd.s32 %v2936, %v2913
          %v2979 = vadd.s32 %v2936, %v2914
          %v2980 = vadd.s32 %v2936, %v2915
          %v2981 = vadd.s32 %v2936, %v2916
          %v2982 = vadd.s32 %v2936, %v2917
          %v2983 = vadd.s32 %v2936, %v2918
          %v2984 = vadd.s32 %v2936, %v2919
          %v2985 = vadd.s32 %v2936, %v2920
          %v2986 = vadd.s32 %v2936, %v2921
          %v2987 = vadd.s32 %v2936, %v2922
          %v2988 = vadd.s32 %v2936, %v2923
          %v2989 = vadd.s32 %v2936, %v2924
          %v2990 = vadd.s32 %v2936, %v2925
          %v2991 = vadd.s32 %v2936, %v2926
          %v2992 = vadd.s32 %v2936, %v2927
          %v2993 = vadd.s32 %v2936, %v2928
          %v2994 = vadd.s32 %v2936, %v2929
          %v2995 = vadd.s32 %v2936, %v2930
          %v2996 = vadd.s32 %v2936, %v2931
          %v2997 = vadd.s32 %v2936, %v2932
          %v2998 = vadd.s32 %v2936, %v2933
          %v2999 = vadd.s32 %v2936, %v2934
          %v3000 = vadd.s32 %v2936, %v2935
          %vm3001 = vcmp.lt.s32.totalorder %v2937, 1200
          %vm3002 = vcmp.lt.s32.totalorder %v2938, 1200
          %vm3003 = vcmp.lt.s32.totalorder %v2939, 1200
          %vm3004 = vcmp.lt.s32.totalorder %v2940, 1200
          %vm3005 = vcmp.lt.s32.totalorder %v2941, 1200
          %vm3006 = vcmp.lt.s32.totalorder %v2942, 1200
          %vm3007 = vcmp.lt.s32.totalorder %v2943, 1200
          %vm3008 = vcmp.lt.s32.totalorder %v2944, 1200
          %vm3009 = vcmp.lt.s32.totalorder %v2945, 1200
          %vm3010 = vcmp.lt.s32.totalorder %v2946, 1200
          %vm3011 = vcmp.lt.s32.totalorder %v2947, 1200
          %vm3012 = vcmp.lt.s32.totalorder %v2948, 1200
          %vm3013 = vcmp.lt.s32.totalorder %v2949, 1200
          %vm3014 = vcmp.lt.s32.totalorder %v2950, 1200
          %vm3015 = vcmp.lt.s32.totalorder %v2951, 1200
          %vm3016 = vcmp.lt.s32.totalorder %v2952, 1200
          %vm3017 = vcmp.lt.s32.totalorder %v2953, 1200
          %vm3018 = vcmp.lt.s32.totalorder %v2954, 1200
          %vm3019 = vcmp.lt.s32.totalorder %v2955, 1200
          %vm3020 = vcmp.lt.s32.totalorder %v2956, 1200
          %vm3021 = vcmp.lt.s32.totalorder %v2957, 1200
          %vm3022 = vcmp.lt.s32.totalorder %v2958, 1200
          %vm3023 = vcmp.lt.s32.totalorder %v2959, 1200
          %vm3024 = vcmp.lt.s32.totalorder %v2960, 1200
          %vm3025 = vcmp.lt.s32.totalorder %v2961, 1200
          %vm3026 = vcmp.lt.s32.totalorder %v2962, 1200
          %vm3027 = vcmp.lt.s32.totalorder %v2963, 1200
          %vm3028 = vcmp.lt.s32.totalorder %v2964, 1200
          %vm3029 = vcmp.lt.s32.totalorder %v2965, 1200
          %vm3030 = vcmp.lt.s32.totalorder %v2966, 1200
          %vm3031 = vcmp.lt.s32.totalorder %v2967, 1200
          %vm3032 = vcmp.lt.s32.totalorder %v2968, 1200
          %vm3033 = vcmp.lt.s32.totalorder %v2969, 1200
          %vm3034 = vcmp.lt.s32.totalorder %v2970, 1200
          %vm3035 = vcmp.lt.s32.totalorder %v2971, 1200
          %vm3036 = vcmp.lt.s32.totalorder %v2972, 1200
          %vm3037 = vcmp.lt.s32.totalorder %v2973, 1200
          %vm3038 = vcmp.lt.s32.totalorder %v2974, 1200
          %vm3039 = vcmp.lt.s32.totalorder %v2975, 1200
          %vm3040 = vcmp.lt.s32.totalorder %v2976, 1200
          %vm3041 = vcmp.lt.s32.totalorder %v2977, 1200
          %vm3042 = vcmp.lt.s32.totalorder %v2978, 1200
          %vm3043 = vcmp.lt.s32.totalorder %v2979, 1200
          %vm3044 = vcmp.lt.s32.totalorder %v2980, 1200
          %vm3045 = vcmp.lt.s32.totalorder %v2981, 1200
          %vm3046 = vcmp.lt.s32.totalorder %v2982, 1200
          %vm3047 = vcmp.lt.s32.totalorder %v2983, 1200
          %vm3048 = vcmp.lt.s32.totalorder %v2984, 1200
          %vm3049 = vcmp.lt.s32.totalorder %v2985, 1200
          %vm3050 = vcmp.lt.s32.totalorder %v2986, 1200
          %vm3051 = vcmp.lt.s32.totalorder %v2987, 1200
          %vm3052 = vcmp.lt.s32.totalorder %v2988, 1200
          %vm3053 = vcmp.lt.s32.totalorder %v2989, 1200
          %vm3054 = vcmp.lt.s32.totalorder %v2990, 1200
          %vm3055 = vcmp.lt.s32.totalorder %v2991, 1200
          %vm3056 = vcmp.lt.s32.totalorder %v2992, 1200
          %vm3057 = vcmp.lt.s32.totalorder %v2993, 1200
          %vm3058 = vcmp.lt.s32.totalorder %v2994, 1200
          %vm3059 = vcmp.lt.s32.totalorder %v2995, 1200
          %vm3060 = vcmp.lt.s32.totalorder %v2996, 1200
          %vm3061 = vcmp.lt.s32.totalorder %v2997, 1200
          %vm3062 = vcmp.lt.s32.totalorder %v2998, 1200
          %vm3063 = vcmp.lt.s32.totalorder %v2999, 1200
          %vm3064 = vcmp.lt.s32.totalorder %v3000, 1200
          %v3065 = vsel %vm3001, 1, 0
          %v3066 = vsel %vm3002, 1, 0
          %v3067 = vsel %vm3003, 1, 0
          %v3068 = vsel %vm3004, 1, 0
          %v3069 = vsel %vm3005, 1, 0
          %v3070 = vsel %vm3006, 1, 0
          %v3071 = vsel %vm3007, 1, 0
          %v3072 = vsel %vm3008, 1, 0
          %v3073 = vsel %vm3009, 1, 0
          %v3074 = vsel %vm3010, 1, 0
          %v3075 = vsel %vm3011, 1, 0
          %v3076 = vsel %vm3012, 1, 0
          %v3077 = vsel %vm3013, 1, 0
          %v3078 = vsel %vm3014, 1, 0
          %v3079 = vsel %vm3015, 1, 0
          %v3080 = vsel %vm3016, 1, 0
          %v3081 = vsel %vm3017, 1, 0
          %v3082 = vsel %vm3018, 1, 0
          %v3083 = vsel %vm3019, 1, 0
          %v3084 = vsel %vm3020, 1, 0
          %v3085 = vsel %vm3021, 1, 0
          %v3086 = vsel %vm3022, 1, 0
          %v3087 = vsel %vm3023, 1, 0
          %v3088 = vsel %vm3024, 1, 0
          %v3089 = vsel %vm3025, 1, 0
          %v3090 = vsel %vm3026, 1, 0
          %v3091 = vsel %vm3027, 1, 0
          %v3092 = vsel %vm3028, 1, 0
          %v3093 = vsel %vm3029, 1, 0
          %v3094 = vsel %vm3030, 1, 0
          %v3095 = vsel %vm3031, 1, 0
          %v3096 = vsel %vm3032, 1, 0
          %v3097 = vsel %vm3033, 1, 0
          %v3098 = vsel %vm3034, 1, 0
          %v3099 = vsel %vm3035, 1, 0
          %v3100 = vsel %vm3036, 1, 0
          %v3101 = vsel %vm3037, 1, 0
          %v3102 = vsel %vm3038, 1, 0
          %v3103 = vsel %vm3039, 1, 0
          %v3104 = vsel %vm3040, 1, 0
          %v3105 = vsel %vm3041, 1, 0
          %v3106 = vsel %vm3042, 1, 0
          %v3107 = vsel %vm3043, 1, 0
          %v3108 = vsel %vm3044, 1, 0
          %v3109 = vsel %vm3045, 1, 0
          %v3110 = vsel %vm3046, 1, 0
          %v3111 = vsel %vm3047, 1, 0
          %v3112 = vsel %vm3048, 1, 0
          %v3113 = vsel %vm3049, 1, 0
          %v3114 = vsel %vm3050, 1, 0
          %v3115 = vsel %vm3051, 1, 0
          %v3116 = vsel %vm3052, 1, 0
          %v3117 = vsel %vm3053, 1, 0
          %v3118 = vsel %vm3054, 1, 0
          %v3119 = vsel %vm3055, 1, 0
          %v3120 = vsel %vm3056, 1, 0
          %v3121 = vsel %vm3057, 1, 0
          %v3122 = vsel %vm3058, 1, 0
          %v3123 = vsel %vm3059, 1, 0
          %v3124 = vsel %vm3060, 1, 0
          %v3125 = vsel %vm3061, 1, 0
          %v3126 = vsel %vm3062, 1, 0
          %v3127 = vsel %vm3063, 1, 0
          %v3128 = vsel %vm3064, 1, 0
          %vm3129 = vcmp.eq.s32.totalorder %v3065, 1
          %vm3130 = vcmp.eq.s32.totalorder %v3066, 1
          %vm3131 = vcmp.eq.s32.totalorder %v3067, 1
          %vm3132 = vcmp.eq.s32.totalorder %v3068, 1
          %vm3133 = vcmp.eq.s32.totalorder %v3069, 1
          %vm3134 = vcmp.eq.s32.totalorder %v3070, 1
          %vm3135 = vcmp.eq.s32.totalorder %v3071, 1
          %vm3136 = vcmp.eq.s32.totalorder %v3072, 1
          %vm3137 = vcmp.eq.s32.totalorder %v3073, 1
          %vm3138 = vcmp.eq.s32.totalorder %v3074, 1
          %vm3139 = vcmp.eq.s32.totalorder %v3075, 1
          %vm3140 = vcmp.eq.s32.totalorder %v3076, 1
          %vm3141 = vcmp.eq.s32.totalorder %v3077, 1
          %vm3142 = vcmp.eq.s32.totalorder %v3078, 1
          %vm3143 = vcmp.eq.s32.totalorder %v3079, 1
          %vm3144 = vcmp.eq.s32.totalorder %v3080, 1
          %vm3145 = vcmp.eq.s32.totalorder %v3081, 1
          %vm3146 = vcmp.eq.s32.totalorder %v3082, 1
          %vm3147 = vcmp.eq.s32.totalorder %v3083, 1
          %vm3148 = vcmp.eq.s32.totalorder %v3084, 1
          %vm3149 = vcmp.eq.s32.totalorder %v3085, 1
          %vm3150 = vcmp.eq.s32.totalorder %v3086, 1
          %vm3151 = vcmp.eq.s32.totalorder %v3087, 1
          %vm3152 = vcmp.eq.s32.totalorder %v3088, 1
          %vm3153 = vcmp.eq.s32.totalorder %v3089, 1
          %vm3154 = vcmp.eq.s32.totalorder %v3090, 1
          %vm3155 = vcmp.eq.s32.totalorder %v3091, 1
          %vm3156 = vcmp.eq.s32.totalorder %v3092, 1
          %vm3157 = vcmp.eq.s32.totalorder %v3093, 1
          %vm3158 = vcmp.eq.s32.totalorder %v3094, 1
          %vm3159 = vcmp.eq.s32.totalorder %v3095, 1
          %vm3160 = vcmp.eq.s32.totalorder %v3096, 1
          %vm3161 = vcmp.eq.s32.totalorder %v3097, 1
          %vm3162 = vcmp.eq.s32.totalorder %v3098, 1
          %vm3163 = vcmp.eq.s32.totalorder %v3099, 1
          %vm3164 = vcmp.eq.s32.totalorder %v3100, 1
          %vm3165 = vcmp.eq.s32.totalorder %v3101, 1
          %vm3166 = vcmp.eq.s32.totalorder %v3102, 1
          %vm3167 = vcmp.eq.s32.totalorder %v3103, 1
          %vm3168 = vcmp.eq.s32.totalorder %v3104, 1
          %vm3169 = vcmp.eq.s32.totalorder %v3105, 1
          %vm3170 = vcmp.eq.s32.totalorder %v3106, 1
          %vm3171 = vcmp.eq.s32.totalorder %v3107, 1
          %vm3172 = vcmp.eq.s32.totalorder %v3108, 1
          %vm3173 = vcmp.eq.s32.totalorder %v3109, 1
          %vm3174 = vcmp.eq.s32.totalorder %v3110, 1
          %vm3175 = vcmp.eq.s32.totalorder %v3111, 1
          %vm3176 = vcmp.eq.s32.totalorder %v3112, 1
          %vm3177 = vcmp.eq.s32.totalorder %v3113, 1
          %vm3178 = vcmp.eq.s32.totalorder %v3114, 1
          %vm3179 = vcmp.eq.s32.totalorder %v3115, 1
          %vm3180 = vcmp.eq.s32.totalorder %v3116, 1
          %vm3181 = vcmp.eq.s32.totalorder %v3117, 1
          %vm3182 = vcmp.eq.s32.totalorder %v3118, 1
          %vm3183 = vcmp.eq.s32.totalorder %v3119, 1
          %vm3184 = vcmp.eq.s32.totalorder %v3120, 1
          %vm3185 = vcmp.eq.s32.totalorder %v3121, 1
          %vm3186 = vcmp.eq.s32.totalorder %v3122, 1
          %vm3187 = vcmp.eq.s32.totalorder %v3123, 1
          %vm3188 = vcmp.eq.s32.totalorder %v3124, 1
          %vm3189 = vcmp.eq.s32.totalorder %v3125, 1
          %vm3190 = vcmp.eq.s32.totalorder %v3126, 1
          %vm3191 = vcmp.eq.s32.totalorder %v3127, 1
          %vm3192 = vcmp.eq.s32.totalorder %v3128, 1
          %v3193 = vsel %vm3129, %v2712, 0.0
          %v3194 = vsel %vm3130, %v2713, 0.0
          %v3195 = vsel %vm3131, %v2714, 0.0
          %v3196 = vsel %vm3132, %v2715, 0.0
          %v3197 = vsel %vm3133, %v2716, 0.0
          %v3198 = vsel %vm3134, %v2717, 0.0
          %v3199 = vsel %vm3135, %v2718, 0.0
          %v3200 = vsel %vm3136, %v2719, 0.0
          %v3201 = vsel %vm3137, %v2720, 0.0
          %v3202 = vsel %vm3138, %v2721, 0.0
          %v3203 = vsel %vm3139, %v2722, 0.0
          %v3204 = vsel %vm3140, %v2723, 0.0
          %v3205 = vsel %vm3141, %v2724, 0.0
          %v3206 = vsel %vm3142, %v2725, 0.0
          %v3207 = vsel %vm3143, %v2726, 0.0
          %v3208 = vsel %vm3144, %v2727, 0.0
          %v3209 = vsel %vm3145, %v2728, 0.0
          %v3210 = vsel %vm3146, %v2729, 0.0
          %v3211 = vsel %vm3147, %v2730, 0.0
          %v3212 = vsel %vm3148, %v2731, 0.0
          %v3213 = vsel %vm3149, %v2732, 0.0
          %v3214 = vsel %vm3150, %v2733, 0.0
          %v3215 = vsel %vm3151, %v2734, 0.0
          %v3216 = vsel %vm3152, %v2735, 0.0
          %v3217 = vsel %vm3153, %v2736, 0.0
          %v3218 = vsel %vm3154, %v2737, 0.0
          %v3219 = vsel %vm3155, %v2738, 0.0
          %v3220 = vsel %vm3156, %v2739, 0.0
          %v3221 = vsel %vm3157, %v2740, 0.0
          %v3222 = vsel %vm3158, %v2741, 0.0
          %v3223 = vsel %vm3159, %v2742, 0.0
          %v3224 = vsel %vm3160, %v2743, 0.0
          %v3225 = vsel %vm3161, %v2744, 0.0
          %v3226 = vsel %vm3162, %v2745, 0.0
          %v3227 = vsel %vm3163, %v2746, 0.0
          %v3228 = vsel %vm3164, %v2747, 0.0
          %v3229 = vsel %vm3165, %v2748, 0.0
          %v3230 = vsel %vm3166, %v2749, 0.0
          %v3231 = vsel %vm3167, %v2750, 0.0
          %v3232 = vsel %vm3168, %v2751, 0.0
          %v3233 = vsel %vm3169, %v2752, 0.0
          %v3234 = vsel %vm3170, %v2753, 0.0
          %v3235 = vsel %vm3171, %v2754, 0.0
          %v3236 = vsel %vm3172, %v2755, 0.0
          %v3237 = vsel %vm3173, %v2756, 0.0
          %v3238 = vsel %vm3174, %v2757, 0.0
          %v3239 = vsel %vm3175, %v2758, 0.0
          %v3240 = vsel %vm3176, %v2759, 0.0
          %v3241 = vsel %vm3177, %v2760, 0.0
          %v3242 = vsel %vm3178, %v2761, 0.0
          %v3243 = vsel %vm3179, %v2762, 0.0
          %v3244 = vsel %vm3180, %v2763, 0.0
          %v3245 = vsel %vm3181, %v2764, 0.0
          %v3246 = vsel %vm3182, %v2765, 0.0
          %v3247 = vsel %vm3183, %v2766, 0.0
          %v3248 = vsel %vm3184, %v2767, 0.0
          %v3249 = vsel %vm3185, %v2768, 0.0
          %v3250 = vsel %vm3186, %v2769, 0.0
          %v3251 = vsel %vm3187, %v2770, 0.0
          %v3252 = vsel %vm3188, %v2771, 0.0
          %v3253 = vsel %vm3189, %v2772, 0.0
          %v3254 = vsel %vm3190, %v2773, 0.0
          %v3255 = vsel %vm3191, %v2774, 0.0
          %v3256 = vsel %vm3192, %v2775, 0.0
          %v3257 = vld [vmem:[#allocation2] sm:$0x1]
          %3258 = vmatpush.msra.mxu0 %v3208
          %3259 = vmatpush.msra.mxu0 %v3207
          %3260 = vmatpush.msra.mxu0 %v3206
          %3261 = vmatpush.msra.mxu0 %v3205
          %3262 = vmatpush.msra.mxu0 %v3204
          %3263 = vmatpush.msra.mxu0 %v3203
          %3264 = vmatpush.msra.mxu0 %v3202
          %3265 = vmatpush.msra.mxu0 %v3201
          %3266 = vmatpush.msra.mxu0 %v3200
          %3267 = vmatpush.msra.mxu0 %v3199
          %3268 = vmatpush.msra.mxu0 %v3198
          %3269 = vmatpush.msra.mxu0 %v3197
          %3270 = vmatpush.msra.mxu0 %v3196
          %3271 = vmatpush.msra.mxu0 %v3195
          %3272 = vmatpush.msra.mxu0 %v3194
          %3273 = vmatpush.msra.mxu0 %v3193
          %3274 = vmatmul.f32.gmra.mxu0 1.0
          %v3275 = vpop.f32.mrf.mxu0
          %v3276 = vadd.f32 0.0, %v3275
          %3277 = vdwg.mxu0
          %3278 = vmatpush.msra.mxu0 %v3224
          %3279 = vmatpush.msra.mxu0 %v3223
          %3280 = vmatpush.msra.mxu0 %v3222
          %3281 = vmatpush.msra.mxu0 %v3221
          %3282 = vmatpush.msra.mxu0 %v3220
          %3283 = vmatpush.msra.mxu0 %v3219
          %3284 = vmatpush.msra.mxu0 %v3218
          %3285 = vmatpush.msra.mxu0 %v3217
          %3286 = vmatpush.msra.mxu0 %v3216
          %3287 = vmatpush.msra.mxu0 %v3215
          %3288 = vmatpush.msra.mxu0 %v3214
          %3289 = vmatpush.msra.mxu0 %v3213
          %3290 = vmatpush.msra.mxu0 %v3212
          %3291 = vmatpush.msra.mxu0 %v3211
          %3292 = vmatpush.msra.mxu0 %v3210
          %3293 = vmatpush.msra.mxu0 %v3209
          %3294 = vmatmul.f32.gmra.mxu0 1.0
          %v3295 = vpop.f32.mrf.mxu0
          %v3296 = vadd.f32 %v3276, %v3295
          %3297 = vdwg.mxu0
          %3298 = vmatpush.msra.mxu0 %v3240
          %3299 = vmatpush.msra.mxu0 %v3239
          %3300 = vmatpush.msra.mxu0 %v3238
          %3301 = vmatpush.msra.mxu0 %v3237
          %3302 = vmatpush.msra.mxu0 %v3236
          %3303 = vmatpush.msra.mxu0 %v3235
          %3304 = vmatpush.msra.mxu0 %v3234
          %3305 = vmatpush.msra.mxu0 %v3233
          %3306 = vmatpush.msra.mxu0 %v3232
          %3307 = vmatpush.msra.mxu0 %v3231
          %3308 = vmatpush.msra.mxu0 %v3230
          %3309 = vmatpush.msra.mxu0 %v3229
          %3310 = vmatpush.msra.mxu0 %v3228
          %3311 = vmatpush.msra.mxu0 %v3227
          %3312 = vmatpush.msra.mxu0 %v3226
          %3313 = vmatpush.msra.mxu0 %v3225
          %3314 = vmatmul.f32.gmra.mxu0 1.0
          %v3315 = vpop.f32.mrf.mxu0
          %v3316 = vadd.f32 %v3296, %v3315
          %3317 = vdwg.mxu0
          %3318 = vmatpush.msra.mxu0 %v3256
          %3319 = vmatpush.msra.mxu0 %v3255
          %3320 = vmatpush.msra.mxu0 %v3254
          %3321 = vmatpush.msra.mxu0 %v3253
          %3322 = vmatpush.msra.mxu0 %v3252
          %3323 = vmatpush.msra.mxu0 %v3251
          %3324 = vmatpush.msra.mxu0 %v3250
          %3325 = vmatpush.msra.mxu0 %v3249
          %3326 = vmatpush.msra.mxu0 %v3248
          %3327 = vmatpush.msra.mxu0 %v3247
          %3328 = vmatpush.msra.mxu0 %v3246
          %3329 = vmatpush.msra.mxu0 %v3245
          %3330 = vmatpush.msra.mxu0 %v3244
          %3331 = vmatpush.msra.mxu0 %v3243
          %3332 = vmatpush.msra.mxu0 %v3242
          %3333 = vmatpush.msra.mxu0 %v3241
          %3334 = vmatmul.f32.gmra.mxu0 1.0
          %v3335 = vpop.f32.mrf.mxu0
          %v3336 = vadd.f32 %v3316, %v3335
          %3337 = vdwg.mxu0
          %v3338 = vadd.f32 %v3257, %v3336
          %3339 = vst [vmem:[#allocation2] sm:$0x1] %v3338
        $region40: #{tpu_custom_call.1} parent=27 // pred_fallthru
          _
        %p3340 = scmp.eq.s32.totalorder %s21, 1
        // Predicated region
        $region41: #{tpu_custom_call.1} parent=27 // pred_check
          %p3341 = pneg %p3340
        $region42: #{tpu_custom_call.1} parent=27 // pred_check_branch
          %3343 = sbr.rel (%p3341) target = $region44
        $region43: #{tpu_custom_call.1} parent=27 // pred_region
          %v3344 = vld [vmem:[#allocation2] sm:$0x1]
          %3345 = vst [vmem:[%s228] sm:$0x1] %v3344
        $region44: #{tpu_custom_call.1} parent=27 // pred_fallthru
          _
        %s3346 = sand.u32 %s104, 1
        %s3347 = scalar_lea.sflag [#allocation4], %s3346
        %s3348 = sand.u32 %s104, 1
        %s3349 = scalar_lea.vmem [#allocation3], %s3348
        // Predicated region
        $region45: #{tpu_custom_call.1} parent=27 // pred_check
          %p3350 = pneg %p114
        $region46: #{tpu_custom_call.1} parent=27 // pred_check_branch
          %3352 = sbr.rel (%p3350) target = $region48
        $region47: #{tpu_custom_call.1} parent=27 // pred_region
          %3354 = vsyncadd %s3347, 0
          %s3355 = scalar_lea.hbm %s2, %s20
          %s3357 = sshll.u32 %s3349, 4
          %s3358 = int_to_ptr.vmem [resolvable:$true] %s3357
          %s3359 = sshll.u32 %s3355, 4
          %s3360 = int_to_ptr.hbm [resolvable:$true] %s3359
          %3362 = dma.vmem_to_hbm [thread:$0]  %s3358, 16, %s3360, %s3347
        $region48: #{tpu_custom_call.1} parent=27 // pred_fallthru
          _
      $region28: #{tpu_custom_call.1} parent=5 // pred_fallthru
        _
      %p3363 = scmp.le.s32.totalorder 2, %s11
      // Predicated region
      $region49: #{tpu_custom_call.1} parent=5 // pred_check
        %p3364 = pneg %p3363
      $region50: #{tpu_custom_call.1} parent=5 // pred_check_branch
        %3366 = sbr.rel (%p3364) target = $region52
      $region51: #{tpu_custom_call.1} parent=5 // pred_region
        %s3367 = ssub.s32 %s11, 2
        // Predicated region
        $region53: #{tpu_custom_call.1} parent=51 // pred_check
          %p3368 = pneg %p120
        $region54: #{tpu_custom_call.1} parent=51 // pred_check_branch
          %3370 = sbr.rel (%p3368) target = $region56
        $region55: #{tpu_custom_call.1} parent=51 // pred_region
          %s3371 = sand.u32 %s105, 1
          %s3372 = scalar_lea.sflag [#allocation4], %s3371
          %s3373 = sand.u32 %s105, 1
          %s3374 = scalar_lea.vmem [#allocation3], %s3373
          %3376 = dma.done %s3372, 16
        $region56: #{tpu_custom_call.1} parent=51 // pred_fallthru
          _
      $region52: #{tpu_custom_call.1} parent=5 // pred_fallthru
        _
    $region6: #{tpu_custom_call.1} parent=1 // loop_footer
      %s15 = sadd.s32 1, %s11
    $region7: #{tpu_custom_call.1} parent=1 // loop_footer_branch
      %10 = sbr.rel target = $region3
    $region8: #{tpu_custom_call.1} parent=1 // loop_exit
      _
    %3377 = vsyncpa [#allocation4], 1
    %s3378 = scalar_lea.sflag [#allocation4], 1
    %3379 = vsyncpa %s3378, 1

</llo_original>
